<compile_context>
chip_gen: v7x
topology: tpu7x:2x2x1
jax: 0.10.0
libtpu: 0.0.40
codegen_flags: <defaults>
</compile_context>

<pallas_src>
import math

import jax
import jax.numpy as jnp
from jax.experimental import pallas as pl
from jax.experimental.pallas import tpu as pltpu


def _round_up(x, m):
    return (x + m - 1) // m * m


def _gcn_kernel(adj_ref, xw_ref, bias_ref, out_ref):
    """Grid = (row tiles i, contraction tiles k over the node dimension).

    adj_ref  : VMEM [tm, tk]  bf16 adjacency tile
    xw_ref   : VMEM [tk, Fp]  bf16 (x @ W_hi) K-tile (weights folded on host)
    bias_ref : VMEM [tm, Fp]  f32  (h0 @ W_h0 [+ x]) row tile, k-invariant
    out_ref  : VMEM [tm, Fp]  f32  resident accumulator across k
    """
    k = pl.program_id(1)

    @pl.when(k == 0)
    def _init():
        out_ref[...] = bias_ref[...]

    out_ref[...] += jnp.dot(adj_ref[...], xw_ref[...],
                            preferred_element_type=jnp.float32)


def _choose_row_tile(n):
    for cand in (512, 256, 128):
        if n % cand == 0:
            return cand
    if n <= 640:
        return _round_up(n, 8)      # single row tile
    return 256                       # pad rows up to a multiple of 256


def graph_convolution(x, adj, h0, weight, lamda, alpha, l,
                      *, variant=False, residual=False):
    """Pallas implementation of GraphConvolution.forward(input, adj, h0, lamda, alpha, l)."""
    n, f_in = x.shape
    f_out = weight.shape[1]
    w_rows = 2 * f_in if variant else f_in
    assert adj.shape == (n, n) and h0.shape == (n, f_in)
    assert weight.shape[0] == w_rows
    # The module's math (theta*support@W + (1-theta)*r) requires square output.
    assert f_out == f_in, "GraphConvolution requires out_features == in_features"

    # ---- Host-side algebra: fold theta/alpha/variant into the weights ------
    theta = math.log(lamda / l + 1.0)
    alpha = float(alpha)
    eye = jnp.eye(f_in, dtype=jnp.float32)
    w32 = weight.astype(jnp.float32)
    if variant:
        w_hi = theta * w32[:f_in] + (1.0 - theta) * (1.0 - alpha) * eye
        w_h0 = theta * w32[f_in:] + (1.0 - theta) * alpha * eye
    else:
        w_base = theta * w32 + (1.0 - theta) * eye
        w_hi = (1.0 - alpha) * w_base
        w_h0 = alpha * w_base

    # Reassociate the (tiny) weight matmuls into the features:
    #   out = adj @ (x @ W_hi) + (h0 @ W_h0 [+ x])
    x32 = x.astype(jnp.float32)
    xw = x32 @ w_hi                              # [N, F]  f32
    bias = h0.astype(jnp.float32) @ w_h0         # [N, F]  f32
    if residual:
        bias = bias + x32

    # ---- Tiling / padding (kernel is HBM-bound on the N^2 adj stream) ------
    tm = _choose_row_tile(n)
    n_rows = _round_up(n, tm)

    if n <= 4096:
        # Whole contraction in one K step: no accumulator phases; adj tile
        # <= 512 x 4096 bf16 = 4 MiB per buffer.
        n_cols = _round_up(n, 128) if n >= 128 else _round_up(n, 8)
        tk = n_cols
    else:
        tk = 2048 if n % 2048 == 0 else (1024 if n % 1024 == 0 else 512)
        n_cols = _round_up(n, tk)

    fp = _round_up(f_out, 128)                   # lane-dense output columns

    # Explicit VMEM budget (double-buffered tiles + slack); stays well under
    # v5e's 16 MiB default and v7x's 32 MiB scoped / 64 MiB physical.
    tile_bytes = tm * tk * 2 + tk * fp * 2 + 2 * tm * fp * 4
    vmem_limit = int(min(32 * 1024 * 1024,
                         max(16 * 1024 * 1024, 2.5 * tile_bytes)))

    # bf16 for the two MXU input streams; bias stays f32 (added into the f32
    # resident output, negligible extra HBM vs the N^2 adjacency stream).
    adj_b = jnp.pad(adj.astype(jnp.bfloat16),
                    ((0, n_rows - n), (0, n_cols - n)))
    xw_b = jnp.pad(xw.astype(jnp.bfloat16),
                   ((0, n_cols - n), (0, fp - f_out)))
    bias_p = jnp.pad(bias, ((0, n_rows - n), (0, fp - f_out)))

    grid = (n_rows // tm, n_cols // tk)

    out = pl.pallas_call(
        _gcn_kernel,
        out_shape=jax.ShapeDtypeStruct((n_rows, fp), jnp.float32),
        grid_spec=pltpu.PrefetchScalarGridSpec(
            num_scalar_prefetch=0,
            grid=grid,
            in_specs=[
                pl.BlockSpec((tm, tk), lambda i, k: (i, k)),   # adj tile
                pl.BlockSpec((tk, fp), lambda i, k: (k, 0)),   # x @ W_hi tile
                pl.BlockSpec((tm, fp), lambda i, k: (i, 0)),   # bias row tile
            ],
            out_specs=pl.BlockSpec((tm, fp), lambda i, k: (i, 0)),
        ),
        compiler_params=pltpu.CompilerParams(
            dimension_semantics=("parallel", "arbitrary"),
            vmem_limit_bytes=vmem_limit),
    )(adj_b, xw_b, bias_p)

    out = out[:n, :f_out]
    if out.dtype != x.dtype:
        out = out.astype(x.dtype)
    return out


def _reference(x, adj, h0, weight, lamda, alpha, l, variant=False, residual=False):
    theta = math.log(lamda / l + 1.0)
    hi = adj @ x
    if variant:
        support = jnp.concatenate([hi, h0], axis=1)
        r = (1.0 - alpha) * hi + alpha * h0
    else:
        support = (1.0 - alpha) * hi + alpha * h0
        r = support
    out = theta * (support @ weight) + (1.0 - theta) * r
    if residual:
        out = out + x
    return out


if __name__ == "__main__":
    # Small GCNII-style shapes: N nodes, hidden size F (in == out features).
    # N=1024 / F=64 exercises row tiling (2 row tiles of 512), the single
    # K-step path (tk = N) and the lane-dense column padding (64 -> 128).
    N, F = 1024, 64
    lamda, alpha, layer_idx = 0.5, 0.1, 1

    key = jax.random.PRNGKey(0)
    k_x, k_adj, k_h0, k_w1, k_w2 = jax.random.split(key, 5)

    x = jax.random.normal(k_x, (N, F), dtype=jnp.float32)
    h0 = jax.random.normal(k_h0, (N, F), dtype=jnp.float32)

    # Dense, row-normalized "sparse" adjacency (torch.spmm computed densely).
    adj_raw = jax.random.uniform(k_adj, (N, N), dtype=jnp.float32)
    adj_raw = jnp.where(adj_raw > 0.98, adj_raw, 0.0) + jnp.eye(N, dtype=jnp.float32)
    adj = adj_raw / jnp.sum(adj_raw, axis=1, keepdims=True)

    # reset_parameters(): uniform(-stdv, stdv), stdv = 1/sqrt(out_features).
    stdv = 1.0 / math.sqrt(F)

    configs = [
        (False, False, k_w1),   # module defaults
        (True, True, k_w2),     # variant + residual path
    ]
    for variant, residual, k_w in configs:
        w_rows = 2 * F if variant else F
        weight = jax.random.uniform(k_w, (w_rows, F), dtype=jnp.float32,
                                    minval=-stdv, maxval=stdv)

        out = graph_convolution(x, adj, h0, weight, lamda, alpha, layer_idx,
                                variant=variant, residual=residual)
        out = jax.block_until_ready(out)

        ref = _reference(x, adj, h0, weight, lamda, alpha, layer_idx,
                         variant=variant, residual=residual)
        assert out.shape == (N, F) and out.dtype == jnp.float32
        assert jnp.allclose(out, ref, rtol=3e-2, atol=3e-2), \
            f"mismatch vs. reference (variant={variant}, residual={residual})"

    print("KERNEL_OK")
</pallas_src>

<mosaic_0001>
module attributes {stable_mosaic.version = 11 : i64} {
  func.func @_gcn_kernel(%arg0: i32, %arg1: i32, %arg2: memref<512x1024xbf16, #tpu.memory_space<vmem>>, %arg3: memref<1024x128xbf16, #tpu.memory_space<vmem>>, %arg4: memref<512x128xf32, #tpu.memory_space<vmem>>, %arg5: memref<512x128xf32, #tpu.memory_space<vmem>>) attributes {dimension_semantics = [#tpu.dimension_semantics<parallel>, #tpu.dimension_semantics<arbitrary>], iteration_bounds = array<i64: 2, 1>, scalar_prefetch = 0 : i64, scratch_operands = 0 : i64, tpu.core_type = #tpu.core_type<tc>, window_params = [{transform_indices = @transform_0, window_bounds = array<i64: 512, 1024>}, {transform_indices = @transform_1, window_bounds = array<i64: 1024, 128>}, {transform_indices = @transform_2, window_bounds = array<i64: 512, 128>}, {transform_indices = @transform_3, window_bounds = array<i64: 512, 128>}]} {
    %c0_i32 = arith.constant 0 : i32
    %0 = arith.cmpi eq, %arg1, %c0_i32 : i32
    %1 = arith.extui %0 : i1 to i32
    %c0_i32_0 = arith.constant 0 : i32
    %2 = arith.cmpi ne, %1, %c0_i32_0 : i32
    scf.if %2 {
      %c0_8 = arith.constant 0 : index
      %c0_9 = arith.constant 0 : index
      %9 = vector.load %arg4[%c0_8, %c0_9] : memref<512x128xf32, #tpu.memory_space<vmem>>, vector<512x128xf32>
      %c0_10 = arith.constant 0 : index
      %c0_11 = arith.constant 0 : index
      %10 = vector.load %arg5[%c0_10, %c0_11] : memref<512x128xf32, #tpu.memory_space<vmem>>, vector<512x128xf32>
      tpu.vector_store %arg5[%c0_10, %c0_11], %9 {strides = array<i32>} : memref<512x128xf32, #tpu.memory_space<vmem>>, vector<512x128xf32>,
    } else {
    }
    %c0 = arith.constant 0 : index
    %c0_1 = arith.constant 0 : index
    %3 = vector.load %arg5[%c0, %c0_1] : memref<512x128xf32, #tpu.memory_space<vmem>>, vector<512x128xf32>
    %c0_2 = arith.constant 0 : index
    %c0_3 = arith.constant 0 : index
    %4 = vector.load %arg2[%c0_2, %c0_3] : memref<512x1024xbf16, #tpu.memory_space<vmem>>, vector<512x1024xbf16>
    %c0_4 = arith.constant 0 : index
    %c0_5 = arith.constant 0 : index
    %5 = vector.load %arg3[%c0_4, %c0_5] : memref<1024x128xbf16, #tpu.memory_space<vmem>>, vector<1024x128xbf16>
    %cst = arith.constant dense<0.000000e+00> : vector<512x128xf32>
    %6 = tpu.matmul %4, %5, %cst {dimension_numbers = #tpu.dot_dimension_numbers<[1], [0], [0], [1], [0, 0, 1, 1], [], []>} : vector<512x1024xbf16>, vector<1024x128xbf16>, vector<512x128xf32> -> vector<512x128xf32>
    %7 = arith.addf %3, %6 : vector<512x128xf32>
    %c0_6 = arith.constant 0 : index
    %c0_7 = arith.constant 0 : index
    %8 = vector.load %arg5[%c0_6, %c0_7] : memref<512x128xf32, #tpu.memory_space<vmem>>, vector<512x128xf32>
    tpu.vector_store %arg5[%c0_6, %c0_7], %7 {strides = array<i32>} : memref<512x128xf32, #tpu.memory_space<vmem>>, vector<512x128xf32>,
    return
  }
  func.func @transform_0(%arg0: i32, %arg1: i32) -> (i32, i32) {
    %c0_i32 = arith.constant 0 : i32
    return %arg0, %arg1 : i32, i32
  }
  func.func @transform_1(%arg0: i32, %arg1: i32) -> (i32, i32) {
    %c0_i32 = arith.constant 0 : i32
    %c0_i32_0 = arith.constant 0 : i32
    return %arg1, %c0_i32 : i32, i32
  }
  func.func @transform_2(%arg0: i32, %arg1: i32) -> (i32, i32) {
    %c0_i32 = arith.constant 0 : i32
    %c0_i32_0 = arith.constant 0 : i32
    return %arg0, %c0_i32 : i32, i32
  }
  func.func @transform_3(%arg0: i32, %arg1: i32) -> (i32, i32) {
    %c0_i32 = arith.constant 0 : i32
    %c0_i32_0 = arith.constant 0 : i32
    return %arg0, %c0_i32 : i32, i32
  }
}

</mosaic_0001>

<llo_original>
// kernel: tpu_custom_call.1
$region0: #{tpu_custom_call.1}
  #allocation0 [shape = 'u32[]', space=smem, size = 0x4, offset = 0x4, fixed_abs, tag = 'smem constant byte address 0x4 - core index']
  #allocation1 [shape = 'u32[144,128]{1,0:T(1,128)}', space=vmem, size = 0x12000, scoped, tag = 'internal scratch']
  %s0 = inlined_call_operand.hbm [shape: bf16[1024,1024], index: 0, kind: input, shape index: {}]
  %s1 = inlined_call_operand.hbm [shape: bf16[1024,128], index: 1, kind: input, shape index: {}]
  %s2 = inlined_call_operand.hbm [shape: f32[1024,128], index: 2, kind: input, shape index: {}]
  %s3 = inlined_call_operand.hbm [shape: f32[1024,128], index: 3, kind: output, shape index: {}]
  %s4 = sld [smem:[#allocation0]]
  $region61: #{tpu_custom_call.1} parent=0
    _
  %s6 = ssub.s32 1, %s4
  %s7 = scalar_select 0, %s6, %s4
  $region1: #{tpu_custom_call.1} parent=0
    #allocation2 [shape = 'u8[2097152]{0}', space=vmem, size = 0x200000, scoped, tag = 'input window, operand 0']
    #allocation3 [shape = 's32[2]{0}', space=sflag, size = 0x8, scoped, tag = 'scoped memory for tpu_custom_call.1']
    #allocation4 [shape = 's32[2]{0}', space=sflag, size = 0x8, scoped, tag = 'scoped memory for tpu_custom_call.1']
    #allocation5 [shape = 'u8[262144]{0}', space=vmem, size = 0x40000, scoped, tag = 'input window, operand 1, single buffered']
    #allocation6 [shape = 's32[1]{0}', space=sflag, size = 0x4, scoped, tag = 'scoped memory for tpu_custom_call.1']
    #allocation7 [shape = 'u8[524288]{0}', space=vmem, size = 0x80000, scoped, tag = 'input window, operand 2']
    #allocation8 [shape = 'u8[524288]{0}', space=vmem, size = 0x80000, scoped, tag = 'output window, operand 0']
    %8 = vsyncpa [#allocation3], 0
    %s9 = scalar_lea.sflag [#allocation3], 1
    %10 = vsyncpa %s9, 0
    %11 = vsyncpa [#allocation6], 0
    %12 = vsyncpa [#allocation4], 0
    %s13 = scalar_lea.sflag [#allocation4], 1
    %14 = vsyncpa %s13, 0
    loop: start=0, step=1, limit=4
    $region2: #{tpu_custom_call.1} parent=1 // loop_pre_header
      _
    $region3: #{tpu_custom_call.1} parent=1 // loop_header
      %s16 = sphi 0, %s20
      %p17 = scmp.ge.s32.totalorder %s16, 4
      %s23 = sphi 0, %s35
      %s24 = sphi 0, %s31
      %s25 = sphi 0, %s23
      %s26 = sphi 0, %s24
      %s27 = sphi 0, %s25
      %s28 = sphi 0, %s26
      %s40 = sphi 0, %s42
      %s43 = sphi 0, %s40
      %s44 = sphi 0, %s43
      %s60 = sphi 0, %s44
      %s66 = sphi 0, %s68
      %s69 = sphi 0, %s66
      %s70 = sphi 0, %s69
      %s86 = sphi 0, %s70
      %s92 = sphi 0, %s94
      %s95 = sphi 0, %s92
      %s96 = sphi 0, %s95
      %s112 = sphi 0, %s96
      %s118 = sphi 0, %s120
      %s121 = sphi 0, %s118
      %s122 = sphi 0, %s121
      %s138 = sphi 0, %s122
    $region4: #{tpu_custom_call.1} parent=1 // loop_header_branch
      %19 = sbr.rel (%p17) target = $region8
    $region5: #{tpu_custom_call.1} parent=1 // loop_body
      %s21 = ssub.s32 %s16, 1
      %s22 = ssub.s32 %s16, 2
      %s29 = sadd.s32 1, %s24
      %p30 = scmp.ge.s32.totalorder %s29, 1
      %s31 = scalar_select %p30, 0, %s29
      %s32 = sadd.s32 1, %s23
      %s33 = scalar_select %p30, %s32, %s23
      %p34 = scmp.ge.s32.totalorder %s33, 2
      %s35 = scalar_select %p34, 0, %s33
      %s36 = ssub.s32 %s23, %s35
      %s37 = ssub.s32 %s24, %s31
      %s38 = sor.u32 %s36, %s37
      %p39 = scmp.eq.s32.totalorder %s38, 0
      %s41 = sadd.s32 %s40, 1
      %s42 = scalar_select %p39, %s40, %s41
      %p45 = pneg %p39
      %p46 = scmp.eq.s32.totalorder %s16, 1
      %p47 = por %p45, %p46
      %p48 = scmp.ne.s32.totalorder %s40, %s43
      %p49 = scmp.eq.s32.totalorder %s16, 0
      %p50 = por %p48, %p49
      %p51 = scmp.ne.s32.totalorder %s40, %s43
      %p52 = scmp.eq.s32.totalorder %s21, 1
      %p53 = por %p51, %p52
      %p54 = scmp.ne.s32.totalorder %s43, %s44
      %p55 = scmp.eq.s32.totalorder %s21, 0
      %p56 = por %p54, %p55
      %p57 = scmp.ne.s32.totalorder %s43, %s44
      %p58 = scmp.eq.s32.totalorder %s22, 1
      %p59 = por %p57, %p58
      %p61 = scmp.ne.s32.totalorder %s44, %s60
      %p62 = scmp.eq.s32.totalorder %s22, 0
      %p63 = por %p61, %p62
      %s64 = ssub.s32 %s24, %s31
      %p65 = scmp.eq.s32.totalorder %s64, 0
      %s67 = sadd.s32 %s66, 1
      %s68 = scalar_select %p65, %s66, %s67
      %p71 = pneg %p65
      %p72 = scmp.eq.s32.totalorder %s16, 1
      %p73 = por %p71, %p72
      %p74 = scmp.ne.s32.totalorder %s66, %s69
      %p75 = scmp.eq.s32.totalorder %s16, 0
      %p76 = por %p74, %p75
      %p77 = scmp.ne.s32.totalorder %s66, %s69
      %p78 = scmp.eq.s32.totalorder %s21, 1
      %p79 = por %p77, %p78
      %p80 = scmp.ne.s32.totalorder %s69, %s70
      %p81 = scmp.eq.s32.totalorder %s21, 0
      %p82 = por %p80, %p81
      %p83 = scmp.ne.s32.totalorder %s69, %s70
      %p84 = scmp.eq.s32.totalorder %s22, 1
      %p85 = por %p83, %p84
      %p87 = scmp.ne.s32.totalorder %s70, %s86
      %p88 = scmp.eq.s32.totalorder %s22, 0
      %p89 = por %p87, %p88
      %s90 = ssub.s32 %s23, %s35
      %p91 = scmp.eq.s32.totalorder %s90, 0
      %s93 = sadd.s32 %s92, 1
      %s94 = scalar_select %p91, %s92, %s93
      %p97 = pneg %p91
      %p98 = scmp.eq.s32.totalorder %s16, 1
      %p99 = por %p97, %p98
      %p100 = scmp.ne.s32.totalorder %s92, %s95
      %p101 = scmp.eq.s32.totalorder %s16, 0
      %p102 = por %p100, %p101
      %p103 = scmp.ne.s32.totalorder %s92, %s95
      %p104 = scmp.eq.s32.totalorder %s21, 1
      %p105 = por %p103, %p104
      %p106 = scmp.ne.s32.totalorder %s95, %s96
      %p107 = scmp.eq.s32.totalorder %s21, 0
      %p108 = por %p106, %p107
      %p109 = scmp.ne.s32.totalorder %s95, %s96
      %p110 = scmp.eq.s32.totalorder %s22, 1
      %p111 = por %p109, %p110
      %p113 = scmp.ne.s32.totalorder %s96, %s112
      %p114 = scmp.eq.s32.totalorder %s22, 0
      %p115 = por %p113, %p114
      %s116 = ssub.s32 %s23, %s35
      %p117 = scmp.eq.s32.totalorder %s116, 0
      %s119 = sadd.s32 %s118, 1
      %s120 = scalar_select %p117, %s118, %s119
      %p123 = pneg %p117
      %p124 = scmp.eq.s32.totalorder %s16, 1
      %p125 = por %p123, %p124
      %p126 = scmp.ne.s32.totalorder %s118, %s121
      %p127 = scmp.eq.s32.totalorder %s16, 0
      %p128 = por %p126, %p127
      %p129 = scmp.ne.s32.totalorder %s118, %s121
      %p130 = scmp.eq.s32.totalorder %s21, 1
      %p131 = por %p129, %p130
      %p132 = scmp.ne.s32.totalorder %s121, %s122
      %p133 = scmp.eq.s32.totalorder %s21, 0
      %p134 = por %p132, %p133
      %p135 = scmp.ne.s32.totalorder %s121, %s122
      %p136 = scmp.eq.s32.totalorder %s22, 1
      %p137 = por %p135, %p136
      %p139 = scmp.ne.s32.totalorder %s122, %s138
      %p140 = scmp.eq.s32.totalorder %s22, 0
      %p141 = por %p139, %p140
      %p142 = scmp.le.s32.totalorder 1, %s16
      %p143 = scmp.lt.s32.totalorder %s16, 3
      %p144 = pnand %p142, %p143
      %p145 = pneg %p144
      // Predicated region
      $region9: #{tpu_custom_call.1} parent=5 // pred_check
        _
      $region10: #{tpu_custom_call.1} parent=5 // pred_check_branch
        %147 = sbr.rel (%p144) target = $region12
      $region11: #{tpu_custom_call.1} parent=5 // pred_region
        %s148 = ssub.s32 %s16, 1
        // Predicated region
        $region13: #{tpu_custom_call.1} parent=11 // pred_check
          %p149 = pneg %p82
        $region14: #{tpu_custom_call.1} parent=11 // pred_check_branch
          %151 = sbr.rel (%p149) target = $region16
        $region15: #{tpu_custom_call.1} parent=11 // pred_region
          %s152 = smul.u32 128, %s26
          %s154 = ssub.s32 8192, 8192
          %155 = vsyncadd [#allocation6], %s154
          %s156 = smul.addr %s152, 64
          %s157 = scalar_lea.hbm %s1, %s156
          %s158 = sshll.u32 [#allocation5], 4
          %s159 = int_to_ptr.vmem [resolvable:$true] %s158
          %164 = dma.hbm_to_vmem [thread:$0]  %s157, 8192, %s159, [#allocation6], 64, 64, 4
        $region16: #{tpu_custom_call.1} parent=11 // pred_fallthru
          _
      $region12: #{tpu_custom_call.1} parent=5 // pred_fallthru
        _
      %p165 = scmp.lt.s32.totalorder %s16, 2
      // Predicated region
      $region17: #{tpu_custom_call.1} parent=5 // pred_check
        %p166 = pneg %p165
      $region18: #{tpu_custom_call.1} parent=5 // pred_check_branch
        %168 = sbr.rel (%p166) target = $region20
      $region19: #{tpu_custom_call.1} parent=5 // pred_region
        // Predicated region
        $region21: #{tpu_custom_call.1} parent=19 // pred_check
          %p169 = pneg %p50
        $region22: #{tpu_custom_call.1} parent=19 // pred_check_branch
          %171 = sbr.rel (%p169) target = $region24
        $region23: #{tpu_custom_call.1} parent=19 // pred_region
          %s172 = sand.u32 %s16, 1
          %s173 = scalar_lea.sflag [#allocation3], %s172
          %s174 = sand.u32 %s40, 1
          %s175 = smul.addr %s174, 2048
          %s176 = scalar_lea.vmem [#allocation2], %s175
          %s177 = smul.u32 64, %s23
          %s178 = smul.u32 8, %s24
          %s180 = ssub.s32 32768, 32768
          %181 = vsyncadd %s173, %s180
          %s182 = smul.addr %s177, 8
          %s183 = sadd.s32 %s178, %s182
          %s184 = smul.addr %s183, 64
          %s185 = scalar_lea.hbm %s0, %s184
          %s186 = sshll.u32 %s176, 4
          %s187 = int_to_ptr.vmem [resolvable:$true] %s186
          %192 = dma.hbm_to_vmem [thread:$0]  %s185, 32768, %s187, %s173, 512, 512, 32
        $region24: #{tpu_custom_call.1} parent=19 // pred_fallthru
          _
        // Predicated region
        $region25: #{tpu_custom_call.1} parent=19 // pred_check
          %p193 = pneg %p102
        $region26: #{tpu_custom_call.1} parent=19 // pred_check_branch
          %195 = sbr.rel (%p193) target = $region28
        $region27: #{tpu_custom_call.1} parent=19 // pred_region
          %s196 = sand.u32 %s16, 1
          %s197 = scalar_lea.sflag [#allocation3], %s196
          %s198 = sand.u32 %s92, 1
          %s199 = smul.addr %s198, 512
          %s200 = scalar_lea.vmem [#allocation7], %s199
          %s201 = smul.u32 64, %s23
          %s203 = ssub.s32 8192, 8192
          %204 = vsyncadd %s197, %s203
          %s205 = smul.addr %s201, 128
          %s206 = scalar_lea.hbm %s2, %s205
          %s207 = sshll.u32 %s200, 4
          %s208 = int_to_ptr.vmem [resolvable:$true] %s207
          %213 = dma.hbm_to_vmem [thread:$0]  %s206, 8192, %s208, %s197, 128, 128, 8
        $region28: #{tpu_custom_call.1} parent=19 // pred_fallthru
          _
      $region20: #{tpu_custom_call.1} parent=5 // pred_fallthru
        _
      %p214 = scmp.le.s32.totalorder 1, %s16
      %p215 = scmp.lt.s32.totalorder %s16, 3
      %p216 = pnand %p214, %p215
      %p217 = pneg %p216
      // Predicated region
      $region29: #{tpu_custom_call.1} parent=5 // pred_check
        _
      $region30: #{tpu_custom_call.1} parent=5 // pred_check_branch
        %219 = sbr.rel (%p216) target = $region32
      $region31: #{tpu_custom_call.1} parent=5 // pred_region
        %s220 = ssub.s32 %s16, 1
        %s221 = sand.u32 %s21, 1
        %s222 = scalar_lea.sflag [#allocation3], %s221
        %s223 = sand.u32 %s43, 1
        %s224 = smul.addr %s223, 2048
        %s225 = scalar_lea.vmem [#allocation2], %s224
        // Predicated region
        $region33: #{tpu_custom_call.1} parent=31 // pred_check
          %p226 = pneg %p56
        $region34: #{tpu_custom_call.1} parent=31 // pred_check_branch
          %228 = sbr.rel (%p226) target = $region36
        $region35: #{tpu_custom_call.1} parent=31 // pred_region
          %229 = dma.done %s222, 32768
        $region36: #{tpu_custom_call.1} parent=31 // pred_fallthru
          _
        // Predicated region
        $region37: #{tpu_custom_call.1} parent=31 // pred_check
          %p230 = pneg %p82
        $region38: #{tpu_custom_call.1} parent=31 // pred_check_branch
          %232 = sbr.rel (%p230) target = $region40
        $region39: #{tpu_custom_call.1} parent=31 // pred_region
          %233 = dma.done [#allocation6], 8192
        $region40: #{tpu_custom_call.1} parent=31 // pred_fallthru
          _
        %s234 = sand.u32 %s21, 1
        %s235 = scalar_lea.sflag [#allocation3], %s234
        %s236 = sand.u32 %s95, 1
        %s237 = smul.addr %s236, 512
        %s238 = scalar_lea.vmem [#allocation7], %s237
        // Predicated region
        $region41: #{tpu_custom_call.1} parent=31 // pred_check
          %p239 = pneg %p108
        $region42: #{tpu_custom_call.1} parent=31 // pred_check_branch
          %241 = sbr.rel (%p239) target = $region44
        $region43: #{tpu_custom_call.1} parent=31 // pred_region
          %242 = dma.done %s235, 8192
        $region44: #{tpu_custom_call.1} parent=31 // pred_fallthru
          _
        %s243 = sand.u32 %s21, 1
        %s244 = scalar_lea.sflag [#allocation3], %s243
        %s245 = sand.u32 %s43, 1
        %s246 = smul.addr %s245, 2048
        %s247 = scalar_lea.vmem [#allocation2], %s246
        %p248 = pneg %p56
        %p249 = pneg %p53
        %p250 = pneg %p82
        %p251 = pneg %p79
        %s252 = sand.u32 %s21, 1
        %s253 = scalar_lea.sflag [#allocation3], %s252
        %s254 = sand.u32 %s95, 1
        %s255 = smul.addr %s254, 512
        %s256 = scalar_lea.vmem [#allocation7], %s255
        %p257 = pneg %p108
        %p258 = pneg %p105
        %p259 = pneg %p134
        %p260 = pneg %p131
        %s261 = sand.u32 %s121, 1
        %s262 = scalar_lea.sflag [#allocation4], %s261
        %s263 = sand.u32 %s121, 1
        %s264 = smul.addr %s263, 512
        %s265 = scalar_lea.vmem [#allocation8], %s264
        %s266 = smul.u32 64, %s25
        %s267 = smul.u32 8, %s26
        %s268 = smul.u32 128, %s26
        %s269 = smul.u32 64, %s25
        %s270 = smul.u32 64, %s25
        %p272 = scmp.eq.s32.totalorder %s26, 0
        // Predicated region
        $region45: #{tpu_custom_call.1} parent=31 // pred_check
          %p273 = pneg %p272
        $region46: #{tpu_custom_call.1} parent=31 // pred_check_branch
          %275 = sbr.rel (%p273) target = $region48
        $region47: #{tpu_custom_call.1} parent=31 // pred_region
          %v276 = vld [vmem:[%s238] sm:$0xff]
          %v277 = vld [vmem:[%s238 + $0x8] sm:$0xff]
          %v278 = vld [vmem:[%s238 + $0x10] sm:$0xff]
          %v279 = vld [vmem:[%s238 + $0x18] sm:$0xff]
          %v280 = vld [vmem:[%s238 + $0x20] sm:$0xff]
          %v281 = vld [vmem:[%s238 + $0x28] sm:$0xff]
          %v282 = vld [vmem:[%s238 + $0x30] sm:$0xff]
          %v283 = vld [vmem:[%s238 + $0x38] sm:$0xff]
          %v284 = vld [vmem:[%s238 + $0x40] sm:$0xff]
          %v285 = vld [vmem:[%s238 + $0x48] sm:$0xff]
          %v286 = vld [vmem:[%s238 + $0x50] sm:$0xff]
          %v287 = vld [vmem:[%s238 + $0x58] sm:$0xff]
          %v288 = vld [vmem:[%s238 + $0x60] sm:$0xff]
          %v289 = vld [vmem:[%s238 + $0x68] sm:$0xff]
          %v290 = vld [vmem:[%s238 + $0x70] sm:$0xff]
          %v291 = vld [vmem:[%s238 + $0x78] sm:$0xff]
          %v292 = vld [vmem:[%s238 + $0x80] sm:$0xff]
          %v293 = vld [vmem:[%s238 + $0x88] sm:$0xff]
          %v294 = vld [vmem:[%s238 + $0x90] sm:$0xff]
          %v295 = vld [vmem:[%s238 + $0x98] sm:$0xff]
          %v296 = vld [vmem:[%s238 + $0xa0] sm:$0xff]
          %v297 = vld [vmem:[%s238 + $0xa8] sm:$0xff]
          %v298 = vld [vmem:[%s238 + $0xb0] sm:$0xff]
          %v299 = vld [vmem:[%s238 + $0xb8] sm:$0xff]
          %v300 = vld [vmem:[%s238 + $0xc0] sm:$0xff]
          %v301 = vld [vmem:[%s238 + $0xc8] sm:$0xff]
          %v302 = vld [vmem:[%s238 + $0xd0] sm:$0xff]
          %v303 = vld [vmem:[%s238 + $0xd8] sm:$0xff]
          %v304 = vld [vmem:[%s238 + $0xe0] sm:$0xff]
          %v305 = vld [vmem:[%s238 + $0xe8] sm:$0xff]
          %v306 = vld [vmem:[%s238 + $0xf0] sm:$0xff]
          %v307 = vld [vmem:[%s238 + $0xf8] sm:$0xff]
          %v308 = vld [vmem:[%s238 + $0x100] sm:$0xff]
          %v309 = vld [vmem:[%s238 + $0x108] sm:$0xff]
          %v310 = vld [vmem:[%s238 + $0x110] sm:$0xff]
          %v311 = vld [vmem:[%s238 + $0x118] sm:$0xff]
          %v312 = vld [vmem:[%s238 + $0x120] sm:$0xff]
          %v313 = vld [vmem:[%s238 + $0x128] sm:$0xff]
          %v314 = vld [vmem:[%s238 + $0x130] sm:$0xff]
          %v315 = vld [vmem:[%s238 + $0x138] sm:$0xff]
          %v316 = vld [vmem:[%s238 + $0x140] sm:$0xff]
          %v317 = vld [vmem:[%s238 + $0x148] sm:$0xff]
          %v318 = vld [vmem:[%s238 + $0x150] sm:$0xff]
          %v319 = vld [vmem:[%s238 + $0x158] sm:$0xff]
          %v320 = vld [vmem:[%s238 + $0x160] sm:$0xff]
          %v321 = vld [vmem:[%s238 + $0x168] sm:$0xff]
          %v322 = vld [vmem:[%s238 + $0x170] sm:$0xff]
          %v323 = vld [vmem:[%s238 + $0x178] sm:$0xff]
          %v324 = vld [vmem:[%s238 + $0x180] sm:$0xff]
          %v325 = vld [vmem:[%s238 + $0x188] sm:$0xff]
          %v326 = vld [vmem:[%s238 + $0x190] sm:$0xff]
          %v327 = vld [vmem:[%s238 + $0x198] sm:$0xff]
          %v328 = vld [vmem:[%s238 + $0x1a0] sm:$0xff]
          %v329 = vld [vmem:[%s238 + $0x1a8] sm:$0xff]
          %v330 = vld [vmem:[%s238 + $0x1b0] sm:$0xff]
          %v331 = vld [vmem:[%s238 + $0x1b8] sm:$0xff]
          %v332 = vld [vmem:[%s238 + $0x1c0] sm:$0xff]
          %v333 = vld [vmem:[%s238 + $0x1c8] sm:$0xff]
          %v334 = vld [vmem:[%s238 + $0x1d0] sm:$0xff]
          %v335 = vld [vmem:[%s238 + $0x1d8] sm:$0xff]
          %v336 = vld [vmem:[%s238 + $0x1e0] sm:$0xff]
          %v337 = vld [vmem:[%s238 + $0x1e8] sm:$0xff]
          %v338 = vld [vmem:[%s238 + $0x1f0] sm:$0xff]
          %v339 = vld [vmem:[%s238 + $0x1f8] sm:$0xff]
          %340 = vst [vmem:[%s265] sm:$0xff] %v276
          %341 = vst [vmem:[%s265 + $0x8] sm:$0xff] %v277
          %342 = vst [vmem:[%s265 + $0x10] sm:$0xff] %v278
          %343 = vst [vmem:[%s265 + $0x18] sm:$0xff] %v279
          %344 = vst [vmem:[%s265 + $0x20] sm:$0xff] %v280
          %345 = vst [vmem:[%s265 + $0x28] sm:$0xff] %v281
          %346 = vst [vmem:[%s265 + $0x30] sm:$0xff] %v282
          %347 = vst [vmem:[%s265 + $0x38] sm:$0xff] %v283
          %348 = vst [vmem:[%s265 + $0x40] sm:$0xff] %v284
          %349 = vst [vmem:[%s265 + $0x48] sm:$0xff] %v285
          %350 = vst [vmem:[%s265 + $0x50] sm:$0xff] %v286
          %351 = vst [vmem:[%s265 + $0x58] sm:$0xff] %v287
          %352 = vst [vmem:[%s265 + $0x60] sm:$0xff] %v288
          %353 = vst [vmem:[%s265 + $0x68] sm:$0xff] %v289
          %354 = vst [vmem:[%s265 + $0x70] sm:$0xff] %v290
          %355 = vst [vmem:[%s265 + $0x78] sm:$0xff] %v291
          %356 = vst [vmem:[%s265 + $0x80] sm:$0xff] %v292
          %357 = vst [vmem:[%s265 + $0x88] sm:$0xff] %v293
          %358 = vst [vmem:[%s265 + $0x90] sm:$0xff] %v294
          %359 = vst [vmem:[%s265 + $0x98] sm:$0xff] %v295
          %360 = vst [vmem:[%s265 + $0xa0] sm:$0xff] %v296
          %361 = vst [vmem:[%s265 + $0xa8] sm:$0xff] %v297
          %362 = vst [vmem:[%s265 + $0xb0] sm:$0xff] %v298
          %363 = vst [vmem:[%s265 + $0xb8] sm:$0xff] %v299
          %364 = vst [vmem:[%s265 + $0xc0] sm:$0xff] %v300
          %365 = vst [vmem:[%s265 + $0xc8] sm:$0xff] %v301
          %366 = vst [vmem:[%s265 + $0xd0] sm:$0xff] %v302
          %367 = vst [vmem:[%s265 + $0xd8] sm:$0xff] %v303
          %368 = vst [vmem:[%s265 + $0xe0] sm:$0xff] %v304
          %369 = vst [vmem:[%s265 + $0xe8] sm:$0xff] %v305
          %370 = vst [vmem:[%s265 + $0xf0] sm:$0xff] %v306
          %371 = vst [vmem:[%s265 + $0xf8] sm:$0xff] %v307
          %372 = vst [vmem:[%s265 + $0x100] sm:$0xff] %v308
          %373 = vst [vmem:[%s265 + $0x108] sm:$0xff] %v309
          %374 = vst [vmem:[%s265 + $0x110] sm:$0xff] %v310
          %375 = vst [vmem:[%s265 + $0x118] sm:$0xff] %v311
          %376 = vst [vmem:[%s265 + $0x120] sm:$0xff] %v312
          %377 = vst [vmem:[%s265 + $0x128] sm:$0xff] %v313
          %378 = vst [vmem:[%s265 + $0x130] sm:$0xff] %v314
          %379 = vst [vmem:[%s265 + $0x138] sm:$0xff] %v315
          %380 = vst [vmem:[%s265 + $0x140] sm:$0xff] %v316
          %381 = vst [vmem:[%s265 + $0x148] sm:$0xff] %v317
          %382 = vst [vmem:[%s265 + $0x150] sm:$0xff] %v318
          %383 = vst [vmem:[%s265 + $0x158] sm:$0xff] %v319
          %384 = vst [vmem:[%s265 + $0x160] sm:$0xff] %v320
          %385 = vst [vmem:[%s265 + $0x168] sm:$0xff] %v321
          %386 = vst [vmem:[%s265 + $0x170] sm:$0xff] %v322
          %387 = vst [vmem:[%s265 + $0x178] sm:$0xff] %v323
          %388 = vst [vmem:[%s265 + $0x180] sm:$0xff] %v324
          %389 = vst [vmem:[%s265 + $0x188] sm:$0xff] %v325
          %390 = vst [vmem:[%s265 + $0x190] sm:$0xff] %v326
          %391 = vst [vmem:[%s265 + $0x198] sm:$0xff] %v327
          %392 = vst [vmem:[%s265 + $0x1a0] sm:$0xff] %v328
          %393 = vst [vmem:[%s265 + $0x1a8] sm:$0xff] %v329
          %394 = vst [vmem:[%s265 + $0x1b0] sm:$0xff] %v330
          %395 = vst [vmem:[%s265 + $0x1b8] sm:$0xff] %v331
          %396 = vst [vmem:[%s265 + $0x1c0] sm:$0xff] %v332
          %397 = vst [vmem:[%s265 + $0x1c8] sm:$0xff] %v333
          %398 = vst [vmem:[%s265 + $0x1d0] sm:$0xff] %v334
          %399 = vst [vmem:[%s265 + $0x1d8] sm:$0xff] %v335
          %400 = vst [vmem:[%s265 + $0x1e0] sm:$0xff] %v336
          %401 = vst [vmem:[%s265 + $0x1e8] sm:$0xff] %v337
          %402 = vst [vmem:[%s265 + $0x1f0] sm:$0xff] %v338
          %403 = vst [vmem:[%s265 + $0x1f8] sm:$0xff] %v339
        $region48: #{tpu_custom_call.1} parent=31 // pred_fallthru
          _
        %v404 = vld [vmem:[%s265] sm:$0xff]
        %v405 = vld [vmem:[%s265 + $0x8] sm:$0xff]
        %v406 = vld [vmem:[%s265 + $0x10] sm:$0xff]
        %v407 = vld [vmem:[%s265 + $0x18] sm:$0xff]
        %v408 = vld [vmem:[%s265 + $0x20] sm:$0xff]
        %v409 = vld [vmem:[%s265 + $0x28] sm:$0xff]
        %v410 = vld [vmem:[%s265 + $0x30] sm:$0xff]
        %v411 = vld [vmem:[%s265 + $0x38] sm:$0xff]
        %v412 = vld [vmem:[%s265 + $0x40] sm:$0xff]
        %v413 = vld [vmem:[%s265 + $0x48] sm:$0xff]
        %v414 = vld [vmem:[%s265 + $0x50] sm:$0xff]
        %v415 = vld [vmem:[%s265 + $0x58] sm:$0xff]
        %v416 = vld [vmem:[%s265 + $0x60] sm:$0xff]
        %v417 = vld [vmem:[%s265 + $0x68] sm:$0xff]
        %v418 = vld [vmem:[%s265 + $0x70] sm:$0xff]
        %v419 = vld [vmem:[%s265 + $0x78] sm:$0xff]
        %v420 = vld [vmem:[%s265 + $0x80] sm:$0xff]
        %v421 = vld [vmem:[%s265 + $0x88] sm:$0xff]
        %v422 = vld [vmem:[%s265 + $0x90] sm:$0xff]
        %v423 = vld [vmem:[%s265 + $0x98] sm:$0xff]
        %v424 = vld [vmem:[%s265 + $0xa0] sm:$0xff]
        %v425 = vld [vmem:[%s265 + $0xa8] sm:$0xff]
        %v426 = vld [vmem:[%s265 + $0xb0] sm:$0xff]
        %v427 = vld [vmem:[%s265 + $0xb8] sm:$0xff]
        %v428 = vld [vmem:[%s265 + $0xc0] sm:$0xff]
        %v429 = vld [vmem:[%s265 + $0xc8] sm:$0xff]
        %v430 = vld [vmem:[%s265 + $0xd0] sm:$0xff]
        %v431 = vld [vmem:[%s265 + $0xd8] sm:$0xff]
        %v432 = vld [vmem:[%s265 + $0xe0] sm:$0xff]
        %v433 = vld [vmem:[%s265 + $0xe8] sm:$0xff]
        %v434 = vld [vmem:[%s265 + $0xf0] sm:$0xff]
        %v435 = vld [vmem:[%s265 + $0xf8] sm:$0xff]
        %v436 = vld [vmem:[%s265 + $0x100] sm:$0xff]
        %v437 = vld [vmem:[%s265 + $0x108] sm:$0xff]
        %v438 = vld [vmem:[%s265 + $0x110] sm:$0xff]
        %v439 = vld [vmem:[%s265 + $0x118] sm:$0xff]
        %v440 = vld [vmem:[%s265 + $0x120] sm:$0xff]
        %v441 = vld [vmem:[%s265 + $0x128] sm:$0xff]
        %v442 = vld [vmem:[%s265 + $0x130] sm:$0xff]
        %v443 = vld [vmem:[%s265 + $0x138] sm:$0xff]
        %v444 = vld [vmem:[%s265 + $0x140] sm:$0xff]
        %v445 = vld [vmem:[%s265 + $0x148] sm:$0xff]
        %v446 = vld [vmem:[%s265 + $0x150] sm:$0xff]
        %v447 = vld [vmem:[%s265 + $0x158] sm:$0xff]
        %v448 = vld [vmem:[%s265 + $0x160] sm:$0xff]
        %v449 = vld [vmem:[%s265 + $0x168] sm:$0xff]
        %v450 = vld [vmem:[%s265 + $0x170] sm:$0xff]
        %v451 = vld [vmem:[%s265 + $0x178] sm:$0xff]
        %v452 = vld [vmem:[%s265 + $0x180] sm:$0xff]
        %v453 = vld [vmem:[%s265 + $0x188] sm:$0xff]
        %v454 = vld [vmem:[%s265 + $0x190] sm:$0xff]
        %v455 = vld [vmem:[%s265 + $0x198] sm:$0xff]
        %v456 = vld [vmem:[%s265 + $0x1a0] sm:$0xff]
        %v457 = vld [vmem:[%s265 + $0x1a8] sm:$0xff]
        %v458 = vld [vmem:[%s265 + $0x1b0] sm:$0xff]
        %v459 = vld [vmem:[%s265 + $0x1b8] sm:$0xff]
        %v460 = vld [vmem:[%s265 + $0x1c0] sm:$0xff]
        %v461 = vld [vmem:[%s265 + $0x1c8] sm:$0xff]
        %v462 = vld [vmem:[%s265 + $0x1d0] sm:$0xff]
        %v463 = vld [vmem:[%s265 + $0x1d8] sm:$0xff]
        %v464 = vld [vmem:[%s265 + $0x1e0] sm:$0xff]
        %v465 = vld [vmem:[%s265 + $0x1e8] sm:$0xff]
        %v466 = vld [vmem:[%s265 + $0x1f0] sm:$0xff]
        %v467 = vld [vmem:[%s265 + $0x1f8] sm:$0xff]
        %v468 = vld [vmem:[%s225] sm:$0xff]
        %v469 = vld [vmem:[%s225 + $0x8] sm:$0xff]
        %v470 = vld [vmem:[%s225 + $0x10] sm:$0xff]
        %v471 = vld [vmem:[%s225 + $0x18] sm:$0xff]
        %v472 = vld [vmem:[%s225 + $0x20] sm:$0xff]
        %v473 = vld [vmem:[%s225 + $0x28] sm:$0xff]
        %v474 = vld [vmem:[%s225 + $0x30] sm:$0xff]
        %v475 = vld [vmem:[%s225 + $0x38] sm:$0xff]
        %v476 = vld [vmem:[%s225 + $0x40] sm:$0xff]
        %v477 = vld [vmem:[%s225 + $0x48] sm:$0xff]
        %v478 = vld [vmem:[%s225 + $0x50] sm:$0xff]
        %v479 = vld [vmem:[%s225 + $0x58] sm:$0xff]
        %v480 = vld [vmem:[%s225 + $0x60] sm:$0xff]
        %v481 = vld [vmem:[%s225 + $0x68] sm:$0xff]
        %v482 = vld [vmem:[%s225 + $0x70] sm:$0xff]
        %v483 = vld [vmem:[%s225 + $0x78] sm:$0xff]
        %v484 = vld [vmem:[%s225 + $0x80] sm:$0xff]
        %v485 = vld [vmem:[%s225 + $0x88] sm:$0xff]
        %v486 = vld [vmem:[%s225 + $0x90] sm:$0xff]
        %v487 = vld [vmem:[%s225 + $0x98] sm:$0xff]
        %v488 = vld [vmem:[%s225 + $0xa0] sm:$0xff]
        %v489 = vld [vmem:[%s225 + $0xa8] sm:$0xff]
        %v490 = vld [vmem:[%s225 + $0xb0] sm:$0xff]
        %v491 = vld [vmem:[%s225 + $0xb8] sm:$0xff]
        %v492 = vld [vmem:[%s225 + $0xc0] sm:$0xff]
        %v493 = vld [vmem:[%s225 + $0xc8] sm:$0xff]
        %v494 = vld [vmem:[%s225 + $0xd0] sm:$0xff]
        %v495 = vld [vmem:[%s225 + $0xd8] sm:$0xff]
        %v496 = vld [vmem:[%s225 + $0xe0] sm:$0xff]
        %v497 = vld [vmem:[%s225 + $0xe8] sm:$0xff]
        %v498 = vld [vmem:[%s225 + $0xf0] sm:$0xff]
        %v499 = vld [vmem:[%s225 + $0xf8] sm:$0xff]
        %v500 = vld [vmem:[%s225 + $0x100] sm:$0xff]
        %v501 = vld [vmem:[%s225 + $0x108] sm:$0xff]
        %v502 = vld [vmem:[%s225 + $0x110] sm:$0xff]
        %v503 = vld [vmem:[%s225 + $0x118] sm:$0xff]
        %v504 = vld [vmem:[%s225 + $0x120] sm:$0xff]
        %v505 = vld [vmem:[%s225 + $0x128] sm:$0xff]
        %v506 = vld [vmem:[%s225 + $0x130] sm:$0xff]
        %v507 = vld [vmem:[%s225 + $0x138] sm:$0xff]
        %v508 = vld [vmem:[%s225 + $0x140] sm:$0xff]
        %v509 = vld [vmem:[%s225 + $0x148] sm:$0xff]
        %v510 = vld [vmem:[%s225 + $0x150] sm:$0xff]
        %v511 = vld [vmem:[%s225 + $0x158] sm:$0xff]
        %v512 = vld [vmem:[%s225 + $0x160] sm:$0xff]
        %v513 = vld [vmem:[%s225 + $0x168] sm:$0xff]
        %v514 = vld [vmem:[%s225 + $0x170] sm:$0xff]
        %v515 = vld [vmem:[%s225 + $0x178] sm:$0xff]
        %v516 = vld [vmem:[%s225 + $0x180] sm:$0xff]
        %v517 = vld [vmem:[%s225 + $0x188] sm:$0xff]
        %v518 = vld [vmem:[%s225 + $0x190] sm:$0xff]
        %v519 = vld [vmem:[%s225 + $0x198] sm:$0xff]
        %v520 = vld [vmem:[%s225 + $0x1a0] sm:$0xff]
        %v521 = vld [vmem:[%s225 + $0x1a8] sm:$0xff]
        %v522 = vld [vmem:[%s225 + $0x1b0] sm:$0xff]
        %v523 = vld [vmem:[%s225 + $0x1b8] sm:$0xff]
        %v524 = vld [vmem:[%s225 + $0x1c0] sm:$0xff]
        %v525 = vld [vmem:[%s225 + $0x1c8] sm:$0xff]
        %v526 = vld [vmem:[%s225 + $0x1d0] sm:$0xff]
        %v527 = vld [vmem:[%s225 + $0x1d8] sm:$0xff]
        %v528 = vld [vmem:[%s225 + $0x1e0] sm:$0xff]
        %v529 = vld [vmem:[%s225 + $0x1e8] sm:$0xff]
        %v530 = vld [vmem:[%s225 + $0x1f0] sm:$0xff]
        %v531 = vld [vmem:[%s225 + $0x1f8] sm:$0xff]
        %v532 = vld [vmem:[%s225 + $0x200] sm:$0xff]
        %v533 = vld [vmem:[%s225 + $0x208] sm:$0xff]
        %v534 = vld [vmem:[%s225 + $0x210] sm:$0xff]
        %v535 = vld [vmem:[%s225 + $0x218] sm:$0xff]
        %v536 = vld [vmem:[%s225 + $0x220] sm:$0xff]
        %v537 = vld [vmem:[%s225 + $0x228] sm:$0xff]
        %v538 = vld [vmem:[%s225 + $0x230] sm:$0xff]
        %v539 = vld [vmem:[%s225 + $0x238] sm:$0xff]
        %v540 = vld [vmem:[%s225 + $0x240] sm:$0xff]
        %v541 = vld [vmem:[%s225 + $0x248] sm:$0xff]
        %v542 = vld [vmem:[%s225 + $0x250] sm:$0xff]
        %v543 = vld [vmem:[%s225 + $0x258] sm:$0xff]
        %v544 = vld [vmem:[%s225 + $0x260] sm:$0xff]
        %v545 = vld [vmem:[%s225 + $0x268] sm:$0xff]
        %v546 = vld [vmem:[%s225 + $0x270] sm:$0xff]
        %v547 = vld [vmem:[%s225 + $0x278] sm:$0xff]
        %v548 = vld [vmem:[%s225 + $0x280] sm:$0xff]
        %v549 = vld [vmem:[%s225 + $0x288] sm:$0xff]
        %v550 = vld [vmem:[%s225 + $0x290] sm:$0xff]
        %v551 = vld [vmem:[%s225 + $0x298] sm:$0xff]
        %v552 = vld [vmem:[%s225 + $0x2a0] sm:$0xff]
        %v553 = vld [vmem:[%s225 + $0x2a8] sm:$0xff]
        %v554 = vld [vmem:[%s225 + $0x2b0] sm:$0xff]
        %v555 = vld [vmem:[%s225 + $0x2b8] sm:$0xff]
        %v556 = vld [vmem:[%s225 + $0x2c0] sm:$0xff]
        %v557 = vld [vmem:[%s225 + $0x2c8] sm:$0xff]
        %v558 = vld [vmem:[%s225 + $0x2d0] sm:$0xff]
        %v559 = vld [vmem:[%s225 + $0x2d8] sm:$0xff]
        %v560 = vld [vmem:[%s225 + $0x2e0] sm:$0xff]
        %v561 = vld [vmem:[%s225 + $0x2e8] sm:$0xff]
        %v562 = vld [vmem:[%s225 + $0x2f0] sm:$0xff]
        %v563 = vld [vmem:[%s225 + $0x2f8] sm:$0xff]
        %v564 = vld [vmem:[%s225 + $0x300] sm:$0xff]
        %v565 = vld [vmem:[%s225 + $0x308] sm:$0xff]
        %v566 = vld [vmem:[%s225 + $0x310] sm:$0xff]
        %v567 = vld [vmem:[%s225 + $0x318] sm:$0xff]
        %v568 = vld [vmem:[%s225 + $0x320] sm:$0xff]
        %v569 = vld [vmem:[%s225 + $0x328] sm:$0xff]
        %v570 = vld [vmem:[%s225 + $0x330] sm:$0xff]
        %v571 = vld [vmem:[%s225 + $0x338] sm:$0xff]
        %v572 = vld [vmem:[%s225 + $0x340] sm:$0xff]
        %v573 = vld [vmem:[%s225 + $0x348] sm:$0xff]
        %v574 = vld [vmem:[%s225 + $0x350] sm:$0xff]
        %v575 = vld [vmem:[%s225 + $0x358] sm:$0xff]
        %v576 = vld [vmem:[%s225 + $0x360] sm:$0xff]
        %v577 = vld [vmem:[%s225 + $0x368] sm:$0xff]
        %v578 = vld [vmem:[%s225 + $0x370] sm:$0xff]
        %v579 = vld [vmem:[%s225 + $0x378] sm:$0xff]
        %v580 = vld [vmem:[%s225 + $0x380] sm:$0xff]
        %v581 = vld [vmem:[%s225 + $0x388] sm:$0xff]
        %v582 = vld [vmem:[%s225 + $0x390] sm:$0xff]
        %v583 = vld [vmem:[%s225 + $0x398] sm:$0xff]
        %v584 = vld [vmem:[%s225 + $0x3a0] sm:$0xff]
        %v585 = vld [vmem:[%s225 + $0x3a8] sm:$0xff]
        %v586 = vld [vmem:[%s225 + $0x3b0] sm:$0xff]
        %v587 = vld [vmem:[%s225 + $0x3b8] sm:$0xff]
        %v588 = vld [vmem:[%s225 + $0x3c0] sm:$0xff]
        %v589 = vld [vmem:[%s225 + $0x3c8] sm:$0xff]
        %v590 = vld [vmem:[%s225 + $0x3d0] sm:$0xff]
        %v591 = vld [vmem:[%s225 + $0x3d8] sm:$0xff]
        %v592 = vld [vmem:[%s225 + $0x3e0] sm:$0xff]
        %v593 = vld [vmem:[%s225 + $0x3e8] sm:$0xff]
        %v594 = vld [vmem:[%s225 + $0x3f0] sm:$0xff]
        %v595 = vld [vmem:[%s225 + $0x3f8] sm:$0xff]
        %v596 = vld [vmem:[%s225 + $0x400] sm:$0xff]
        %v597 = vld [vmem:[%s225 + $0x408] sm:$0xff]
        %v598 = vld [vmem:[%s225 + $0x410] sm:$0xff]
        %v599 = vld [vmem:[%s225 + $0x418] sm:$0xff]
        %v600 = vld [vmem:[%s225 + $0x420] sm:$0xff]
        %v601 = vld [vmem:[%s225 + $0x428] sm:$0xff]
        %v602 = vld [vmem:[%s225 + $0x430] sm:$0xff]
        %v603 = vld [vmem:[%s225 + $0x438] sm:$0xff]
        %v604 = vld [vmem:[%s225 + $0x440] sm:$0xff]
        %v605 = vld [vmem:[%s225 + $0x448] sm:$0xff]
        %v606 = vld [vmem:[%s225 + $0x450] sm:$0xff]
        %v607 = vld [vmem:[%s225 + $0x458] sm:$0xff]
        %v608 = vld [vmem:[%s225 + $0x460] sm:$0xff]
        %v609 = vld [vmem:[%s225 + $0x468] sm:$0xff]
        %v610 = vld [vmem:[%s225 + $0x470] sm:$0xff]
        %v611 = vld [vmem:[%s225 + $0x478] sm:$0xff]
        %v612 = vld [vmem:[%s225 + $0x480] sm:$0xff]
        %v613 = vld [vmem:[%s225 + $0x488] sm:$0xff]
        %v614 = vld [vmem:[%s225 + $0x490] sm:$0xff]
        %v615 = vld [vmem:[%s225 + $0x498] sm:$0xff]
        %v616 = vld [vmem:[%s225 + $0x4a0] sm:$0xff]
        %v617 = vld [vmem:[%s225 + $0x4a8] sm:$0xff]
        %v618 = vld [vmem:[%s225 + $0x4b0] sm:$0xff]
        %v619 = vld [vmem:[%s225 + $0x4b8] sm:$0xff]
        %v620 = vld [vmem:[%s225 + $0x4c0] sm:$0xff]
        %v621 = vld [vmem:[%s225 + $0x4c8] sm:$0xff]
        %v622 = vld [vmem:[%s225 + $0x4d0] sm:$0xff]
        %v623 = vld [vmem:[%s225 + $0x4d8] sm:$0xff]
        %v624 = vld [vmem:[%s225 + $0x4e0] sm:$0xff]
        %v625 = vld [vmem:[%s225 + $0x4e8] sm:$0xff]
        %v626 = vld [vmem:[%s225 + $0x4f0] sm:$0xff]
        %v627 = vld [vmem:[%s225 + $0x4f8] sm:$0xff]
        %v628 = vld [vmem:[%s225 + $0x500] sm:$0xff]
        %v629 = vld [vmem:[%s225 + $0x508] sm:$0xff]
        %v630 = vld [vmem:[%s225 + $0x510] sm:$0xff]
        %v631 = vld [vmem:[%s225 + $0x518] sm:$0xff]
        %v632 = vld [vmem:[%s225 + $0x520] sm:$0xff]
        %v633 = vld [vmem:[%s225 + $0x528] sm:$0xff]
        %v634 = vld [vmem:[%s225 + $0x530] sm:$0xff]
        %v635 = vld [vmem:[%s225 + $0x538] sm:$0xff]
        %v636 = vld [vmem:[%s225 + $0x540] sm:$0xff]
        %v637 = vld [vmem:[%s225 + $0x548] sm:$0xff]
        %v638 = vld [vmem:[%s225 + $0x550] sm:$0xff]
        %v639 = vld [vmem:[%s225 + $0x558] sm:$0xff]
        %v640 = vld [vmem:[%s225 + $0x560] sm:$0xff]
        %v641 = vld [vmem:[%s225 + $0x568] sm:$0xff]
        %v642 = vld [vmem:[%s225 + $0x570] sm:$0xff]
        %v643 = vld [vmem:[%s225 + $0x578] sm:$0xff]
        %v644 = vld [vmem:[%s225 + $0x580] sm:$0xff]
        %v645 = vld [vmem:[%s225 + $0x588] sm:$0xff]
        %v646 = vld [vmem:[%s225 + $0x590] sm:$0xff]
        %v647 = vld [vmem:[%s225 + $0x598] sm:$0xff]
        %v648 = vld [vmem:[%s225 + $0x5a0] sm:$0xff]
        %v649 = vld [vmem:[%s225 + $0x5a8] sm:$0xff]
        %v650 = vld [vmem:[%s225 + $0x5b0] sm:$0xff]
        %v651 = vld [vmem:[%s225 + $0x5b8] sm:$0xff]
        %v652 = vld [vmem:[%s225 + $0x5c0] sm:$0xff]
        %v653 = vld [vmem:[%s225 + $0x5c8] sm:$0xff]
        %v654 = vld [vmem:[%s225 + $0x5d0] sm:$0xff]
        %v655 = vld [vmem:[%s225 + $0x5d8] sm:$0xff]
        %v656 = vld [vmem:[%s225 + $0x5e0] sm:$0xff]
        %v657 = vld [vmem:[%s225 + $0x5e8] sm:$0xff]
        %v658 = vld [vmem:[%s225 + $0x5f0] sm:$0xff]
        %v659 = vld [vmem:[%s225 + $0x5f8] sm:$0xff]
        %v660 = vld [vmem:[%s225 + $0x600] sm:$0xff]
        %v661 = vld [vmem:[%s225 + $0x608] sm:$0xff]
        %v662 = vld [vmem:[%s225 + $0x610] sm:$0xff]
        %v663 = vld [vmem:[%s225 + $0x618] sm:$0xff]
        %v664 = vld [vmem:[%s225 + $0x620] sm:$0xff]
        %v665 = vld [vmem:[%s225 + $0x628] sm:$0xff]
        %v666 = vld [vmem:[%s225 + $0x630] sm:$0xff]
        %v667 = vld [vmem:[%s225 + $0x638] sm:$0xff]
        %v668 = vld [vmem:[%s225 + $0x640] sm:$0xff]
        %v669 = vld [vmem:[%s225 + $0x648] sm:$0xff]
        %v670 = vld [vmem:[%s225 + $0x650] sm:$0xff]
        %v671 = vld [vmem:[%s225 + $0x658] sm:$0xff]
        %v672 = vld [vmem:[%s225 + $0x660] sm:$0xff]
        %v673 = vld [vmem:[%s225 + $0x668] sm:$0xff]
        %v674 = vld [vmem:[%s225 + $0x670] sm:$0xff]
        %v675 = vld [vmem:[%s225 + $0x678] sm:$0xff]
        %v676 = vld [vmem:[%s225 + $0x680] sm:$0xff]
        %v677 = vld [vmem:[%s225 + $0x688] sm:$0xff]
        %v678 = vld [vmem:[%s225 + $0x690] sm:$0xff]
        %v679 = vld [vmem:[%s225 + $0x698] sm:$0xff]
        %v680 = vld [vmem:[%s225 + $0x6a0] sm:$0xff]
        %v681 = vld [vmem:[%s225 + $0x6a8] sm:$0xff]
        %v682 = vld [vmem:[%s225 + $0x6b0] sm:$0xff]
        %v683 = vld [vmem:[%s225 + $0x6b8] sm:$0xff]
        %v684 = vld [vmem:[%s225 + $0x6c0] sm:$0xff]
        %v685 = vld [vmem:[%s225 + $0x6c8] sm:$0xff]
        %v686 = vld [vmem:[%s225 + $0x6d0] sm:$0xff]
        %v687 = vld [vmem:[%s225 + $0x6d8] sm:$0xff]
        %v688 = vld [vmem:[%s225 + $0x6e0] sm:$0xff]
        %v689 = vld [vmem:[%s225 + $0x6e8] sm:$0xff]
        %v690 = vld [vmem:[%s225 + $0x6f0] sm:$0xff]
        %v691 = vld [vmem:[%s225 + $0x6f8] sm:$0xff]
        %v692 = vld [vmem:[%s225 + $0x700] sm:$0xff]
        %v693 = vld [vmem:[%s225 + $0x708] sm:$0xff]
        %v694 = vld [vmem:[%s225 + $0x710] sm:$0xff]
        %v695 = vld [vmem:[%s225 + $0x718] sm:$0xff]
        %v696 = vld [vmem:[%s225 + $0x720] sm:$0xff]
        %v697 = vld [vmem:[%s225 + $0x728] sm:$0xff]
        %v698 = vld [vmem:[%s225 + $0x730] sm:$0xff]
        %v699 = vld [vmem:[%s225 + $0x738] sm:$0xff]
        %v700 = vld [vmem:[%s225 + $0x740] sm:$0xff]
        %v701 = vld [vmem:[%s225 + $0x748] sm:$0xff]
        %v702 = vld [vmem:[%s225 + $0x750] sm:$0xff]
        %v703 = vld [vmem:[%s225 + $0x758] sm:$0xff]
        %v704 = vld [vmem:[%s225 + $0x760] sm:$0xff]
        %v705 = vld [vmem:[%s225 + $0x768] sm:$0xff]
        %v706 = vld [vmem:[%s225 + $0x770] sm:$0xff]
        %v707 = vld [vmem:[%s225 + $0x778] sm:$0xff]
        %v708 = vld [vmem:[%s225 + $0x780] sm:$0xff]
        %v709 = vld [vmem:[%s225 + $0x788] sm:$0xff]
        %v710 = vld [vmem:[%s225 + $0x790] sm:$0xff]
        %v711 = vld [vmem:[%s225 + $0x798] sm:$0xff]
        %v712 = vld [vmem:[%s225 + $0x7a0] sm:$0xff]
        %v713 = vld [vmem:[%s225 + $0x7a8] sm:$0xff]
        %v714 = vld [vmem:[%s225 + $0x7b0] sm:$0xff]
        %v715 = vld [vmem:[%s225 + $0x7b8] sm:$0xff]
        %v716 = vld [vmem:[%s225 + $0x7c0] sm:$0xff]
        %v717 = vld [vmem:[%s225 + $0x7c8] sm:$0xff]
        %v718 = vld [vmem:[%s225 + $0x7d0] sm:$0xff]
        %v719 = vld [vmem:[%s225 + $0x7d8] sm:$0xff]
        %v720 = vld [vmem:[%s225 + $0x7e0] sm:$0xff]
        %v721 = vld [vmem:[%s225 + $0x7e8] sm:$0xff]
        %v722 = vld [vmem:[%s225 + $0x7f0] sm:$0xff]
        %v723 = vld [vmem:[%s225 + $0x7f8] sm:$0xff]
        %v724 = vld [vmem:[#allocation5] sm:$0xf]
        %v725 = vld [vmem:[#allocation5 + $0x4] sm:$0xf]
        %v726 = vld [vmem:[#allocation5 + $0x8] sm:$0xf]
        %v727 = vld [vmem:[#allocation5 + $0xc] sm:$0xf]
        %v728 = vld [vmem:[#allocation5 + $0x10] sm:$0xf]
        %v729 = vld [vmem:[#allocation5 + $0x14] sm:$0xf]
        %v730 = vld [vmem:[#allocation5 + $0x18] sm:$0xf]
        %v731 = vld [vmem:[#allocation5 + $0x1c] sm:$0xf]
        %v732 = vld [vmem:[#allocation5 + $0x20] sm:$0xf]
        %v733 = vld [vmem:[#allocation5 + $0x24] sm:$0xf]
        %v734 = vld [vmem:[#allocation5 + $0x28] sm:$0xf]
        %v735 = vld [vmem:[#allocation5 + $0x2c] sm:$0xf]
        %v736 = vld [vmem:[#allocation5 + $0x30] sm:$0xf]
        %v737 = vld [vmem:[#allocation5 + $0x34] sm:$0xf]
        %v738 = vld [vmem:[#allocation5 + $0x38] sm:$0xf]
        %v739 = vld [vmem:[#allocation5 + $0x3c] sm:$0xf]
        %v740 = vld [vmem:[#allocation5 + $0x40] sm:$0xf]
        %v741 = vld [vmem:[#allocation5 + $0x44] sm:$0xf]
        %v742 = vld [vmem:[#allocation5 + $0x48] sm:$0xf]
        %v743 = vld [vmem:[#allocation5 + $0x4c] sm:$0xf]
        %v744 = vld [vmem:[#allocation5 + $0x50] sm:$0xf]
        %v745 = vld [vmem:[#allocation5 + $0x54] sm:$0xf]
        %v746 = vld [vmem:[#allocation5 + $0x58] sm:$0xf]
        %v747 = vld [vmem:[#allocation5 + $0x5c] sm:$0xf]
        %v748 = vld [vmem:[#allocation5 + $0x60] sm:$0xf]
        %v749 = vld [vmem:[#allocation5 + $0x64] sm:$0xf]
        %v750 = vld [vmem:[#allocation5 + $0x68] sm:$0xf]
        %v751 = vld [vmem:[#allocation5 + $0x6c] sm:$0xf]
        %v752 = vld [vmem:[#allocation5 + $0x70] sm:$0xf]
        %v753 = vld [vmem:[#allocation5 + $0x74] sm:$0xf]
        %v754 = vld [vmem:[#allocation5 + $0x78] sm:$0xf]
        %v755 = vld [vmem:[#allocation5 + $0x7c] sm:$0xf]
        %v756 = vld [vmem:[#allocation5 + $0x80] sm:$0xf]
        %v757 = vld [vmem:[#allocation5 + $0x84] sm:$0xf]
        %v758 = vld [vmem:[#allocation5 + $0x88] sm:$0xf]
        %v759 = vld [vmem:[#allocation5 + $0x8c] sm:$0xf]
        %v760 = vld [vmem:[#allocation5 + $0x90] sm:$0xf]
        %v761 = vld [vmem:[#allocation5 + $0x94] sm:$0xf]
        %v762 = vld [vmem:[#allocation5 + $0x98] sm:$0xf]
        %v763 = vld [vmem:[#allocation5 + $0x9c] sm:$0xf]
        %v764 = vld [vmem:[#allocation5 + $0xa0] sm:$0xf]
        %v765 = vld [vmem:[#allocation5 + $0xa4] sm:$0xf]
        %v766 = vld [vmem:[#allocation5 + $0xa8] sm:$0xf]
        %v767 = vld [vmem:[#allocation5 + $0xac] sm:$0xf]
        %v768 = vld [vmem:[#allocation5 + $0xb0] sm:$0xf]
        %v769 = vld [vmem:[#allocation5 + $0xb4] sm:$0xf]
        %v770 = vld [vmem:[#allocation5 + $0xb8] sm:$0xf]
        %v771 = vld [vmem:[#allocation5 + $0xbc] sm:$0xf]
        %v772 = vld [vmem:[#allocation5 + $0xc0] sm:$0xf]
        %v773 = vld [vmem:[#allocation5 + $0xc4] sm:$0xf]
        %v774 = vld [vmem:[#allocation5 + $0xc8] sm:$0xf]
        %v775 = vld [vmem:[#allocation5 + $0xcc] sm:$0xf]
        %v776 = vld [vmem:[#allocation5 + $0xd0] sm:$0xf]
        %v777 = vld [vmem:[#allocation5 + $0xd4] sm:$0xf]
        %v778 = vld [vmem:[#allocation5 + $0xd8] sm:$0xf]
        %v779 = vld [vmem:[#allocation5 + $0xdc] sm:$0xf]
        %v780 = vld [vmem:[#allocation5 + $0xe0] sm:$0xf]
        %v781 = vld [vmem:[#allocation5 + $0xe4] sm:$0xf]
        %v782 = vld [vmem:[#allocation5 + $0xe8] sm:$0xf]
        %v783 = vld [vmem:[#allocation5 + $0xec] sm:$0xf]
        %v784 = vld [vmem:[#allocation5 + $0xf0] sm:$0xf]
        %v785 = vld [vmem:[#allocation5 + $0xf4] sm:$0xf]
        %v786 = vld [vmem:[#allocation5 + $0xf8] sm:$0xf]
        %v787 = vld [vmem:[#allocation5 + $0xfc] sm:$0xf]
        %v788 = vld [vmem:[#allocation5 + $0x100] sm:$0xf]
        %v789 = vld [vmem:[#allocation5 + $0x104] sm:$0xf]
        %v790 = vld [vmem:[#allocation5 + $0x108] sm:$0xf]
        %v791 = vld [vmem:[#allocation5 + $0x10c] sm:$0xf]
        %v792 = vld [vmem:[#allocation5 + $0x110] sm:$0xf]
        %v793 = vld [vmem:[#allocation5 + $0x114] sm:$0xf]
        %v794 = vld [vmem:[#allocation5 + $0x118] sm:$0xf]
        %v795 = vld [vmem:[#allocation5 + $0x11c] sm:$0xf]
        %v796 = vld [vmem:[#allocation5 + $0x120] sm:$0xf]
        %v797 = vld [vmem:[#allocation5 + $0x124] sm:$0xf]
        %v798 = vld [vmem:[#allocation5 + $0x128] sm:$0xf]
        %v799 = vld [vmem:[#allocation5 + $0x12c] sm:$0xf]
        %v800 = vld [vmem:[#allocation5 + $0x130] sm:$0xf]
        %v801 = vld [vmem:[#allocation5 + $0x134] sm:$0xf]
        %v802 = vld [vmem:[#allocation5 + $0x138] sm:$0xf]
        %v803 = vld [vmem:[#allocation5 + $0x13c] sm:$0xf]
        %v804 = vld [vmem:[#allocation5 + $0x140] sm:$0xf]
        %v805 = vld [vmem:[#allocation5 + $0x144] sm:$0xf]
        %v806 = vld [vmem:[#allocation5 + $0x148] sm:$0xf]
        %v807 = vld [vmem:[#allocation5 + $0x14c] sm:$0xf]
        %v808 = vld [vmem:[#allocation5 + $0x150] sm:$0xf]
        %v809 = vld [vmem:[#allocation5 + $0x154] sm:$0xf]
        %v810 = vld [vmem:[#allocation5 + $0x158] sm:$0xf]
        %v811 = vld [vmem:[#allocation5 + $0x15c] sm:$0xf]
        %v812 = vld [vmem:[#allocation5 + $0x160] sm:$0xf]
        %v813 = vld [vmem:[#allocation5 + $0x164] sm:$0xf]
        %v814 = vld [vmem:[#allocation5 + $0x168] sm:$0xf]
        %v815 = vld [vmem:[#allocation5 + $0x16c] sm:$0xf]
        %v816 = vld [vmem:[#allocation5 + $0x170] sm:$0xf]
        %v817 = vld [vmem:[#allocation5 + $0x174] sm:$0xf]
        %v818 = vld [vmem:[#allocation5 + $0x178] sm:$0xf]
        %v819 = vld [vmem:[#allocation5 + $0x17c] sm:$0xf]
        %v820 = vld [vmem:[#allocation5 + $0x180] sm:$0xf]
        %v821 = vld [vmem:[#allocation5 + $0x184] sm:$0xf]
        %v822 = vld [vmem:[#allocation5 + $0x188] sm:$0xf]
        %v823 = vld [vmem:[#allocation5 + $0x18c] sm:$0xf]
        %v824 = vld [vmem:[#allocation5 + $0x190] sm:$0xf]
        %v825 = vld [vmem:[#allocation5 + $0x194] sm:$0xf]
        %v826 = vld [vmem:[#allocation5 + $0x198] sm:$0xf]
        %v827 = vld [vmem:[#allocation5 + $0x19c] sm:$0xf]
        %v828 = vld [vmem:[#allocation5 + $0x1a0] sm:$0xf]
        %v829 = vld [vmem:[#allocation5 + $0x1a4] sm:$0xf]
        %v830 = vld [vmem:[#allocation5 + $0x1a8] sm:$0xf]
        %v831 = vld [vmem:[#allocation5 + $0x1ac] sm:$0xf]
        %v832 = vld [vmem:[#allocation5 + $0x1b0] sm:$0xf]
        %v833 = vld [vmem:[#allocation5 + $0x1b4] sm:$0xf]
        %v834 = vld [vmem:[#allocation5 + $0x1b8] sm:$0xf]
        %v835 = vld [vmem:[#allocation5 + $0x1bc] sm:$0xf]
        %v836 = vld [vmem:[#allocation5 + $0x1c0] sm:$0xf]
        %v837 = vld [vmem:[#allocation5 + $0x1c4] sm:$0xf]
        %v838 = vld [vmem:[#allocation5 + $0x1c8] sm:$0xf]
        %v839 = vld [vmem:[#allocation5 + $0x1cc] sm:$0xf]
        %v840 = vld [vmem:[#allocation5 + $0x1d0] sm:$0xf]
        %v841 = vld [vmem:[#allocation5 + $0x1d4] sm:$0xf]
        %v842 = vld [vmem:[#allocation5 + $0x1d8] sm:$0xf]
        %v843 = vld [vmem:[#allocation5 + $0x1dc] sm:$0xf]
        %v844 = vld [vmem:[#allocation5 + $0x1e0] sm:$0xf]
        %v845 = vld [vmem:[#allocation5 + $0x1e4] sm:$0xf]
        %v846 = vld [vmem:[#allocation5 + $0x1e8] sm:$0xf]
        %v847 = vld [vmem:[#allocation5 + $0x1ec] sm:$0xf]
        %v848 = vld [vmem:[#allocation5 + $0x1f0] sm:$0xf]
        %v849 = vld [vmem:[#allocation5 + $0x1f4] sm:$0xf]
        %v850 = vld [vmem:[#allocation5 + $0x1f8] sm:$0xf]
        %v851 = vld [vmem:[#allocation5 + $0x1fc] sm:$0xf]
        %v1108 = vunpack.c.l.b16 %v468
        %v1109 = vunpack.c.h.b16 %v468
        %v1110 = vunpack.c.l.b16 %v469
        %v1111 = vunpack.c.h.b16 %v469
        %v1112 = vunpack.c.l.b16 %v470
        %v1113 = vunpack.c.h.b16 %v470
        %v1114 = vunpack.c.l.b16 %v471
        %v1115 = vunpack.c.h.b16 %v471
        %v1116 = vunpack.c.l.b16 %v472
        %v1117 = vunpack.c.h.b16 %v472
        %v1118 = vunpack.c.l.b16 %v473
        %v1119 = vunpack.c.h.b16 %v473
        %v1120 = vunpack.c.l.b16 %v474
        %v1121 = vunpack.c.h.b16 %v474
        %v1122 = vunpack.c.l.b16 %v475
        %v1123 = vunpack.c.h.b16 %v475
        %v1124 = vunpack.c.l.b16 %v476
        %v1125 = vunpack.c.h.b16 %v476
        %v1126 = vunpack.c.l.b16 %v477
        %v1127 = vunpack.c.h.b16 %v477
        %v1128 = vunpack.c.l.b16 %v478
        %v1129 = vunpack.c.h.b16 %v478
        %v1130 = vunpack.c.l.b16 %v479
        %v1131 = vunpack.c.h.b16 %v479
        %v1132 = vunpack.c.l.b16 %v480
        %v1133 = vunpack.c.h.b16 %v480
        %v1134 = vunpack.c.l.b16 %v481
        %v1135 = vunpack.c.h.b16 %v481
        %v1136 = vunpack.c.l.b16 %v482
        %v1137 = vunpack.c.h.b16 %v482
        %v1138 = vunpack.c.l.b16 %v483
        %v1139 = vunpack.c.h.b16 %v483
        %v1140 = vunpack.c.l.b16 %v484
        %v1141 = vunpack.c.h.b16 %v484
        %v1142 = vunpack.c.l.b16 %v485
        %v1143 = vunpack.c.h.b16 %v485
        %v1144 = vunpack.c.l.b16 %v486
        %v1145 = vunpack.c.h.b16 %v486
        %v1146 = vunpack.c.l.b16 %v487
        %v1147 = vunpack.c.h.b16 %v487
        %v1148 = vunpack.c.l.b16 %v488
        %v1149 = vunpack.c.h.b16 %v488
        %v1150 = vunpack.c.l.b16 %v489
        %v1151 = vunpack.c.h.b16 %v489
        %v1152 = vunpack.c.l.b16 %v490
        %v1153 = vunpack.c.h.b16 %v490
        %v1154 = vunpack.c.l.b16 %v491
        %v1155 = vunpack.c.h.b16 %v491
        %v1156 = vunpack.c.l.b16 %v492
        %v1157 = vunpack.c.h.b16 %v492
        %v1158 = vunpack.c.l.b16 %v493
        %v1159 = vunpack.c.h.b16 %v493
        %v1160 = vunpack.c.l.b16 %v494
        %v1161 = vunpack.c.h.b16 %v494
        %v1162 = vunpack.c.l.b16 %v495
        %v1163 = vunpack.c.h.b16 %v495
        %v1164 = vunpack.c.l.b16 %v496
        %v1165 = vunpack.c.h.b16 %v496
        %v1166 = vunpack.c.l.b16 %v497
        %v1167 = vunpack.c.h.b16 %v497
        %v1168 = vunpack.c.l.b16 %v498
        %v1169 = vunpack.c.h.b16 %v498
        %v1170 = vunpack.c.l.b16 %v499
        %v1171 = vunpack.c.h.b16 %v499
        %v1172 = vunpack.c.l.b16 %v500
        %v1173 = vunpack.c.h.b16 %v500
        %v1174 = vunpack.c.l.b16 %v501
        %v1175 = vunpack.c.h.b16 %v501
        %v1176 = vunpack.c.l.b16 %v502
        %v1177 = vunpack.c.h.b16 %v502
        %v1178 = vunpack.c.l.b16 %v503
        %v1179 = vunpack.c.h.b16 %v503
        %v1180 = vunpack.c.l.b16 %v504
        %v1181 = vunpack.c.h.b16 %v504
        %v1182 = vunpack.c.l.b16 %v505
        %v1183 = vunpack.c.h.b16 %v505
        %v1184 = vunpack.c.l.b16 %v506
        %v1185 = vunpack.c.h.b16 %v506
        %v1186 = vunpack.c.l.b16 %v507
        %v1187 = vunpack.c.h.b16 %v507
        %v1188 = vunpack.c.l.b16 %v508
        %v1189 = vunpack.c.h.b16 %v508
        %v1190 = vunpack.c.l.b16 %v509
        %v1191 = vunpack.c.h.b16 %v509
        %v1192 = vunpack.c.l.b16 %v510
        %v1193 = vunpack.c.h.b16 %v510
        %v1194 = vunpack.c.l.b16 %v511
        %v1195 = vunpack.c.h.b16 %v511
        %v1196 = vunpack.c.l.b16 %v512
        %v1197 = vunpack.c.h.b16 %v512
        %v1198 = vunpack.c.l.b16 %v513
        %v1199 = vunpack.c.h.b16 %v513
        %v1200 = vunpack.c.l.b16 %v514
        %v1201 = vunpack.c.h.b16 %v514
        %v1202 = vunpack.c.l.b16 %v515
        %v1203 = vunpack.c.h.b16 %v515
        %v1204 = vunpack.c.l.b16 %v516
        %v1205 = vunpack.c.h.b16 %v516
        %v1206 = vunpack.c.l.b16 %v517
        %v1207 = vunpack.c.h.b16 %v517
        %v1208 = vunpack.c.l.b16 %v518
        %v1209 = vunpack.c.h.b16 %v518
        %v1210 = vunpack.c.l.b16 %v519
        %v1211 = vunpack.c.h.b16 %v519
        %v1212 = vunpack.c.l.b16 %v520
        %v1213 = vunpack.c.h.b16 %v520
        %v1214 = vunpack.c.l.b16 %v521
        %v1215 = vunpack.c.h.b16 %v521
        %v1216 = vunpack.c.l.b16 %v522
        %v1217 = vunpack.c.h.b16 %v522
        %v1218 = vunpack.c.l.b16 %v523
        %v1219 = vunpack.c.h.b16 %v523
        %v1220 = vunpack.c.l.b16 %v524
        %v1221 = vunpack.c.h.b16 %v524
        %v1222 = vunpack.c.l.b16 %v525
        %v1223 = vunpack.c.h.b16 %v525
        %v1224 = vunpack.c.l.b16 %v526
        %v1225 = vunpack.c.h.b16 %v526
        %v1226 = vunpack.c.l.b16 %v527
        %v1227 = vunpack.c.h.b16 %v527
        %v1228 = vunpack.c.l.b16 %v528
        %v1229 = vunpack.c.h.b16 %v528
        %v1230 = vunpack.c.l.b16 %v529
        %v1231 = vunpack.c.h.b16 %v529
        %v1232 = vunpack.c.l.b16 %v530
        %v1233 = vunpack.c.h.b16 %v530
        %v1234 = vunpack.c.l.b16 %v531
        %v1235 = vunpack.c.h.b16 %v531
        %v1236 = vunpack.c.l.b16 %v532
        %v1237 = vunpack.c.h.b16 %v532
        %v1238 = vunpack.c.l.b16 %v533
        %v1239 = vunpack.c.h.b16 %v533
        %v1240 = vunpack.c.l.b16 %v534
        %v1241 = vunpack.c.h.b16 %v534
        %v1242 = vunpack.c.l.b16 %v535
        %v1243 = vunpack.c.h.b16 %v535
        %v1244 = vunpack.c.l.b16 %v536
        %v1245 = vunpack.c.h.b16 %v536
        %v1246 = vunpack.c.l.b16 %v537
        %v1247 = vunpack.c.h.b16 %v537
        %v1248 = vunpack.c.l.b16 %v538
        %v1249 = vunpack.c.h.b16 %v538
        %v1250 = vunpack.c.l.b16 %v539
        %v1251 = vunpack.c.h.b16 %v539
        %v1252 = vunpack.c.l.b16 %v540
        %v1253 = vunpack.c.h.b16 %v540
        %v1254 = vunpack.c.l.b16 %v541
        %v1255 = vunpack.c.h.b16 %v541
        %v1256 = vunpack.c.l.b16 %v542
        %v1257 = vunpack.c.h.b16 %v542
        %v1258 = vunpack.c.l.b16 %v543
        %v1259 = vunpack.c.h.b16 %v543
        %v1260 = vunpack.c.l.b16 %v544
        %v1261 = vunpack.c.h.b16 %v544
        %v1262 = vunpack.c.l.b16 %v545
        %v1263 = vunpack.c.h.b16 %v545
        %v1264 = vunpack.c.l.b16 %v546
        %v1265 = vunpack.c.h.b16 %v546
        %v1266 = vunpack.c.l.b16 %v547
        %v1267 = vunpack.c.h.b16 %v547
        %v1268 = vunpack.c.l.b16 %v548
        %v1269 = vunpack.c.h.b16 %v548
        %v1270 = vunpack.c.l.b16 %v549
        %v1271 = vunpack.c.h.b16 %v549
        %v1272 = vunpack.c.l.b16 %v550
        %v1273 = vunpack.c.h.b16 %v550
        %v1274 = vunpack.c.l.b16 %v551
        %v1275 = vunpack.c.h.b16 %v551
        %v1276 = vunpack.c.l.b16 %v552
        %v1277 = vunpack.c.h.b16 %v552
        %v1278 = vunpack.c.l.b16 %v553
        %v1279 = vunpack.c.h.b16 %v553
        %v1280 = vunpack.c.l.b16 %v554
        %v1281 = vunpack.c.h.b16 %v554
        %v1282 = vunpack.c.l.b16 %v555
        %v1283 = vunpack.c.h.b16 %v555
        %v1284 = vunpack.c.l.b16 %v556
        %v1285 = vunpack.c.h.b16 %v556
        %v1286 = vunpack.c.l.b16 %v557
        %v1287 = vunpack.c.h.b16 %v557
        %v1288 = vunpack.c.l.b16 %v558
        %v1289 = vunpack.c.h.b16 %v558
        %v1290 = vunpack.c.l.b16 %v559
        %v1291 = vunpack.c.h.b16 %v559
        %v1292 = vunpack.c.l.b16 %v560
        %v1293 = vunpack.c.h.b16 %v560
        %v1294 = vunpack.c.l.b16 %v561
        %v1295 = vunpack.c.h.b16 %v561
        %v1296 = vunpack.c.l.b16 %v562
        %v1297 = vunpack.c.h.b16 %v562
        %v1298 = vunpack.c.l.b16 %v563
        %v1299 = vunpack.c.h.b16 %v563
        %v1300 = vunpack.c.l.b16 %v564
        %v1301 = vunpack.c.h.b16 %v564
        %v1302 = vunpack.c.l.b16 %v565
        %v1303 = vunpack.c.h.b16 %v565
        %v1304 = vunpack.c.l.b16 %v566
        %v1305 = vunpack.c.h.b16 %v566
        %v1306 = vunpack.c.l.b16 %v567
        %v1307 = vunpack.c.h.b16 %v567
        %v1308 = vunpack.c.l.b16 %v568
        %v1309 = vunpack.c.h.b16 %v568
        %v1310 = vunpack.c.l.b16 %v569
        %v1311 = vunpack.c.h.b16 %v569
        %v1312 = vunpack.c.l.b16 %v570
        %v1313 = vunpack.c.h.b16 %v570
        %v1314 = vunpack.c.l.b16 %v571
        %v1315 = vunpack.c.h.b16 %v571
        %v1316 = vunpack.c.l.b16 %v572
        %v1317 = vunpack.c.h.b16 %v572
        %v1318 = vunpack.c.l.b16 %v573
        %v1319 = vunpack.c.h.b16 %v573
        %v1320 = vunpack.c.l.b16 %v574
        %v1321 = vunpack.c.h.b16 %v574
        %v1322 = vunpack.c.l.b16 %v575
        %v1323 = vunpack.c.h.b16 %v575
        %v1324 = vunpack.c.l.b16 %v576
        %v1325 = vunpack.c.h.b16 %v576
        %v1326 = vunpack.c.l.b16 %v577
        %v1327 = vunpack.c.h.b16 %v577
        %v1328 = vunpack.c.l.b16 %v578
        %v1329 = vunpack.c.h.b16 %v578
        %v1330 = vunpack.c.l.b16 %v579
        %v1331 = vunpack.c.h.b16 %v579
        %v1332 = vunpack.c.l.b16 %v580
        %v1333 = vunpack.c.h.b16 %v580
        %v1334 = vunpack.c.l.b16 %v581
        %v1335 = vunpack.c.h.b16 %v581
        %v1336 = vunpack.c.l.b16 %v582
        %v1337 = vunpack.c.h.b16 %v582
        %v1338 = vunpack.c.l.b16 %v583
        %v1339 = vunpack.c.h.b16 %v583
        %v1340 = vunpack.c.l.b16 %v584
        %v1341 = vunpack.c.h.b16 %v584
        %v1342 = vunpack.c.l.b16 %v585
        %v1343 = vunpack.c.h.b16 %v585
        %v1344 = vunpack.c.l.b16 %v586
        %v1345 = vunpack.c.h.b16 %v586
        %v1346 = vunpack.c.l.b16 %v587
        %v1347 = vunpack.c.h.b16 %v587
        %v1348 = vunpack.c.l.b16 %v588
        %v1349 = vunpack.c.h.b16 %v588
        %v1350 = vunpack.c.l.b16 %v589
        %v1351 = vunpack.c.h.b16 %v589
        %v1352 = vunpack.c.l.b16 %v590
        %v1353 = vunpack.c.h.b16 %v590
        %v1354 = vunpack.c.l.b16 %v591
        %v1355 = vunpack.c.h.b16 %v591
        %v1356 = vunpack.c.l.b16 %v592
        %v1357 = vunpack.c.h.b16 %v592
        %v1358 = vunpack.c.l.b16 %v593
        %v1359 = vunpack.c.h.b16 %v593
        %v1360 = vunpack.c.l.b16 %v594
        %v1361 = vunpack.c.h.b16 %v594
        %v1362 = vunpack.c.l.b16 %v595
        %v1363 = vunpack.c.h.b16 %v595
        %v1364 = vunpack.c.l.b16 %v596
        %v1365 = vunpack.c.h.b16 %v596
        %v1366 = vunpack.c.l.b16 %v597
        %v1367 = vunpack.c.h.b16 %v597
        %v1368 = vunpack.c.l.b16 %v598
        %v1369 = vunpack.c.h.b16 %v598
        %v1370 = vunpack.c.l.b16 %v599
        %v1371 = vunpack.c.h.b16 %v599
        %v1372 = vunpack.c.l.b16 %v600
        %v1373 = vunpack.c.h.b16 %v600
        %v1374 = vunpack.c.l.b16 %v601
        %v1375 = vunpack.c.h.b16 %v601
        %v1376 = vunpack.c.l.b16 %v602
        %v1377 = vunpack.c.h.b16 %v602
        %v1378 = vunpack.c.l.b16 %v603
        %v1379 = vunpack.c.h.b16 %v603
        %v1380 = vunpack.c.l.b16 %v604
        %v1381 = vunpack.c.h.b16 %v604
        %v1382 = vunpack.c.l.b16 %v605
        %v1383 = vunpack.c.h.b16 %v605
        %v1384 = vunpack.c.l.b16 %v606
        %v1385 = vunpack.c.h.b16 %v606
        %v1386 = vunpack.c.l.b16 %v607
        %v1387 = vunpack.c.h.b16 %v607
        %v1388 = vunpack.c.l.b16 %v608
        %v1389 = vunpack.c.h.b16 %v608
        %v1390 = vunpack.c.l.b16 %v609
        %v1391 = vunpack.c.h.b16 %v609
        %v1392 = vunpack.c.l.b16 %v610
        %v1393 = vunpack.c.h.b16 %v610
        %v1394 = vunpack.c.l.b16 %v611
        %v1395 = vunpack.c.h.b16 %v611
        %v1396 = vunpack.c.l.b16 %v612
        %v1397 = vunpack.c.h.b16 %v612
        %v1398 = vunpack.c.l.b16 %v613
        %v1399 = vunpack.c.h.b16 %v613
        %v1400 = vunpack.c.l.b16 %v614
        %v1401 = vunpack.c.h.b16 %v614
        %v1402 = vunpack.c.l.b16 %v615
        %v1403 = vunpack.c.h.b16 %v615
        %v1404 = vunpack.c.l.b16 %v616
        %v1405 = vunpack.c.h.b16 %v616
        %v1406 = vunpack.c.l.b16 %v617
        %v1407 = vunpack.c.h.b16 %v617
        %v1408 = vunpack.c.l.b16 %v618
        %v1409 = vunpack.c.h.b16 %v618
        %v1410 = vunpack.c.l.b16 %v619
        %v1411 = vunpack.c.h.b16 %v619
        %v1412 = vunpack.c.l.b16 %v620
        %v1413 = vunpack.c.h.b16 %v620
        %v1414 = vunpack.c.l.b16 %v621
        %v1415 = vunpack.c.h.b16 %v621
        %v1416 = vunpack.c.l.b16 %v622
        %v1417 = vunpack.c.h.b16 %v622
        %v1418 = vunpack.c.l.b16 %v623
        %v1419 = vunpack.c.h.b16 %v623
        %v1420 = vunpack.c.l.b16 %v624
        %v1421 = vunpack.c.h.b16 %v624
        %v1422 = vunpack.c.l.b16 %v625
        %v1423 = vunpack.c.h.b16 %v625
        %v1424 = vunpack.c.l.b16 %v626
        %v1425 = vunpack.c.h.b16 %v626
        %v1426 = vunpack.c.l.b16 %v627
        %v1427 = vunpack.c.h.b16 %v627
        %v1428 = vunpack.c.l.b16 %v628
        %v1429 = vunpack.c.h.b16 %v628
        %v1430 = vunpack.c.l.b16 %v629
        %v1431 = vunpack.c.h.b16 %v629
        %v1432 = vunpack.c.l.b16 %v630
        %v1433 = vunpack.c.h.b16 %v630
        %v1434 = vunpack.c.l.b16 %v631
        %v1435 = vunpack.c.h.b16 %v631
        %v1436 = vunpack.c.l.b16 %v632
        %v1437 = vunpack.c.h.b16 %v632
        %v1438 = vunpack.c.l.b16 %v633
        %v1439 = vunpack.c.h.b16 %v633
        %v1440 = vunpack.c.l.b16 %v634
        %v1441 = vunpack.c.h.b16 %v634
        %v1442 = vunpack.c.l.b16 %v635
        %v1443 = vunpack.c.h.b16 %v635
        %v1444 = vunpack.c.l.b16 %v636
        %v1445 = vunpack.c.h.b16 %v636
        %v1446 = vunpack.c.l.b16 %v637
        %v1447 = vunpack.c.h.b16 %v637
        %v1448 = vunpack.c.l.b16 %v638
        %v1449 = vunpack.c.h.b16 %v638
        %v1450 = vunpack.c.l.b16 %v639
        %v1451 = vunpack.c.h.b16 %v639
        %v1452 = vunpack.c.l.b16 %v640
        %v1453 = vunpack.c.h.b16 %v640
        %v1454 = vunpack.c.l.b16 %v641
        %v1455 = vunpack.c.h.b16 %v641
        %v1456 = vunpack.c.l.b16 %v642
        %v1457 = vunpack.c.h.b16 %v642
        %v1458 = vunpack.c.l.b16 %v643
        %v1459 = vunpack.c.h.b16 %v643
        %v1460 = vunpack.c.l.b16 %v644
        %v1461 = vunpack.c.h.b16 %v644
        %v1462 = vunpack.c.l.b16 %v645
        %v1463 = vunpack.c.h.b16 %v645
        %v1464 = vunpack.c.l.b16 %v646
        %v1465 = vunpack.c.h.b16 %v646
        %v1466 = vunpack.c.l.b16 %v647
        %v1467 = vunpack.c.h.b16 %v647
        %v1468 = vunpack.c.l.b16 %v648
        %v1469 = vunpack.c.h.b16 %v648
        %v1470 = vunpack.c.l.b16 %v649
        %v1471 = vunpack.c.h.b16 %v649
        %v1472 = vunpack.c.l.b16 %v650
        %v1473 = vunpack.c.h.b16 %v650
        %v1474 = vunpack.c.l.b16 %v651
        %v1475 = vunpack.c.h.b16 %v651
        %v1476 = vunpack.c.l.b16 %v652
        %v1477 = vunpack.c.h.b16 %v652
        %v1478 = vunpack.c.l.b16 %v653
        %v1479 = vunpack.c.h.b16 %v653
        %v1480 = vunpack.c.l.b16 %v654
        %v1481 = vunpack.c.h.b16 %v654
        %v1482 = vunpack.c.l.b16 %v655
        %v1483 = vunpack.c.h.b16 %v655
        %v1484 = vunpack.c.l.b16 %v656
        %v1485 = vunpack.c.h.b16 %v656
        %v1486 = vunpack.c.l.b16 %v657
        %v1487 = vunpack.c.h.b16 %v657
        %v1488 = vunpack.c.l.b16 %v658
        %v1489 = vunpack.c.h.b16 %v658
        %v1490 = vunpack.c.l.b16 %v659
        %v1491 = vunpack.c.h.b16 %v659
        %v1492 = vunpack.c.l.b16 %v660
        %v1493 = vunpack.c.h.b16 %v660
        %v1494 = vunpack.c.l.b16 %v661
        %v1495 = vunpack.c.h.b16 %v661
        %v1496 = vunpack.c.l.b16 %v662
        %v1497 = vunpack.c.h.b16 %v662
        %v1498 = vunpack.c.l.b16 %v663
        %v1499 = vunpack.c.h.b16 %v663
        %v1500 = vunpack.c.l.b16 %v664
        %v1501 = vunpack.c.h.b16 %v664
        %v1502 = vunpack.c.l.b16 %v665
        %v1503 = vunpack.c.h.b16 %v665
        %v1504 = vunpack.c.l.b16 %v666
        %v1505 = vunpack.c.h.b16 %v666
        %v1506 = vunpack.c.l.b16 %v667
        %v1507 = vunpack.c.h.b16 %v667
        %v1508 = vunpack.c.l.b16 %v668
        %v1509 = vunpack.c.h.b16 %v668
        %v1510 = vunpack.c.l.b16 %v669
        %v1511 = vunpack.c.h.b16 %v669
        %v1512 = vunpack.c.l.b16 %v670
        %v1513 = vunpack.c.h.b16 %v670
        %v1514 = vunpack.c.l.b16 %v671
        %v1515 = vunpack.c.h.b16 %v671
        %v1516 = vunpack.c.l.b16 %v672
        %v1517 = vunpack.c.h.b16 %v672
        %v1518 = vunpack.c.l.b16 %v673
        %v1519 = vunpack.c.h.b16 %v673
        %v1520 = vunpack.c.l.b16 %v674
        %v1521 = vunpack.c.h.b16 %v674
        %v1522 = vunpack.c.l.b16 %v675
        %v1523 = vunpack.c.h.b16 %v675
        %v1524 = vunpack.c.l.b16 %v676
        %v1525 = vunpack.c.h.b16 %v676
        %v1526 = vunpack.c.l.b16 %v677
        %v1527 = vunpack.c.h.b16 %v677
        %v1528 = vunpack.c.l.b16 %v678
        %v1529 = vunpack.c.h.b16 %v678
        %v1530 = vunpack.c.l.b16 %v679
        %v1531 = vunpack.c.h.b16 %v679
        %v1532 = vunpack.c.l.b16 %v680
        %v1533 = vunpack.c.h.b16 %v680
        %v1534 = vunpack.c.l.b16 %v681
        %v1535 = vunpack.c.h.b16 %v681
        %v1536 = vunpack.c.l.b16 %v682
        %v1537 = vunpack.c.h.b16 %v682
        %v1538 = vunpack.c.l.b16 %v683
        %v1539 = vunpack.c.h.b16 %v683
        %v1540 = vunpack.c.l.b16 %v684
        %v1541 = vunpack.c.h.b16 %v684
        %v1542 = vunpack.c.l.b16 %v685
        %v1543 = vunpack.c.h.b16 %v685
        %v1544 = vunpack.c.l.b16 %v686
        %v1545 = vunpack.c.h.b16 %v686
        %v1546 = vunpack.c.l.b16 %v687
        %v1547 = vunpack.c.h.b16 %v687
        %v1548 = vunpack.c.l.b16 %v688
        %v1549 = vunpack.c.h.b16 %v688
        %v1550 = vunpack.c.l.b16 %v689
        %v1551 = vunpack.c.h.b16 %v689
        %v1552 = vunpack.c.l.b16 %v690
        %v1553 = vunpack.c.h.b16 %v690
        %v1554 = vunpack.c.l.b16 %v691
        %v1555 = vunpack.c.h.b16 %v691
        %v1556 = vunpack.c.l.b16 %v692
        %v1557 = vunpack.c.h.b16 %v692
        %v1558 = vunpack.c.l.b16 %v693
        %v1559 = vunpack.c.h.b16 %v693
        %v1560 = vunpack.c.l.b16 %v694
        %v1561 = vunpack.c.h.b16 %v694
        %v1562 = vunpack.c.l.b16 %v695
        %v1563 = vunpack.c.h.b16 %v695
        %v1564 = vunpack.c.l.b16 %v696
        %v1565 = vunpack.c.h.b16 %v696
        %v1566 = vunpack.c.l.b16 %v697
        %v1567 = vunpack.c.h.b16 %v697
        %v1568 = vunpack.c.l.b16 %v698
        %v1569 = vunpack.c.h.b16 %v698
        %v1570 = vunpack.c.l.b16 %v699
        %v1571 = vunpack.c.h.b16 %v699
        %v1572 = vunpack.c.l.b16 %v700
        %v1573 = vunpack.c.h.b16 %v700
        %v1574 = vunpack.c.l.b16 %v701
        %v1575 = vunpack.c.h.b16 %v701
        %v1576 = vunpack.c.l.b16 %v702
        %v1577 = vunpack.c.h.b16 %v702
        %v1578 = vunpack.c.l.b16 %v703
        %v1579 = vunpack.c.h.b16 %v703
        %v1580 = vunpack.c.l.b16 %v704
        %v1581 = vunpack.c.h.b16 %v704
        %v1582 = vunpack.c.l.b16 %v705
        %v1583 = vunpack.c.h.b16 %v705
        %v1584 = vunpack.c.l.b16 %v706
        %v1585 = vunpack.c.h.b16 %v706
        %v1586 = vunpack.c.l.b16 %v707
        %v1587 = vunpack.c.h.b16 %v707
        %v1588 = vunpack.c.l.b16 %v708
        %v1589 = vunpack.c.h.b16 %v708
        %v1590 = vunpack.c.l.b16 %v709
        %v1591 = vunpack.c.h.b16 %v709
        %v1592 = vunpack.c.l.b16 %v710
        %v1593 = vunpack.c.h.b16 %v710
        %v1594 = vunpack.c.l.b16 %v711
        %v1595 = vunpack.c.h.b16 %v711
        %v1596 = vunpack.c.l.b16 %v712
        %v1597 = vunpack.c.h.b16 %v712
        %v1598 = vunpack.c.l.b16 %v713
        %v1599 = vunpack.c.h.b16 %v713
        %v1600 = vunpack.c.l.b16 %v714
        %v1601 = vunpack.c.h.b16 %v714
        %v1602 = vunpack.c.l.b16 %v715
        %v1603 = vunpack.c.h.b16 %v715
        %v1604 = vunpack.c.l.b16 %v716
        %v1605 = vunpack.c.h.b16 %v716
        %v1606 = vunpack.c.l.b16 %v717
        %v1607 = vunpack.c.h.b16 %v717
        %v1608 = vunpack.c.l.b16 %v718
        %v1609 = vunpack.c.h.b16 %v718
        %v1610 = vunpack.c.l.b16 %v719
        %v1611 = vunpack.c.h.b16 %v719
        %v1612 = vunpack.c.l.b16 %v720
        %v1613 = vunpack.c.h.b16 %v720
        %v1614 = vunpack.c.l.b16 %v721
        %v1615 = vunpack.c.h.b16 %v721
        %v1616 = vunpack.c.l.b16 %v722
        %v1617 = vunpack.c.h.b16 %v722
        %v1618 = vunpack.c.l.b16 %v723
        %v1619 = vunpack.c.h.b16 %v723
        %v1620 = vpack.c.b16 %v1116, %v1108
        %v1621 = vpack.c.b16 %v1117, %v1109
        %v1622 = vpack.c.b16 %v1118, %v1110
        %v1623 = vpack.c.b16 %v1119, %v1111
        %v1624 = vpack.c.b16 %v1120, %v1112
        %v1625 = vpack.c.b16 %v1121, %v1113
        %v1626 = vpack.c.b16 %v1122, %v1114
        %v1627 = vpack.c.b16 %v1123, %v1115
        %v1628 = vpack.c.b16 %v1132, %v1124
        %v1629 = vpack.c.b16 %v1133, %v1125
        %v1630 = vpack.c.b16 %v1134, %v1126
        %v1631 = vpack.c.b16 %v1135, %v1127
        %v1632 = vpack.c.b16 %v1136, %v1128
        %v1633 = vpack.c.b16 %v1137, %v1129
        %v1634 = vpack.c.b16 %v1138, %v1130
        %v1635 = vpack.c.b16 %v1139, %v1131
        %v1636 = vpack.c.b16 %v1148, %v1140
        %v1637 = vpack.c.b16 %v1149, %v1141
        %v1638 = vpack.c.b16 %v1150, %v1142
        %v1639 = vpack.c.b16 %v1151, %v1143
        %v1640 = vpack.c.b16 %v1152, %v1144
        %v1641 = vpack.c.b16 %v1153, %v1145
        %v1642 = vpack.c.b16 %v1154, %v1146
        %v1643 = vpack.c.b16 %v1155, %v1147
        %v1644 = vpack.c.b16 %v1164, %v1156
        %v1645 = vpack.c.b16 %v1165, %v1157
        %v1646 = vpack.c.b16 %v1166, %v1158
        %v1647 = vpack.c.b16 %v1167, %v1159
        %v1648 = vpack.c.b16 %v1168, %v1160
        %v1649 = vpack.c.b16 %v1169, %v1161
        %v1650 = vpack.c.b16 %v1170, %v1162
        %v1651 = vpack.c.b16 %v1171, %v1163
        %v1652 = vpack.c.b16 %v1180, %v1172
        %v1653 = vpack.c.b16 %v1181, %v1173
        %v1654 = vpack.c.b16 %v1182, %v1174
        %v1655 = vpack.c.b16 %v1183, %v1175
        %v1656 = vpack.c.b16 %v1184, %v1176
        %v1657 = vpack.c.b16 %v1185, %v1177
        %v1658 = vpack.c.b16 %v1186, %v1178
        %v1659 = vpack.c.b16 %v1187, %v1179
        %v1660 = vpack.c.b16 %v1196, %v1188
        %v1661 = vpack.c.b16 %v1197, %v1189
        %v1662 = vpack.c.b16 %v1198, %v1190
        %v1663 = vpack.c.b16 %v1199, %v1191
        %v1664 = vpack.c.b16 %v1200, %v1192
        %v1665 = vpack.c.b16 %v1201, %v1193
        %v1666 = vpack.c.b16 %v1202, %v1194
        %v1667 = vpack.c.b16 %v1203, %v1195
        %v1668 = vpack.c.b16 %v1212, %v1204
        %v1669 = vpack.c.b16 %v1213, %v1205
        %v1670 = vpack.c.b16 %v1214, %v1206
        %v1671 = vpack.c.b16 %v1215, %v1207
        %v1672 = vpack.c.b16 %v1216, %v1208
        %v1673 = vpack.c.b16 %v1217, %v1209
        %v1674 = vpack.c.b16 %v1218, %v1210
        %v1675 = vpack.c.b16 %v1219, %v1211
        %v1676 = vpack.c.b16 %v1228, %v1220
        %v1677 = vpack.c.b16 %v1229, %v1221
        %v1678 = vpack.c.b16 %v1230, %v1222
        %v1679 = vpack.c.b16 %v1231, %v1223
        %v1680 = vpack.c.b16 %v1232, %v1224
        %v1681 = vpack.c.b16 %v1233, %v1225
        %v1682 = vpack.c.b16 %v1234, %v1226
        %v1683 = vpack.c.b16 %v1235, %v1227
        %v1684 = vpack.c.b16 %v1244, %v1236
        %v1685 = vpack.c.b16 %v1245, %v1237
        %v1686 = vpack.c.b16 %v1246, %v1238
        %v1687 = vpack.c.b16 %v1247, %v1239
        %v1688 = vpack.c.b16 %v1248, %v1240
        %v1689 = vpack.c.b16 %v1249, %v1241
        %v1690 = vpack.c.b16 %v1250, %v1242
        %v1691 = vpack.c.b16 %v1251, %v1243
        %v1692 = vpack.c.b16 %v1260, %v1252
        %v1693 = vpack.c.b16 %v1261, %v1253
        %v1694 = vpack.c.b16 %v1262, %v1254
        %v1695 = vpack.c.b16 %v1263, %v1255
        %v1696 = vpack.c.b16 %v1264, %v1256
        %v1697 = vpack.c.b16 %v1265, %v1257
        %v1698 = vpack.c.b16 %v1266, %v1258
        %v1699 = vpack.c.b16 %v1267, %v1259
        %v1700 = vpack.c.b16 %v1276, %v1268
        %v1701 = vpack.c.b16 %v1277, %v1269
        %v1702 = vpack.c.b16 %v1278, %v1270
        %v1703 = vpack.c.b16 %v1279, %v1271
        %v1704 = vpack.c.b16 %v1280, %v1272
        %v1705 = vpack.c.b16 %v1281, %v1273
        %v1706 = vpack.c.b16 %v1282, %v1274
        %v1707 = vpack.c.b16 %v1283, %v1275
        %v1708 = vpack.c.b16 %v1292, %v1284
        %v1709 = vpack.c.b16 %v1293, %v1285
        %v1710 = vpack.c.b16 %v1294, %v1286
        %v1711 = vpack.c.b16 %v1295, %v1287
        %v1712 = vpack.c.b16 %v1296, %v1288
        %v1713 = vpack.c.b16 %v1297, %v1289
        %v1714 = vpack.c.b16 %v1298, %v1290
        %v1715 = vpack.c.b16 %v1299, %v1291
        %v1716 = vpack.c.b16 %v1308, %v1300
        %v1717 = vpack.c.b16 %v1309, %v1301
        %v1718 = vpack.c.b16 %v1310, %v1302
        %v1719 = vpack.c.b16 %v1311, %v1303
        %v1720 = vpack.c.b16 %v1312, %v1304
        %v1721 = vpack.c.b16 %v1313, %v1305
        %v1722 = vpack.c.b16 %v1314, %v1306
        %v1723 = vpack.c.b16 %v1315, %v1307
        %v1724 = vpack.c.b16 %v1324, %v1316
        %v1725 = vpack.c.b16 %v1325, %v1317
        %v1726 = vpack.c.b16 %v1326, %v1318
        %v1727 = vpack.c.b16 %v1327, %v1319
        %v1728 = vpack.c.b16 %v1328, %v1320
        %v1729 = vpack.c.b16 %v1329, %v1321
        %v1730 = vpack.c.b16 %v1330, %v1322
        %v1731 = vpack.c.b16 %v1331, %v1323
        %v1732 = vpack.c.b16 %v1340, %v1332
        %v1733 = vpack.c.b16 %v1341, %v1333
        %v1734 = vpack.c.b16 %v1342, %v1334
        %v1735 = vpack.c.b16 %v1343, %v1335
        %v1736 = vpack.c.b16 %v1344, %v1336
        %v1737 = vpack.c.b16 %v1345, %v1337
        %v1738 = vpack.c.b16 %v1346, %v1338
        %v1739 = vpack.c.b16 %v1347, %v1339
        %v1740 = vpack.c.b16 %v1356, %v1348
        %v1741 = vpack.c.b16 %v1357, %v1349
        %v1742 = vpack.c.b16 %v1358, %v1350
        %v1743 = vpack.c.b16 %v1359, %v1351
        %v1744 = vpack.c.b16 %v1360, %v1352
        %v1745 = vpack.c.b16 %v1361, %v1353
        %v1746 = vpack.c.b16 %v1362, %v1354
        %v1747 = vpack.c.b16 %v1363, %v1355
        %v1748 = vpack.c.b16 %v1372, %v1364
        %v1749 = vpack.c.b16 %v1373, %v1365
        %v1750 = vpack.c.b16 %v1374, %v1366
        %v1751 = vpack.c.b16 %v1375, %v1367
        %v1752 = vpack.c.b16 %v1376, %v1368
        %v1753 = vpack.c.b16 %v1377, %v1369
        %v1754 = vpack.c.b16 %v1378, %v1370
        %v1755 = vpack.c.b16 %v1379, %v1371
        %v1756 = vpack.c.b16 %v1388, %v1380
        %v1757 = vpack.c.b16 %v1389, %v1381
        %v1758 = vpack.c.b16 %v1390, %v1382
        %v1759 = vpack.c.b16 %v1391, %v1383
        %v1760 = vpack.c.b16 %v1392, %v1384
        %v1761 = vpack.c.b16 %v1393, %v1385
        %v1762 = vpack.c.b16 %v1394, %v1386
        %v1763 = vpack.c.b16 %v1395, %v1387
        %v1764 = vpack.c.b16 %v1404, %v1396
        %v1765 = vpack.c.b16 %v1405, %v1397
        %v1766 = vpack.c.b16 %v1406, %v1398
        %v1767 = vpack.c.b16 %v1407, %v1399
        %v1768 = vpack.c.b16 %v1408, %v1400
        %v1769 = vpack.c.b16 %v1409, %v1401
        %v1770 = vpack.c.b16 %v1410, %v1402
        %v1771 = vpack.c.b16 %v1411, %v1403
        %v1772 = vpack.c.b16 %v1420, %v1412
        %v1773 = vpack.c.b16 %v1421, %v1413
        %v1774 = vpack.c.b16 %v1422, %v1414
        %v1775 = vpack.c.b16 %v1423, %v1415
        %v1776 = vpack.c.b16 %v1424, %v1416
        %v1777 = vpack.c.b16 %v1425, %v1417
        %v1778 = vpack.c.b16 %v1426, %v1418
        %v1779 = vpack.c.b16 %v1427, %v1419
        %v1780 = vpack.c.b16 %v1436, %v1428
        %v1781 = vpack.c.b16 %v1437, %v1429
        %v1782 = vpack.c.b16 %v1438, %v1430
        %v1783 = vpack.c.b16 %v1439, %v1431
        %v1784 = vpack.c.b16 %v1440, %v1432
        %v1785 = vpack.c.b16 %v1441, %v1433
        %v1786 = vpack.c.b16 %v1442, %v1434
        %v1787 = vpack.c.b16 %v1443, %v1435
        %v1788 = vpack.c.b16 %v1452, %v1444
        %v1789 = vpack.c.b16 %v1453, %v1445
        %v1790 = vpack.c.b16 %v1454, %v1446
        %v1791 = vpack.c.b16 %v1455, %v1447
        %v1792 = vpack.c.b16 %v1456, %v1448
        %v1793 = vpack.c.b16 %v1457, %v1449
        %v1794 = vpack.c.b16 %v1458, %v1450
        %v1795 = vpack.c.b16 %v1459, %v1451
        %v1796 = vpack.c.b16 %v1468, %v1460
        %v1797 = vpack.c.b16 %v1469, %v1461
        %v1798 = vpack.c.b16 %v1470, %v1462
        %v1799 = vpack.c.b16 %v1471, %v1463
        %v1800 = vpack.c.b16 %v1472, %v1464
        %v1801 = vpack.c.b16 %v1473, %v1465
        %v1802 = vpack.c.b16 %v1474, %v1466
        %v1803 = vpack.c.b16 %v1475, %v1467
        %v1804 = vpack.c.b16 %v1484, %v1476
        %v1805 = vpack.c.b16 %v1485, %v1477
        %v1806 = vpack.c.b16 %v1486, %v1478
        %v1807 = vpack.c.b16 %v1487, %v1479
        %v1808 = vpack.c.b16 %v1488, %v1480
        %v1809 = vpack.c.b16 %v1489, %v1481
        %v1810 = vpack.c.b16 %v1490, %v1482
        %v1811 = vpack.c.b16 %v1491, %v1483
        %v1812 = vpack.c.b16 %v1500, %v1492
        %v1813 = vpack.c.b16 %v1501, %v1493
        %v1814 = vpack.c.b16 %v1502, %v1494
        %v1815 = vpack.c.b16 %v1503, %v1495
        %v1816 = vpack.c.b16 %v1504, %v1496
        %v1817 = vpack.c.b16 %v1505, %v1497
        %v1818 = vpack.c.b16 %v1506, %v1498
        %v1819 = vpack.c.b16 %v1507, %v1499
        %v1820 = vpack.c.b16 %v1516, %v1508
        %v1821 = vpack.c.b16 %v1517, %v1509
        %v1822 = vpack.c.b16 %v1518, %v1510
        %v1823 = vpack.c.b16 %v1519, %v1511
        %v1824 = vpack.c.b16 %v1520, %v1512
        %v1825 = vpack.c.b16 %v1521, %v1513
        %v1826 = vpack.c.b16 %v1522, %v1514
        %v1827 = vpack.c.b16 %v1523, %v1515
        %v1828 = vpack.c.b16 %v1532, %v1524
        %v1829 = vpack.c.b16 %v1533, %v1525
        %v1830 = vpack.c.b16 %v1534, %v1526
        %v1831 = vpack.c.b16 %v1535, %v1527
        %v1832 = vpack.c.b16 %v1536, %v1528
        %v1833 = vpack.c.b16 %v1537, %v1529
        %v1834 = vpack.c.b16 %v1538, %v1530
        %v1835 = vpack.c.b16 %v1539, %v1531
        %v1836 = vpack.c.b16 %v1548, %v1540
        %v1837 = vpack.c.b16 %v1549, %v1541
        %v1838 = vpack.c.b16 %v1550, %v1542
        %v1839 = vpack.c.b16 %v1551, %v1543
        %v1840 = vpack.c.b16 %v1552, %v1544
        %v1841 = vpack.c.b16 %v1553, %v1545
        %v1842 = vpack.c.b16 %v1554, %v1546
        %v1843 = vpack.c.b16 %v1555, %v1547
        %v1844 = vpack.c.b16 %v1564, %v1556
        %v1845 = vpack.c.b16 %v1565, %v1557
        %v1846 = vpack.c.b16 %v1566, %v1558
        %v1847 = vpack.c.b16 %v1567, %v1559
        %v1848 = vpack.c.b16 %v1568, %v1560
        %v1849 = vpack.c.b16 %v1569, %v1561
        %v1850 = vpack.c.b16 %v1570, %v1562
        %v1851 = vpack.c.b16 %v1571, %v1563
        %v1852 = vpack.c.b16 %v1580, %v1572
        %v1853 = vpack.c.b16 %v1581, %v1573
        %v1854 = vpack.c.b16 %v1582, %v1574
        %v1855 = vpack.c.b16 %v1583, %v1575
        %v1856 = vpack.c.b16 %v1584, %v1576
        %v1857 = vpack.c.b16 %v1585, %v1577
        %v1858 = vpack.c.b16 %v1586, %v1578
        %v1859 = vpack.c.b16 %v1587, %v1579
        %v1860 = vpack.c.b16 %v1596, %v1588
        %v1861 = vpack.c.b16 %v1597, %v1589
        %v1862 = vpack.c.b16 %v1598, %v1590
        %v1863 = vpack.c.b16 %v1599, %v1591
        %v1864 = vpack.c.b16 %v1600, %v1592
        %v1865 = vpack.c.b16 %v1601, %v1593
        %v1866 = vpack.c.b16 %v1602, %v1594
        %v1867 = vpack.c.b16 %v1603, %v1595
        %v1868 = vpack.c.b16 %v1612, %v1604
        %v1869 = vpack.c.b16 %v1613, %v1605
        %v1870 = vpack.c.b16 %v1614, %v1606
        %v1871 = vpack.c.b16 %v1615, %v1607
        %v1872 = vpack.c.b16 %v1616, %v1608
        %v1873 = vpack.c.b16 %v1617, %v1609
        %v1874 = vpack.c.b16 %v1618, %v1610
        %v1875 = vpack.c.b16 %v1619, %v1611
        %v2260 = vunpack.c.l.b16 %v724
        %v2261 = vunpack.c.l.b16 %v725
        %v2262 = vunpack.c.l.b16 %v726
        %v2263 = vunpack.c.l.b16 %v727
        %v2264 = vunpack.c.l.b16 %v728
        %v2265 = vunpack.c.l.b16 %v729
        %v2266 = vunpack.c.l.b16 %v730
        %v2267 = vunpack.c.l.b16 %v731
        %v2268 = vunpack.c.l.b16 %v732
        %v2269 = vunpack.c.l.b16 %v733
        %v2270 = vunpack.c.l.b16 %v734
        %v2271 = vunpack.c.l.b16 %v735
        %v2272 = vunpack.c.l.b16 %v736
        %v2273 = vunpack.c.l.b16 %v737
        %v2274 = vunpack.c.l.b16 %v738
        %v2275 = vunpack.c.l.b16 %v739
        %v2276 = vunpack.c.l.b16 %v740
        %v2277 = vunpack.c.l.b16 %v741
        %v2278 = vunpack.c.l.b16 %v742
        %v2279 = vunpack.c.l.b16 %v743
        %v2280 = vunpack.c.l.b16 %v744
        %v2281 = vunpack.c.l.b16 %v745
        %v2282 = vunpack.c.l.b16 %v746
        %v2283 = vunpack.c.l.b16 %v747
        %v2284 = vunpack.c.l.b16 %v748
        %v2285 = vunpack.c.l.b16 %v749
        %v2286 = vunpack.c.l.b16 %v750
        %v2287 = vunpack.c.l.b16 %v751
        %v2288 = vunpack.c.l.b16 %v752
        %v2289 = vunpack.c.l.b16 %v753
        %v2290 = vunpack.c.l.b16 %v754
        %v2291 = vunpack.c.l.b16 %v755
        %v2292 = vunpack.c.l.b16 %v756
        %v2293 = vunpack.c.l.b16 %v757
        %v2294 = vunpack.c.l.b16 %v758
        %v2295 = vunpack.c.l.b16 %v759
        %v2296 = vunpack.c.l.b16 %v760
        %v2297 = vunpack.c.l.b16 %v761
        %v2298 = vunpack.c.l.b16 %v762
        %v2299 = vunpack.c.l.b16 %v763
        %v2300 = vunpack.c.l.b16 %v764
        %v2301 = vunpack.c.l.b16 %v765
        %v2302 = vunpack.c.l.b16 %v766
        %v2303 = vunpack.c.l.b16 %v767
        %v2304 = vunpack.c.l.b16 %v768
        %v2305 = vunpack.c.l.b16 %v769
        %v2306 = vunpack.c.l.b16 %v770
        %v2307 = vunpack.c.l.b16 %v771
        %v2308 = vunpack.c.l.b16 %v772
        %v2309 = vunpack.c.l.b16 %v773
        %v2310 = vunpack.c.l.b16 %v774
        %v2311 = vunpack.c.l.b16 %v775
        %v2312 = vunpack.c.l.b16 %v776
        %v2313 = vunpack.c.l.b16 %v777
        %v2314 = vunpack.c.l.b16 %v778
        %v2315 = vunpack.c.l.b16 %v779
        %v2316 = vunpack.c.l.b16 %v780
        %v2317 = vunpack.c.l.b16 %v781
        %v2318 = vunpack.c.l.b16 %v782
        %v2319 = vunpack.c.l.b16 %v783
        %v2320 = vunpack.c.l.b16 %v784
        %v2321 = vunpack.c.l.b16 %v785
        %v2322 = vunpack.c.l.b16 %v786
        %v2323 = vunpack.c.l.b16 %v787
        %v2324 = vunpack.c.l.b16 %v788
        %v2325 = vunpack.c.l.b16 %v789
        %v2326 = vunpack.c.l.b16 %v790
        %v2327 = vunpack.c.l.b16 %v791
        %v2328 = vunpack.c.l.b16 %v792
        %v2329 = vunpack.c.l.b16 %v793
        %v2330 = vunpack.c.l.b16 %v794
        %v2331 = vunpack.c.l.b16 %v795
        %v2332 = vunpack.c.l.b16 %v796
        %v2333 = vunpack.c.l.b16 %v797
        %v2334 = vunpack.c.l.b16 %v798
        %v2335 = vunpack.c.l.b16 %v799
        %v2336 = vunpack.c.l.b16 %v800
        %v2337 = vunpack.c.l.b16 %v801
        %v2338 = vunpack.c.l.b16 %v802
        %v2339 = vunpack.c.l.b16 %v803
        %v2340 = vunpack.c.l.b16 %v804
        %v2341 = vunpack.c.l.b16 %v805
        %v2342 = vunpack.c.l.b16 %v806
        %v2343 = vunpack.c.l.b16 %v807
        %v2344 = vunpack.c.l.b16 %v808
        %v2345 = vunpack.c.l.b16 %v809
        %v2346 = vunpack.c.l.b16 %v810
        %v2347 = vunpack.c.l.b16 %v811
        %v2348 = vunpack.c.l.b16 %v812
        %v2349 = vunpack.c.l.b16 %v813
        %v2350 = vunpack.c.l.b16 %v814
        %v2351 = vunpack.c.l.b16 %v815
        %v2352 = vunpack.c.l.b16 %v816
        %v2353 = vunpack.c.l.b16 %v817
        %v2354 = vunpack.c.l.b16 %v818
        %v2355 = vunpack.c.l.b16 %v819
        %v2356 = vunpack.c.l.b16 %v820
        %v2357 = vunpack.c.l.b16 %v821
        %v2358 = vunpack.c.l.b16 %v822
        %v2359 = vunpack.c.l.b16 %v823
        %v2360 = vunpack.c.l.b16 %v824
        %v2361 = vunpack.c.l.b16 %v825
        %v2362 = vunpack.c.l.b16 %v826
        %v2363 = vunpack.c.l.b16 %v827
        %v2364 = vunpack.c.l.b16 %v828
        %v2365 = vunpack.c.l.b16 %v829
        %v2366 = vunpack.c.l.b16 %v830
        %v2367 = vunpack.c.l.b16 %v831
        %v2368 = vunpack.c.l.b16 %v832
        %v2369 = vunpack.c.l.b16 %v833
        %v2370 = vunpack.c.l.b16 %v834
        %v2371 = vunpack.c.l.b16 %v835
        %v2372 = vunpack.c.l.b16 %v836
        %v2373 = vunpack.c.l.b16 %v837
        %v2374 = vunpack.c.l.b16 %v838
        %v2375 = vunpack.c.l.b16 %v839
        %v2376 = vunpack.c.l.b16 %v840
        %v2377 = vunpack.c.l.b16 %v841
        %v2378 = vunpack.c.l.b16 %v842
        %v2379 = vunpack.c.l.b16 %v843
        %v2380 = vunpack.c.l.b16 %v844
        %v2381 = vunpack.c.l.b16 %v845
        %v2382 = vunpack.c.l.b16 %v846
        %v2383 = vunpack.c.l.b16 %v847
        %v2384 = vunpack.c.l.b16 %v848
        %v2385 = vunpack.c.l.b16 %v849
        %v2386 = vunpack.c.l.b16 %v850
        %v2387 = vunpack.c.l.b16 %v851
        %v2388 = vpack.c.b16 %v2261, %v2260
        %v2389 = vpack.c.b16 %v2263, %v2262
        %v2390 = vpack.c.b16 %v2265, %v2264
        %v2391 = vpack.c.b16 %v2267, %v2266
        %v2392 = vpack.c.b16 %v2269, %v2268
        %v2393 = vpack.c.b16 %v2271, %v2270
        %v2394 = vpack.c.b16 %v2273, %v2272
        %v2395 = vpack.c.b16 %v2275, %v2274
        %v2396 = vpack.c.b16 %v2277, %v2276
        %v2397 = vpack.c.b16 %v2279, %v2278
        %v2398 = vpack.c.b16 %v2281, %v2280
        %v2399 = vpack.c.b16 %v2283, %v2282
        %v2400 = vpack.c.b16 %v2285, %v2284
        %v2401 = vpack.c.b16 %v2287, %v2286
        %v2402 = vpack.c.b16 %v2289, %v2288
        %v2403 = vpack.c.b16 %v2291, %v2290
        %v2404 = vpack.c.b16 %v2293, %v2292
        %v2405 = vpack.c.b16 %v2295, %v2294
        %v2406 = vpack.c.b16 %v2297, %v2296
        %v2407 = vpack.c.b16 %v2299, %v2298
        %v2408 = vpack.c.b16 %v2301, %v2300
        %v2409 = vpack.c.b16 %v2303, %v2302
        %v2410 = vpack.c.b16 %v2305, %v2304
        %v2411 = vpack.c.b16 %v2307, %v2306
        %v2412 = vpack.c.b16 %v2309, %v2308
        %v2413 = vpack.c.b16 %v2311, %v2310
        %v2414 = vpack.c.b16 %v2313, %v2312
        %v2415 = vpack.c.b16 %v2315, %v2314
        %v2416 = vpack.c.b16 %v2317, %v2316
        %v2417 = vpack.c.b16 %v2319, %v2318
        %v2418 = vpack.c.b16 %v2321, %v2320
        %v2419 = vpack.c.b16 %v2323, %v2322
        %v2420 = vpack.c.b16 %v2325, %v2324
        %v2421 = vpack.c.b16 %v2327, %v2326
        %v2422 = vpack.c.b16 %v2329, %v2328
        %v2423 = vpack.c.b16 %v2331, %v2330
        %v2424 = vpack.c.b16 %v2333, %v2332
        %v2425 = vpack.c.b16 %v2335, %v2334
        %v2426 = vpack.c.b16 %v2337, %v2336
        %v2427 = vpack.c.b16 %v2339, %v2338
        %v2428 = vpack.c.b16 %v2341, %v2340
        %v2429 = vpack.c.b16 %v2343, %v2342
        %v2430 = vpack.c.b16 %v2345, %v2344
        %v2431 = vpack.c.b16 %v2347, %v2346
        %v2432 = vpack.c.b16 %v2349, %v2348
        %v2433 = vpack.c.b16 %v2351, %v2350
        %v2434 = vpack.c.b16 %v2353, %v2352
        %v2435 = vpack.c.b16 %v2355, %v2354
        %v2436 = vpack.c.b16 %v2357, %v2356
        %v2437 = vpack.c.b16 %v2359, %v2358
        %v2438 = vpack.c.b16 %v2361, %v2360
        %v2439 = vpack.c.b16 %v2363, %v2362
        %v2440 = vpack.c.b16 %v2365, %v2364
        %v2441 = vpack.c.b16 %v2367, %v2366
        %v2442 = vpack.c.b16 %v2369, %v2368
        %v2443 = vpack.c.b16 %v2371, %v2370
        %v2444 = vpack.c.b16 %v2373, %v2372
        %v2445 = vpack.c.b16 %v2375, %v2374
        %v2446 = vpack.c.b16 %v2377, %v2376
        %v2447 = vpack.c.b16 %v2379, %v2378
        %v2448 = vpack.c.b16 %v2381, %v2380
        %v2449 = vpack.c.b16 %v2383, %v2382
        %v2450 = vpack.c.b16 %v2385, %v2384
        %v2451 = vpack.c.b16 %v2387, %v2386
        %2516 = vmatprep.subr.bf16.mxu0 0
        %2517 = vmatpush1.bf16.msra.mxu0 %v2388
        %2518 = vmatprep.subr.bf16.mxu0 0
        %2519 = vmatpush1.bf16.msra.mxu0 %v2389
        %2520 = vmatprep.subr.bf16.mxu0 0
        %2521 = vmatpush1.bf16.msra.mxu0 %v2390
        %2522 = vmatprep.subr.bf16.mxu0 0
        %2523 = vmatpush1.bf16.msra.mxu0 %v2391
        %2524 = vmatprep.subr.bf16.mxu0 0
        %2525 = vmatpush1.bf16.msra.mxu0 %v2392
        %2526 = vmatprep.subr.bf16.mxu0 0
        %2527 = vmatpush1.bf16.msra.mxu0 %v2393
        %2528 = vmatprep.subr.bf16.mxu0 0
        %2529 = vmatpush1.bf16.msra.mxu0 %v2394
        %2530 = vmatprep.subr.bf16.mxu0 0
        %2531 = vmatpush1.bf16.msra.mxu0 %v2395
        %2532 = vmatprep.subr.bf16.mxu0 0
        %2533 = vmatpush1.bf16.msra.mxu0 %v2396
        %2534 = vmatprep.subr.bf16.mxu0 0
        %2535 = vmatpush1.bf16.msra.mxu0 %v2397
        %2536 = vmatprep.subr.bf16.mxu0 0
        %2537 = vmatpush1.bf16.msra.mxu0 %v2398
        %2538 = vmatprep.subr.bf16.mxu0 0
        %2539 = vmatpush1.bf16.msra.mxu0 %v2399
        %2540 = vmatprep.subr.bf16.mxu0 0
        %2541 = vmatpush1.bf16.msra.mxu0 %v2400
        %2542 = vmatprep.subr.bf16.mxu0 0
        %2543 = vmatpush1.bf16.msra.mxu0 %v2401
        %2544 = vmatprep.subr.bf16.mxu0 0
        %2545 = vmatpush1.bf16.msra.mxu0 %v2402
        %2546 = vmatprep.subr.bf16.mxu0 0
        %2547 = vmatpush1.bf16.msra.mxu0 %v2403
        %2548 = vmatprep.mubr.bf16.mxu0 %v1621
        %2549 = vmatmul.mubr.bf16.gmra.mrb[0].mxu0 %v1620
        %v2550 = vpop.f32.mrb[0].mxu0
        %v2551 = vadd.f32 0.0, %v2550
        %v2552 = vpop.f32.mrb[0].mxu0
        %v2553 = vpop.f32.mrb[0].mxu0
        %v2554 = vadd.f32 0.0, %v2553
        %v2555 = vpop.f32.mrb[0].mxu0
        %2556 = vmatprep.mubr.bf16.mxu0 %v1629
        %2557 = vmatmul.mubr.bf16.gmra.mrb[0].mxu0 %v1628
        %v2558 = vpop.f32.mrb[0].mxu0
        %v2559 = vadd.f32 0.0, %v2558
        %v2560 = vpop.f32.mrb[0].mxu0
        %v2561 = vpop.f32.mrb[0].mxu0
        %v2562 = vadd.f32 0.0, %v2561
        %v2563 = vpop.f32.mrb[0].mxu0
        %2564 = vmatprep.mubr.bf16.mxu0 %v1637
        %2565 = vmatmul.mubr.bf16.gmra.mrb[0].mxu0 %v1636
        %v2566 = vpop.f32.mrb[0].mxu0
        %v2567 = vadd.f32 0.0, %v2566
        %v2568 = vpop.f32.mrb[0].mxu0
        %v2569 = vpop.f32.mrb[0].mxu0
        %v2570 = vadd.f32 0.0, %v2569
        %v2571 = vpop.f32.mrb[0].mxu0
        %2572 = vmatprep.mubr.bf16.mxu0 %v1645
        %2573 = vmatmul.mubr.bf16.gmra.mrb[0].mxu0 %v1644
        %v2574 = vpop.f32.mrb[0].mxu0
        %v2575 = vadd.f32 0.0, %v2574
        %v2576 = vpop.f32.mrb[0].mxu0
        %v2577 = vpop.f32.mrb[0].mxu0
        %v2578 = vadd.f32 0.0, %v2577
        %v2579 = vpop.f32.mrb[0].mxu0
        %2580 = vmatprep.mubr.bf16.mxu0 %v1653
        %2581 = vmatmul.mubr.bf16.gmra.mrb[0].mxu0 %v1652
        %v2582 = vpop.f32.mrb[0].mxu0
        %v2583 = vadd.f32 0.0, %v2582
        %v2584 = vpop.f32.mrb[0].mxu0
        %v2585 = vpop.f32.mrb[0].mxu0
        %v2586 = vadd.f32 0.0, %v2585
        %v2587 = vpop.f32.mrb[0].mxu0
        %2588 = vmatprep.mubr.bf16.mxu0 %v1661
        %2589 = vmatmul.mubr.bf16.gmra.mrb[0].mxu0 %v1660
        %v2590 = vpop.f32.mrb[0].mxu0
        %v2591 = vadd.f32 0.0, %v2590
        %v2592 = vpop.f32.mrb[0].mxu0
        %v2593 = vpop.f32.mrb[0].mxu0
        %v2594 = vadd.f32 0.0, %v2593
        %v2595 = vpop.f32.mrb[0].mxu0
        %2596 = vmatprep.mubr.bf16.mxu0 %v1669
        %2597 = vmatmul.mubr.bf16.gmra.mrb[0].mxu0 %v1668
        %v2598 = vpop.f32.mrb[0].mxu0
        %v2599 = vadd.f32 0.0, %v2598
        %v2600 = vpop.f32.mrb[0].mxu0
        %v2601 = vpop.f32.mrb[0].mxu0
        %v2602 = vadd.f32 0.0, %v2601
        %v2603 = vpop.f32.mrb[0].mxu0
        %2604 = vmatprep.mubr.bf16.mxu0 %v1677
        %2605 = vmatmul.mubr.bf16.gmra.mrb[0].mxu0 %v1676
        %v2606 = vpop.f32.mrb[0].mxu0
        %v2607 = vadd.f32 0.0, %v2606
        %v2608 = vpop.f32.mrb[0].mxu0
        %v2609 = vpop.f32.mrb[0].mxu0
        %v2610 = vadd.f32 0.0, %v2609
        %v2611 = vpop.f32.mrb[0].mxu0
        %2612 = vmatprep.mubr.bf16.mxu0 %v1685
        %2613 = vmatmul.mubr.bf16.gmra.mrb[0].mxu0 %v1684
        %v2614 = vpop.f32.mrb[0].mxu0
        %v2615 = vadd.f32 0.0, %v2614
        %v2616 = vpop.f32.mrb[0].mxu0
        %v2617 = vpop.f32.mrb[0].mxu0
        %v2618 = vadd.f32 0.0, %v2617
        %v2619 = vpop.f32.mrb[0].mxu0
        %2620 = vmatprep.mubr.bf16.mxu0 %v1693
        %2621 = vmatmul.mubr.bf16.gmra.mrb[0].mxu0 %v1692
        %v2622 = vpop.f32.mrb[0].mxu0
        %v2623 = vadd.f32 0.0, %v2622
        %v2624 = vpop.f32.mrb[0].mxu0
        %v2625 = vpop.f32.mrb[0].mxu0
        %v2626 = vadd.f32 0.0, %v2625
        %v2627 = vpop.f32.mrb[0].mxu0
        %2628 = vmatprep.mubr.bf16.mxu0 %v1701
        %2629 = vmatmul.mubr.bf16.gmra.mrb[0].mxu0 %v1700
        %v2630 = vpop.f32.mrb[0].mxu0
        %v2631 = vadd.f32 0.0, %v2630
        %v2632 = vpop.f32.mrb[0].mxu0
        %v2633 = vpop.f32.mrb[0].mxu0
        %v2634 = vadd.f32 0.0, %v2633
        %v2635 = vpop.f32.mrb[0].mxu0
        %2636 = vmatprep.mubr.bf16.mxu0 %v1709
        %2637 = vmatmul.mubr.bf16.gmra.mrb[0].mxu0 %v1708
        %v2638 = vpop.f32.mrb[0].mxu0
        %v2639 = vadd.f32 0.0, %v2638
        %v2640 = vpop.f32.mrb[0].mxu0
        %v2641 = vpop.f32.mrb[0].mxu0
        %v2642 = vadd.f32 0.0, %v2641
        %v2643 = vpop.f32.mrb[0].mxu0
        %2644 = vmatprep.mubr.bf16.mxu0 %v1717
        %2645 = vmatmul.mubr.bf16.gmra.mrb[0].mxu0 %v1716
        %v2646 = vpop.f32.mrb[0].mxu0
        %v2647 = vadd.f32 0.0, %v2646
        %v2648 = vpop.f32.mrb[0].mxu0
        %v2649 = vpop.f32.mrb[0].mxu0
        %v2650 = vadd.f32 0.0, %v2649
        %v2651 = vpop.f32.mrb[0].mxu0
        %2652 = vmatprep.mubr.bf16.mxu0 %v1725
        %2653 = vmatmul.mubr.bf16.gmra.mrb[0].mxu0 %v1724
        %v2654 = vpop.f32.mrb[0].mxu0
        %v2655 = vadd.f32 0.0, %v2654
        %v2656 = vpop.f32.mrb[0].mxu0
        %v2657 = vpop.f32.mrb[0].mxu0
        %v2658 = vadd.f32 0.0, %v2657
        %v2659 = vpop.f32.mrb[0].mxu0
        %2660 = vmatprep.mubr.bf16.mxu0 %v1733
        %2661 = vmatmul.mubr.bf16.gmra.mrb[0].mxu0 %v1732
        %v2662 = vpop.f32.mrb[0].mxu0
        %v2663 = vadd.f32 0.0, %v2662
        %v2664 = vpop.f32.mrb[0].mxu0
        %v2665 = vpop.f32.mrb[0].mxu0
        %v2666 = vadd.f32 0.0, %v2665
        %v2667 = vpop.f32.mrb[0].mxu0
        %2668 = vmatprep.mubr.bf16.mxu0 %v1741
        %2669 = vmatmul.mubr.bf16.gmra.mrb[0].mxu0 %v1740
        %v2670 = vpop.f32.mrb[0].mxu0
        %v2671 = vadd.f32 0.0, %v2670
        %v2672 = vpop.f32.mrb[0].mxu0
        %v2673 = vpop.f32.mrb[0].mxu0
        %v2674 = vadd.f32 0.0, %v2673
        %v2675 = vpop.f32.mrb[0].mxu0
        %2676 = vmatprep.mubr.bf16.mxu0 %v1749
        %2677 = vmatmul.mubr.bf16.gmra.mrb[0].mxu0 %v1748
        %v2678 = vpop.f32.mrb[0].mxu0
        %v2679 = vadd.f32 0.0, %v2678
        %v2680 = vpop.f32.mrb[0].mxu0
        %v2681 = vpop.f32.mrb[0].mxu0
        %v2682 = vadd.f32 0.0, %v2681
        %v2683 = vpop.f32.mrb[0].mxu0
        %2684 = vmatprep.mubr.bf16.mxu0 %v1757
        %2685 = vmatmul.mubr.bf16.gmra.mrb[0].mxu0 %v1756
        %v2686 = vpop.f32.mrb[0].mxu0
        %v2687 = vadd.f32 0.0, %v2686
        %v2688 = vpop.f32.mrb[0].mxu0
        %v2689 = vpop.f32.mrb[0].mxu0
        %v2690 = vadd.f32 0.0, %v2689
        %v2691 = vpop.f32.mrb[0].mxu0
        %2692 = vmatprep.mubr.bf16.mxu0 %v1765
        %2693 = vmatmul.mubr.bf16.gmra.mrb[0].mxu0 %v1764
        %v2694 = vpop.f32.mrb[0].mxu0
        %v2695 = vadd.f32 0.0, %v2694
        %v2696 = vpop.f32.mrb[0].mxu0
        %v2697 = vpop.f32.mrb[0].mxu0
        %v2698 = vadd.f32 0.0, %v2697
        %v2699 = vpop.f32.mrb[0].mxu0
        %2700 = vmatprep.mubr.bf16.mxu0 %v1773
        %2701 = vmatmul.mubr.bf16.gmra.mrb[0].mxu0 %v1772
        %v2702 = vpop.f32.mrb[0].mxu0
        %v2703 = vadd.f32 0.0, %v2702
        %v2704 = vpop.f32.mrb[0].mxu0
        %v2705 = vpop.f32.mrb[0].mxu0
        %v2706 = vadd.f32 0.0, %v2705
        %v2707 = vpop.f32.mrb[0].mxu0
        %2708 = vmatprep.mubr.bf16.mxu0 %v1781
        %2709 = vmatmul.mubr.bf16.gmra.mrb[0].mxu0 %v1780
        %v2710 = vpop.f32.mrb[0].mxu0
        %v2711 = vadd.f32 0.0, %v2710
        %v2712 = vpop.f32.mrb[0].mxu0
        %v2713 = vpop.f32.mrb[0].mxu0
        %v2714 = vadd.f32 0.0, %v2713
        %v2715 = vpop.f32.mrb[0].mxu0
        %2716 = vmatprep.mubr.bf16.mxu0 %v1789
        %2717 = vmatmul.mubr.bf16.gmra.mrb[0].mxu0 %v1788
        %v2718 = vpop.f32.mrb[0].mxu0
        %v2719 = vadd.f32 0.0, %v2718
        %v2720 = vpop.f32.mrb[0].mxu0
        %v2721 = vpop.f32.mrb[0].mxu0
        %v2722 = vadd.f32 0.0, %v2721
        %v2723 = vpop.f32.mrb[0].mxu0
        %2724 = vmatprep.mubr.bf16.mxu0 %v1797
        %2725 = vmatmul.mubr.bf16.gmra.mrb[0].mxu0 %v1796
        %v2726 = vpop.f32.mrb[0].mxu0
        %v2727 = vadd.f32 0.0, %v2726
        %v2728 = vpop.f32.mrb[0].mxu0
        %v2729 = vpop.f32.mrb[0].mxu0
        %v2730 = vadd.f32 0.0, %v2729
        %v2731 = vpop.f32.mrb[0].mxu0
        %2732 = vmatprep.mubr.bf16.mxu0 %v1805
        %2733 = vmatmul.mubr.bf16.gmra.mrb[0].mxu0 %v1804
        %v2734 = vpop.f32.mrb[0].mxu0
        %v2735 = vadd.f32 0.0, %v2734
        %v2736 = vpop.f32.mrb[0].mxu0
        %v2737 = vpop.f32.mrb[0].mxu0
        %v2738 = vadd.f32 0.0, %v2737
        %v2739 = vpop.f32.mrb[0].mxu0
        %2740 = vmatprep.mubr.bf16.mxu0 %v1813
        %2741 = vmatmul.mubr.bf16.gmra.mrb[0].mxu0 %v1812
        %v2742 = vpop.f32.mrb[0].mxu0
        %v2743 = vadd.f32 0.0, %v2742
        %v2744 = vpop.f32.mrb[0].mxu0
        %v2745 = vpop.f32.mrb[0].mxu0
        %v2746 = vadd.f32 0.0, %v2745
        %v2747 = vpop.f32.mrb[0].mxu0
        %2748 = vmatprep.mubr.bf16.mxu0 %v1821
        %2749 = vmatmul.mubr.bf16.gmra.mrb[0].mxu0 %v1820
        %v2750 = vpop.f32.mrb[0].mxu0
        %v2751 = vadd.f32 0.0, %v2750
        %v2752 = vpop.f32.mrb[0].mxu0
        %v2753 = vpop.f32.mrb[0].mxu0
        %v2754 = vadd.f32 0.0, %v2753
        %v2755 = vpop.f32.mrb[0].mxu0
        %2756 = vmatprep.mubr.bf16.mxu0 %v1829
        %2757 = vmatmul.mubr.bf16.gmra.mrb[0].mxu0 %v1828
        %v2758 = vpop.f32.mrb[0].mxu0
        %v2759 = vadd.f32 0.0, %v2758
        %v2760 = vpop.f32.mrb[0].mxu0
        %v2761 = vpop.f32.mrb[0].mxu0
        %v2762 = vadd.f32 0.0, %v2761
        %v2763 = vpop.f32.mrb[0].mxu0
        %2764 = vmatprep.mubr.bf16.mxu0 %v1837
        %2765 = vmatmul.mubr.bf16.gmra.mrb[0].mxu0 %v1836
        %v2766 = vpop.f32.mrb[0].mxu0
        %v2767 = vadd.f32 0.0, %v2766
        %v2768 = vpop.f32.mrb[0].mxu0
        %v2769 = vpop.f32.mrb[0].mxu0
        %v2770 = vadd.f32 0.0, %v2769
        %v2771 = vpop.f32.mrb[0].mxu0
        %2772 = vmatprep.mubr.bf16.mxu0 %v1845
        %2773 = vmatmul.mubr.bf16.gmra.mrb[0].mxu0 %v1844
        %v2774 = vpop.f32.mrb[0].mxu0
        %v2775 = vadd.f32 0.0, %v2774
        %v2776 = vpop.f32.mrb[0].mxu0
        %v2777 = vpop.f32.mrb[0].mxu0
        %v2778 = vadd.f32 0.0, %v2777
        %v2779 = vpop.f32.mrb[0].mxu0
        %2780 = vmatprep.mubr.bf16.mxu0 %v1853
        %2781 = vmatmul.mubr.bf16.gmra.mrb[0].mxu0 %v1852
        %v2782 = vpop.f32.mrb[0].mxu0
        %v2783 = vadd.f32 0.0, %v2782
        %v2784 = vpop.f32.mrb[0].mxu0
        %v2785 = vpop.f32.mrb[0].mxu0
        %v2786 = vadd.f32 0.0, %v2785
        %v2787 = vpop.f32.mrb[0].mxu0
        %2788 = vmatprep.mubr.bf16.mxu0 %v1861
        %2789 = vmatmul.mubr.bf16.gmra.mrb[0].mxu0 %v1860
        %v2790 = vpop.f32.mrb[0].mxu0
        %v2791 = vadd.f32 0.0, %v2790
        %v2792 = vpop.f32.mrb[0].mxu0
        %v2793 = vpop.f32.mrb[0].mxu0
        %v2794 = vadd.f32 0.0, %v2793
        %v2795 = vpop.f32.mrb[0].mxu0
        %2796 = vmatprep.mubr.bf16.mxu0 %v1869
        %2797 = vmatmul.mubr.bf16.gmra.mrb[0].mxu0 %v1868
        %v2798 = vpop.f32.mrb[0].mxu0
        %v2799 = vadd.f32 0.0, %v2798
        %v2800 = vpop.f32.mrb[0].mxu0
        %v2801 = vpop.f32.mrb[0].mxu0
        %v2802 = vadd.f32 0.0, %v2801
        %v2803 = vpop.f32.mrb[0].mxu0
        %2804 = vdwg.mxu0
        %2805 = vmatprep.subr.bf16.mxu0 0
        %2806 = vmatpush1.bf16.msra.mxu0 %v2404
        %2807 = vmatprep.subr.bf16.mxu0 0
        %2808 = vmatpush1.bf16.msra.mxu0 %v2405
        %2809 = vmatprep.subr.bf16.mxu0 0
        %2810 = vmatpush1.bf16.msra.mxu0 %v2406
        %2811 = vmatprep.subr.bf16.mxu0 0
        %2812 = vmatpush1.bf16.msra.mxu0 %v2407
        %2813 = vmatprep.subr.bf16.mxu0 0
        %2814 = vmatpush1.bf16.msra.mxu0 %v2408
        %2815 = vmatprep.subr.bf16.mxu0 0
        %2816 = vmatpush1.bf16.msra.mxu0 %v2409
        %2817 = vmatprep.subr.bf16.mxu0 0
        %2818 = vmatpush1.bf16.msra.mxu0 %v2410
        %2819 = vmatprep.subr.bf16.mxu0 0
        %2820 = vmatpush1.bf16.msra.mxu0 %v2411
        %2821 = vmatprep.subr.bf16.mxu0 0
        %2822 = vmatpush1.bf16.msra.mxu0 %v2412
        %2823 = vmatprep.subr.bf16.mxu0 0
        %2824 = vmatpush1.bf16.msra.mxu0 %v2413
        %2825 = vmatprep.subr.bf16.mxu0 0
        %2826 = vmatpush1.bf16.msra.mxu0 %v2414
        %2827 = vmatprep.subr.bf16.mxu0 0
        %2828 = vmatpush1.bf16.msra.mxu0 %v2415
        %2829 = vmatprep.subr.bf16.mxu0 0
        %2830 = vmatpush1.bf16.msra.mxu0 %v2416
        %2831 = vmatprep.subr.bf16.mxu0 0
        %2832 = vmatpush1.bf16.msra.mxu0 %v2417
        %2833 = vmatprep.subr.bf16.mxu0 0
        %2834 = vmatpush1.bf16.msra.mxu0 %v2418
        %2835 = vmatprep.subr.bf16.mxu0 0
        %2836 = vmatpush1.bf16.msra.mxu0 %v2419
        %2837 = vmatprep.mubr.bf16.mxu0 %v1623
        %2838 = vmatmul.mubr.bf16.gmra.mrb[0].mxu0 %v1622
        %v2839 = vpop.f32.mrb[0].mxu0
        %v2840 = vadd.f32 %v2551, %v2839
        %v2841 = vpop.f32.mrb[0].mxu0
        %v2842 = vpop.f32.mrb[0].mxu0
        %v2843 = vadd.f32 %v2554, %v2842
        %v2844 = vpop.f32.mrb[0].mxu0
        %2845 = vmatprep.mubr.bf16.mxu0 %v1631
        %2846 = vmatmul.mubr.bf16.gmra.mrb[0].mxu0 %v1630
        %v2847 = vpop.f32.mrb[0].mxu0
        %v2848 = vadd.f32 %v2559, %v2847
        %v2849 = vpop.f32.mrb[0].mxu0
        %v2850 = vpop.f32.mrb[0].mxu0
        %v2851 = vadd.f32 %v2562, %v2850
        %v2852 = vpop.f32.mrb[0].mxu0
        %2853 = vmatprep.mubr.bf16.mxu0 %v1639
        %2854 = vmatmul.mubr.bf16.gmra.mrb[0].mxu0 %v1638
        %v2855 = vpop.f32.mrb[0].mxu0
        %v2856 = vadd.f32 %v2567, %v2855
        %v2857 = vpop.f32.mrb[0].mxu0
        %v2858 = vpop.f32.mrb[0].mxu0
        %v2859 = vadd.f32 %v2570, %v2858
        %v2860 = vpop.f32.mrb[0].mxu0
        %2861 = vmatprep.mubr.bf16.mxu0 %v1647
        %2862 = vmatmul.mubr.bf16.gmra.mrb[0].mxu0 %v1646
        %v2863 = vpop.f32.mrb[0].mxu0
        %v2864 = vadd.f32 %v2575, %v2863
        %v2865 = vpop.f32.mrb[0].mxu0
        %v2866 = vpop.f32.mrb[0].mxu0
        %v2867 = vadd.f32 %v2578, %v2866
        %v2868 = vpop.f32.mrb[0].mxu0
        %2869 = vmatprep.mubr.bf16.mxu0 %v1655
        %2870 = vmatmul.mubr.bf16.gmra.mrb[0].mxu0 %v1654
        %v2871 = vpop.f32.mrb[0].mxu0
        %v2872 = vadd.f32 %v2583, %v2871
        %v2873 = vpop.f32.mrb[0].mxu0
        %v2874 = vpop.f32.mrb[0].mxu0
        %v2875 = vadd.f32 %v2586, %v2874
        %v2876 = vpop.f32.mrb[0].mxu0
        %2877 = vmatprep.mubr.bf16.mxu0 %v1663
        %2878 = vmatmul.mubr.bf16.gmra.mrb[0].mxu0 %v1662
        %v2879 = vpop.f32.mrb[0].mxu0
        %v2880 = vadd.f32 %v2591, %v2879
        %v2881 = vpop.f32.mrb[0].mxu0
        %v2882 = vpop.f32.mrb[0].mxu0
        %v2883 = vadd.f32 %v2594, %v2882
        %v2884 = vpop.f32.mrb[0].mxu0
        %2885 = vmatprep.mubr.bf16.mxu0 %v1671
        %2886 = vmatmul.mubr.bf16.gmra.mrb[0].mxu0 %v1670
        %v2887 = vpop.f32.mrb[0].mxu0
        %v2888 = vadd.f32 %v2599, %v2887
        %v2889 = vpop.f32.mrb[0].mxu0
        %v2890 = vpop.f32.mrb[0].mxu0
        %v2891 = vadd.f32 %v2602, %v2890
        %v2892 = vpop.f32.mrb[0].mxu0
        %2893 = vmatprep.mubr.bf16.mxu0 %v1679
        %2894 = vmatmul.mubr.bf16.gmra.mrb[0].mxu0 %v1678
        %v2895 = vpop.f32.mrb[0].mxu0
        %v2896 = vadd.f32 %v2607, %v2895
        %v2897 = vpop.f32.mrb[0].mxu0
        %v2898 = vpop.f32.mrb[0].mxu0
        %v2899 = vadd.f32 %v2610, %v2898
        %v2900 = vpop.f32.mrb[0].mxu0
        %2901 = vmatprep.mubr.bf16.mxu0 %v1687
        %2902 = vmatmul.mubr.bf16.gmra.mrb[0].mxu0 %v1686
        %v2903 = vpop.f32.mrb[0].mxu0
        %v2904 = vadd.f32 %v2615, %v2903
        %v2905 = vpop.f32.mrb[0].mxu0
        %v2906 = vpop.f32.mrb[0].mxu0
        %v2907 = vadd.f32 %v2618, %v2906
        %v2908 = vpop.f32.mrb[0].mxu0
        %2909 = vmatprep.mubr.bf16.mxu0 %v1695
        %2910 = vmatmul.mubr.bf16.gmra.mrb[0].mxu0 %v1694
        %v2911 = vpop.f32.mrb[0].mxu0
        %v2912 = vadd.f32 %v2623, %v2911
        %v2913 = vpop.f32.mrb[0].mxu0
        %v2914 = vpop.f32.mrb[0].mxu0
        %v2915 = vadd.f32 %v2626, %v2914
        %v2916 = vpop.f32.mrb[0].mxu0
        %2917 = vmatprep.mubr.bf16.mxu0 %v1703
        %2918 = vmatmul.mubr.bf16.gmra.mrb[0].mxu0 %v1702
        %v2919 = vpop.f32.mrb[0].mxu0
        %v2920 = vadd.f32 %v2631, %v2919
        %v2921 = vpop.f32.mrb[0].mxu0
        %v2922 = vpop.f32.mrb[0].mxu0
        %v2923 = vadd.f32 %v2634, %v2922
        %v2924 = vpop.f32.mrb[0].mxu0
        %2925 = vmatprep.mubr.bf16.mxu0 %v1711
        %2926 = vmatmul.mubr.bf16.gmra.mrb[0].mxu0 %v1710
        %v2927 = vpop.f32.mrb[0].mxu0
        %v2928 = vadd.f32 %v2639, %v2927
        %v2929 = vpop.f32.mrb[0].mxu0
        %v2930 = vpop.f32.mrb[0].mxu0
        %v2931 = vadd.f32 %v2642, %v2930
        %v2932 = vpop.f32.mrb[0].mxu0
        %2933 = vmatprep.mubr.bf16.mxu0 %v1719
        %2934 = vmatmul.mubr.bf16.gmra.mrb[0].mxu0 %v1718
        %v2935 = vpop.f32.mrb[0].mxu0
        %v2936 = vadd.f32 %v2647, %v2935
        %v2937 = vpop.f32.mrb[0].mxu0
        %v2938 = vpop.f32.mrb[0].mxu0
        %v2939 = vadd.f32 %v2650, %v2938
        %v2940 = vpop.f32.mrb[0].mxu0
        %2941 = vmatprep.mubr.bf16.mxu0 %v1727
        %2942 = vmatmul.mubr.bf16.gmra.mrb[0].mxu0 %v1726
        %v2943 = vpop.f32.mrb[0].mxu0
        %v2944 = vadd.f32 %v2655, %v2943
        %v2945 = vpop.f32.mrb[0].mxu0
        %v2946 = vpop.f32.mrb[0].mxu0
        %v2947 = vadd.f32 %v2658, %v2946
        %v2948 = vpop.f32.mrb[0].mxu0
        %2949 = vmatprep.mubr.bf16.mxu0 %v1735
        %2950 = vmatmul.mubr.bf16.gmra.mrb[0].mxu0 %v1734
        %v2951 = vpop.f32.mrb[0].mxu0
        %v2952 = vadd.f32 %v2663, %v2951
        %v2953 = vpop.f32.mrb[0].mxu0
        %v2954 = vpop.f32.mrb[0].mxu0
        %v2955 = vadd.f32 %v2666, %v2954
        %v2956 = vpop.f32.mrb[0].mxu0
        %2957 = vmatprep.mubr.bf16.mxu0 %v1743
        %2958 = vmatmul.mubr.bf16.gmra.mrb[0].mxu0 %v1742
        %v2959 = vpop.f32.mrb[0].mxu0
        %v2960 = vadd.f32 %v2671, %v2959
        %v2961 = vpop.f32.mrb[0].mxu0
        %v2962 = vpop.f32.mrb[0].mxu0
        %v2963 = vadd.f32 %v2674, %v2962
        %v2964 = vpop.f32.mrb[0].mxu0
        %2965 = vmatprep.mubr.bf16.mxu0 %v1751
        %2966 = vmatmul.mubr.bf16.gmra.mrb[0].mxu0 %v1750
        %v2967 = vpop.f32.mrb[0].mxu0
        %v2968 = vadd.f32 %v2679, %v2967
        %v2969 = vpop.f32.mrb[0].mxu0
        %v2970 = vpop.f32.mrb[0].mxu0
        %v2971 = vadd.f32 %v2682, %v2970
        %v2972 = vpop.f32.mrb[0].mxu0
        %2973 = vmatprep.mubr.bf16.mxu0 %v1759
        %2974 = vmatmul.mubr.bf16.gmra.mrb[0].mxu0 %v1758
        %v2975 = vpop.f32.mrb[0].mxu0
        %v2976 = vadd.f32 %v2687, %v2975
        %v2977 = vpop.f32.mrb[0].mxu0
        %v2978 = vpop.f32.mrb[0].mxu0
        %v2979 = vadd.f32 %v2690, %v2978
        %v2980 = vpop.f32.mrb[0].mxu0
        %2981 = vmatprep.mubr.bf16.mxu0 %v1767
        %2982 = vmatmul.mubr.bf16.gmra.mrb[0].mxu0 %v1766
        %v2983 = vpop.f32.mrb[0].mxu0
        %v2984 = vadd.f32 %v2695, %v2983
        %v2985 = vpop.f32.mrb[0].mxu0
        %v2986 = vpop.f32.mrb[0].mxu0
        %v2987 = vadd.f32 %v2698, %v2986
        %v2988 = vpop.f32.mrb[0].mxu0
        %2989 = vmatprep.mubr.bf16.mxu0 %v1775
        %2990 = vmatmul.mubr.bf16.gmra.mrb[0].mxu0 %v1774
        %v2991 = vpop.f32.mrb[0].mxu0
        %v2992 = vadd.f32 %v2703, %v2991
        %v2993 = vpop.f32.mrb[0].mxu0
        %v2994 = vpop.f32.mrb[0].mxu0
        %v2995 = vadd.f32 %v2706, %v2994
        %v2996 = vpop.f32.mrb[0].mxu0
        %2997 = vmatprep.mubr.bf16.mxu0 %v1783
        %2998 = vmatmul.mubr.bf16.gmra.mrb[0].mxu0 %v1782
        %v2999 = vpop.f32.mrb[0].mxu0
        %v3000 = vadd.f32 %v2711, %v2999
        %v3001 = vpop.f32.mrb[0].mxu0
        %v3002 = vpop.f32.mrb[0].mxu0
        %v3003 = vadd.f32 %v2714, %v3002
        %v3004 = vpop.f32.mrb[0].mxu0
        %3005 = vmatprep.mubr.bf16.mxu0 %v1791
        %3006 = vmatmul.mubr.bf16.gmra.mrb[0].mxu0 %v1790
        %v3007 = vpop.f32.mrb[0].mxu0
        %v3008 = vadd.f32 %v2719, %v3007
        %v3009 = vpop.f32.mrb[0].mxu0
        %v3010 = vpop.f32.mrb[0].mxu0
        %v3011 = vadd.f32 %v2722, %v3010
        %v3012 = vpop.f32.mrb[0].mxu0
        %3013 = vmatprep.mubr.bf16.mxu0 %v1799
        %3014 = vmatmul.mubr.bf16.gmra.mrb[0].mxu0 %v1798
        %v3015 = vpop.f32.mrb[0].mxu0
        %v3016 = vadd.f32 %v2727, %v3015
        %v3017 = vpop.f32.mrb[0].mxu0
        %v3018 = vpop.f32.mrb[0].mxu0
        %v3019 = vadd.f32 %v2730, %v3018
        %v3020 = vpop.f32.mrb[0].mxu0
        %3021 = vmatprep.mubr.bf16.mxu0 %v1807
        %3022 = vmatmul.mubr.bf16.gmra.mrb[0].mxu0 %v1806
        %v3023 = vpop.f32.mrb[0].mxu0
        %v3024 = vadd.f32 %v2735, %v3023
        %v3025 = vpop.f32.mrb[0].mxu0
        %v3026 = vpop.f32.mrb[0].mxu0
        %v3027 = vadd.f32 %v2738, %v3026
        %v3028 = vpop.f32.mrb[0].mxu0
        %3029 = vmatprep.mubr.bf16.mxu0 %v1815
        %3030 = vmatmul.mubr.bf16.gmra.mrb[0].mxu0 %v1814
        %v3031 = vpop.f32.mrb[0].mxu0
        %v3032 = vadd.f32 %v2743, %v3031
        %v3033 = vpop.f32.mrb[0].mxu0
        %v3034 = vpop.f32.mrb[0].mxu0
        %v3035 = vadd.f32 %v2746, %v3034
        %v3036 = vpop.f32.mrb[0].mxu0
        %3037 = vmatprep.mubr.bf16.mxu0 %v1823
        %3038 = vmatmul.mubr.bf16.gmra.mrb[0].mxu0 %v1822
        %v3039 = vpop.f32.mrb[0].mxu0
        %v3040 = vadd.f32 %v2751, %v3039
        %v3041 = vpop.f32.mrb[0].mxu0
        %v3042 = vpop.f32.mrb[0].mxu0
        %v3043 = vadd.f32 %v2754, %v3042
        %v3044 = vpop.f32.mrb[0].mxu0
        %3045 = vmatprep.mubr.bf16.mxu0 %v1831
        %3046 = vmatmul.mubr.bf16.gmra.mrb[0].mxu0 %v1830
        %v3047 = vpop.f32.mrb[0].mxu0
        %v3048 = vadd.f32 %v2759, %v3047
        %v3049 = vpop.f32.mrb[0].mxu0
        %v3050 = vpop.f32.mrb[0].mxu0
        %v3051 = vadd.f32 %v2762, %v3050
        %v3052 = vpop.f32.mrb[0].mxu0
        %3053 = vmatprep.mubr.bf16.mxu0 %v1839
        %3054 = vmatmul.mubr.bf16.gmra.mrb[0].mxu0 %v1838
        %v3055 = vpop.f32.mrb[0].mxu0
        %v3056 = vadd.f32 %v2767, %v3055
        %v3057 = vpop.f32.mrb[0].mxu0
        %v3058 = vpop.f32.mrb[0].mxu0
        %v3059 = vadd.f32 %v2770, %v3058
        %v3060 = vpop.f32.mrb[0].mxu0
        %3061 = vmatprep.mubr.bf16.mxu0 %v1847
        %3062 = vmatmul.mubr.bf16.gmra.mrb[0].mxu0 %v1846
        %v3063 = vpop.f32.mrb[0].mxu0
        %v3064 = vadd.f32 %v2775, %v3063
        %v3065 = vpop.f32.mrb[0].mxu0
        %v3066 = vpop.f32.mrb[0].mxu0
        %v3067 = vadd.f32 %v2778, %v3066
        %v3068 = vpop.f32.mrb[0].mxu0
        %3069 = vmatprep.mubr.bf16.mxu0 %v1855
        %3070 = vmatmul.mubr.bf16.gmra.mrb[0].mxu0 %v1854
        %v3071 = vpop.f32.mrb[0].mxu0
        %v3072 = vadd.f32 %v2783, %v3071
        %v3073 = vpop.f32.mrb[0].mxu0
        %v3074 = vpop.f32.mrb[0].mxu0
        %v3075 = vadd.f32 %v2786, %v3074
        %v3076 = vpop.f32.mrb[0].mxu0
        %3077 = vmatprep.mubr.bf16.mxu0 %v1863
        %3078 = vmatmul.mubr.bf16.gmra.mrb[0].mxu0 %v1862
        %v3079 = vpop.f32.mrb[0].mxu0
        %v3080 = vadd.f32 %v2791, %v3079
        %v3081 = vpop.f32.mrb[0].mxu0
        %v3082 = vpop.f32.mrb[0].mxu0
        %v3083 = vadd.f32 %v2794, %v3082
        %v3084 = vpop.f32.mrb[0].mxu0
        %3085 = vmatprep.mubr.bf16.mxu0 %v1871
        %3086 = vmatmul.mubr.bf16.gmra.mrb[0].mxu0 %v1870
        %v3087 = vpop.f32.mrb[0].mxu0
        %v3088 = vadd.f32 %v2799, %v3087
        %v3089 = vpop.f32.mrb[0].mxu0
        %v3090 = vpop.f32.mrb[0].mxu0
        %v3091 = vadd.f32 %v2802, %v3090
        %v3092 = vpop.f32.mrb[0].mxu0
        %3093 = vdwg.mxu0
        %3094 = vmatprep.subr.bf16.mxu0 0
        %3095 = vmatpush1.bf16.msra.mxu0 %v2420
        %3096 = vmatprep.subr.bf16.mxu0 0
        %3097 = vmatpush1.bf16.msra.mxu0 %v2421
        %3098 = vmatprep.subr.bf16.mxu0 0
        %3099 = vmatpush1.bf16.msra.mxu0 %v2422
        %3100 = vmatprep.subr.bf16.mxu0 0
        %3101 = vmatpush1.bf16.msra.mxu0 %v2423
        %3102 = vmatprep.subr.bf16.mxu0 0
        %3103 = vmatpush1.bf16.msra.mxu0 %v2424
        %3104 = vmatprep.subr.bf16.mxu0 0
        %3105 = vmatpush1.bf16.msra.mxu0 %v2425
        %3106 = vmatprep.subr.bf16.mxu0 0
        %3107 = vmatpush1.bf16.msra.mxu0 %v2426
        %3108 = vmatprep.subr.bf16.mxu0 0
        %3109 = vmatpush1.bf16.msra.mxu0 %v2427
        %3110 = vmatprep.subr.bf16.mxu0 0
        %3111 = vmatpush1.bf16.msra.mxu0 %v2428
        %3112 = vmatprep.subr.bf16.mxu0 0
        %3113 = vmatpush1.bf16.msra.mxu0 %v2429
        %3114 = vmatprep.subr.bf16.mxu0 0
        %3115 = vmatpush1.bf16.msra.mxu0 %v2430
        %3116 = vmatprep.subr.bf16.mxu0 0
        %3117 = vmatpush1.bf16.msra.mxu0 %v2431
        %3118 = vmatprep.subr.bf16.mxu0 0
        %3119 = vmatpush1.bf16.msra.mxu0 %v2432
        %3120 = vmatprep.subr.bf16.mxu0 0
        %3121 = vmatpush1.bf16.msra.mxu0 %v2433
        %3122 = vmatprep.subr.bf16.mxu0 0
        %3123 = vmatpush1.bf16.msra.mxu0 %v2434
        %3124 = vmatprep.subr.bf16.mxu0 0
        %3125 = vmatpush1.bf16.msra.mxu0 %v2435
        %3126 = vmatprep.mubr.bf16.mxu0 %v1625
        %3127 = vmatmul.mubr.bf16.gmra.mrb[0].mxu0 %v1624
        %v3128 = vpop.f32.mrb[0].mxu0
        %v3129 = vadd.f32 %v2840, %v3128
        %v3130 = vpop.f32.mrb[0].mxu0
        %v3131 = vpop.f32.mrb[0].mxu0
        %v3132 = vadd.f32 %v2843, %v3131
        %v3133 = vpop.f32.mrb[0].mxu0
        %3134 = vmatprep.mubr.bf16.mxu0 %v1633
        %3135 = vmatmul.mubr.bf16.gmra.mrb[0].mxu0 %v1632
        %v3136 = vpop.f32.mrb[0].mxu0
        %v3137 = vadd.f32 %v2848, %v3136
        %v3138 = vpop.f32.mrb[0].mxu0
        %v3139 = vpop.f32.mrb[0].mxu0
        %v3140 = vadd.f32 %v2851, %v3139
        %v3141 = vpop.f32.mrb[0].mxu0
        %3142 = vmatprep.mubr.bf16.mxu0 %v1641
        %3143 = vmatmul.mubr.bf16.gmra.mrb[0].mxu0 %v1640
        %v3144 = vpop.f32.mrb[0].mxu0
        %v3145 = vadd.f32 %v2856, %v3144
        %v3146 = vpop.f32.mrb[0].mxu0
        %v3147 = vpop.f32.mrb[0].mxu0
        %v3148 = vadd.f32 %v2859, %v3147
        %v3149 = vpop.f32.mrb[0].mxu0
        %3150 = vmatprep.mubr.bf16.mxu0 %v1649
        %3151 = vmatmul.mubr.bf16.gmra.mrb[0].mxu0 %v1648
        %v3152 = vpop.f32.mrb[0].mxu0
        %v3153 = vadd.f32 %v2864, %v3152
        %v3154 = vpop.f32.mrb[0].mxu0
        %v3155 = vpop.f32.mrb[0].mxu0
        %v3156 = vadd.f32 %v2867, %v3155
        %v3157 = vpop.f32.mrb[0].mxu0
        %3158 = vmatprep.mubr.bf16.mxu0 %v1657
        %3159 = vmatmul.mubr.bf16.gmra.mrb[0].mxu0 %v1656
        %v3160 = vpop.f32.mrb[0].mxu0
        %v3161 = vadd.f32 %v2872, %v3160
        %v3162 = vpop.f32.mrb[0].mxu0
        %v3163 = vpop.f32.mrb[0].mxu0
        %v3164 = vadd.f32 %v2875, %v3163
        %v3165 = vpop.f32.mrb[0].mxu0
        %3166 = vmatprep.mubr.bf16.mxu0 %v1665
        %3167 = vmatmul.mubr.bf16.gmra.mrb[0].mxu0 %v1664
        %v3168 = vpop.f32.mrb[0].mxu0
        %v3169 = vadd.f32 %v2880, %v3168
        %v3170 = vpop.f32.mrb[0].mxu0
        %v3171 = vpop.f32.mrb[0].mxu0
        %v3172 = vadd.f32 %v2883, %v3171
        %v3173 = vpop.f32.mrb[0].mxu0
        %3174 = vmatprep.mubr.bf16.mxu0 %v1673
        %3175 = vmatmul.mubr.bf16.gmra.mrb[0].mxu0 %v1672
        %v3176 = vpop.f32.mrb[0].mxu0
        %v3177 = vadd.f32 %v2888, %v3176
        %v3178 = vpop.f32.mrb[0].mxu0
        %v3179 = vpop.f32.mrb[0].mxu0
        %v3180 = vadd.f32 %v2891, %v3179
        %v3181 = vpop.f32.mrb[0].mxu0
        %3182 = vmatprep.mubr.bf16.mxu0 %v1681
        %3183 = vmatmul.mubr.bf16.gmra.mrb[0].mxu0 %v1680
        %v3184 = vpop.f32.mrb[0].mxu0
        %v3185 = vadd.f32 %v2896, %v3184
        %v3186 = vpop.f32.mrb[0].mxu0
        %v3187 = vpop.f32.mrb[0].mxu0
        %v3188 = vadd.f32 %v2899, %v3187
        %v3189 = vpop.f32.mrb[0].mxu0
        %3190 = vmatprep.mubr.bf16.mxu0 %v1689
        %3191 = vmatmul.mubr.bf16.gmra.mrb[0].mxu0 %v1688
        %v3192 = vpop.f32.mrb[0].mxu0
        %v3193 = vadd.f32 %v2904, %v3192
        %v3194 = vpop.f32.mrb[0].mxu0
        %v3195 = vpop.f32.mrb[0].mxu0
        %v3196 = vadd.f32 %v2907, %v3195
        %v3197 = vpop.f32.mrb[0].mxu0
        %3198 = vmatprep.mubr.bf16.mxu0 %v1697
        %3199 = vmatmul.mubr.bf16.gmra.mrb[0].mxu0 %v1696
        %v3200 = vpop.f32.mrb[0].mxu0
        %v3201 = vadd.f32 %v2912, %v3200
        %v3202 = vpop.f32.mrb[0].mxu0
        %v3203 = vpop.f32.mrb[0].mxu0
        %v3204 = vadd.f32 %v2915, %v3203
        %v3205 = vpop.f32.mrb[0].mxu0
        %3206 = vmatprep.mubr.bf16.mxu0 %v1705
        %3207 = vmatmul.mubr.bf16.gmra.mrb[0].mxu0 %v1704
        %v3208 = vpop.f32.mrb[0].mxu0
        %v3209 = vadd.f32 %v2920, %v3208
        %v3210 = vpop.f32.mrb[0].mxu0
        %v3211 = vpop.f32.mrb[0].mxu0
        %v3212 = vadd.f32 %v2923, %v3211
        %v3213 = vpop.f32.mrb[0].mxu0
        %3214 = vmatprep.mubr.bf16.mxu0 %v1713
        %3215 = vmatmul.mubr.bf16.gmra.mrb[0].mxu0 %v1712
        %v3216 = vpop.f32.mrb[0].mxu0
        %v3217 = vadd.f32 %v2928, %v3216
        %v3218 = vpop.f32.mrb[0].mxu0
        %v3219 = vpop.f32.mrb[0].mxu0
        %v3220 = vadd.f32 %v2931, %v3219
        %v3221 = vpop.f32.mrb[0].mxu0
        %3222 = vmatprep.mubr.bf16.mxu0 %v1721
        %3223 = vmatmul.mubr.bf16.gmra.mrb[0].mxu0 %v1720
        %v3224 = vpop.f32.mrb[0].mxu0
        %v3225 = vadd.f32 %v2936, %v3224
        %v3226 = vpop.f32.mrb[0].mxu0
        %v3227 = vpop.f32.mrb[0].mxu0
        %v3228 = vadd.f32 %v2939, %v3227
        %v3229 = vpop.f32.mrb[0].mxu0
        %3230 = vmatprep.mubr.bf16.mxu0 %v1729
        %3231 = vmatmul.mubr.bf16.gmra.mrb[0].mxu0 %v1728
        %v3232 = vpop.f32.mrb[0].mxu0
        %v3233 = vadd.f32 %v2944, %v3232
        %v3234 = vpop.f32.mrb[0].mxu0
        %v3235 = vpop.f32.mrb[0].mxu0
        %v3236 = vadd.f32 %v2947, %v3235
        %v3237 = vpop.f32.mrb[0].mxu0
        %3238 = vmatprep.mubr.bf16.mxu0 %v1737
        %3239 = vmatmul.mubr.bf16.gmra.mrb[0].mxu0 %v1736
        %v3240 = vpop.f32.mrb[0].mxu0
        %v3241 = vadd.f32 %v2952, %v3240
        %v3242 = vpop.f32.mrb[0].mxu0
        %v3243 = vpop.f32.mrb[0].mxu0
        %v3244 = vadd.f32 %v2955, %v3243
        %v3245 = vpop.f32.mrb[0].mxu0
        %3246 = vmatprep.mubr.bf16.mxu0 %v1745
        %3247 = vmatmul.mubr.bf16.gmra.mrb[0].mxu0 %v1744
        %v3248 = vpop.f32.mrb[0].mxu0
        %v3249 = vadd.f32 %v2960, %v3248
        %v3250 = vpop.f32.mrb[0].mxu0
        %v3251 = vpop.f32.mrb[0].mxu0
        %v3252 = vadd.f32 %v2963, %v3251
        %v3253 = vpop.f32.mrb[0].mxu0
        %3254 = vmatprep.mubr.bf16.mxu0 %v1753
        %3255 = vmatmul.mubr.bf16.gmra.mrb[0].mxu0 %v1752
        %v3256 = vpop.f32.mrb[0].mxu0
        %v3257 = vadd.f32 %v2968, %v3256
        %v3258 = vpop.f32.mrb[0].mxu0
        %v3259 = vpop.f32.mrb[0].mxu0
        %v3260 = vadd.f32 %v2971, %v3259
        %v3261 = vpop.f32.mrb[0].mxu0
        %3262 = vmatprep.mubr.bf16.mxu0 %v1761
        %3263 = vmatmul.mubr.bf16.gmra.mrb[0].mxu0 %v1760
        %v3264 = vpop.f32.mrb[0].mxu0
        %v3265 = vadd.f32 %v2976, %v3264
        %v3266 = vpop.f32.mrb[0].mxu0
        %v3267 = vpop.f32.mrb[0].mxu0
        %v3268 = vadd.f32 %v2979, %v3267
        %v3269 = vpop.f32.mrb[0].mxu0
        %3270 = vmatprep.mubr.bf16.mxu0 %v1769
        %3271 = vmatmul.mubr.bf16.gmra.mrb[0].mxu0 %v1768
        %v3272 = vpop.f32.mrb[0].mxu0
        %v3273 = vadd.f32 %v2984, %v3272
        %v3274 = vpop.f32.mrb[0].mxu0
        %v3275 = vpop.f32.mrb[0].mxu0
        %v3276 = vadd.f32 %v2987, %v3275
        %v3277 = vpop.f32.mrb[0].mxu0
        %3278 = vmatprep.mubr.bf16.mxu0 %v1777
        %3279 = vmatmul.mubr.bf16.gmra.mrb[0].mxu0 %v1776
        %v3280 = vpop.f32.mrb[0].mxu0
        %v3281 = vadd.f32 %v2992, %v3280
        %v3282 = vpop.f32.mrb[0].mxu0
        %v3283 = vpop.f32.mrb[0].mxu0
        %v3284 = vadd.f32 %v2995, %v3283
        %v3285 = vpop.f32.mrb[0].mxu0
        %3286 = vmatprep.mubr.bf16.mxu0 %v1785
        %3287 = vmatmul.mubr.bf16.gmra.mrb[0].mxu0 %v1784
        %v3288 = vpop.f32.mrb[0].mxu0
        %v3289 = vadd.f32 %v3000, %v3288
        %v3290 = vpop.f32.mrb[0].mxu0
        %v3291 = vpop.f32.mrb[0].mxu0
        %v3292 = vadd.f32 %v3003, %v3291
        %v3293 = vpop.f32.mrb[0].mxu0
        %3294 = vmatprep.mubr.bf16.mxu0 %v1793
        %3295 = vmatmul.mubr.bf16.gmra.mrb[0].mxu0 %v1792
        %v3296 = vpop.f32.mrb[0].mxu0
        %v3297 = vadd.f32 %v3008, %v3296
        %v3298 = vpop.f32.mrb[0].mxu0
        %v3299 = vpop.f32.mrb[0].mxu0
        %v3300 = vadd.f32 %v3011, %v3299
        %v3301 = vpop.f32.mrb[0].mxu0
        %3302 = vmatprep.mubr.bf16.mxu0 %v1801
        %3303 = vmatmul.mubr.bf16.gmra.mrb[0].mxu0 %v1800
        %v3304 = vpop.f32.mrb[0].mxu0
        %v3305 = vadd.f32 %v3016, %v3304
        %v3306 = vpop.f32.mrb[0].mxu0
        %v3307 = vpop.f32.mrb[0].mxu0
        %v3308 = vadd.f32 %v3019, %v3307
        %v3309 = vpop.f32.mrb[0].mxu0
        %3310 = vmatprep.mubr.bf16.mxu0 %v1809
        %3311 = vmatmul.mubr.bf16.gmra.mrb[0].mxu0 %v1808
        %v3312 = vpop.f32.mrb[0].mxu0
        %v3313 = vadd.f32 %v3024, %v3312
        %v3314 = vpop.f32.mrb[0].mxu0
        %v3315 = vpop.f32.mrb[0].mxu0
        %v3316 = vadd.f32 %v3027, %v3315
        %v3317 = vpop.f32.mrb[0].mxu0
        %3318 = vmatprep.mubr.bf16.mxu0 %v1817
        %3319 = vmatmul.mubr.bf16.gmra.mrb[0].mxu0 %v1816
        %v3320 = vpop.f32.mrb[0].mxu0
        %v3321 = vadd.f32 %v3032, %v3320
        %v3322 = vpop.f32.mrb[0].mxu0
        %v3323 = vpop.f32.mrb[0].mxu0
        %v3324 = vadd.f32 %v3035, %v3323
        %v3325 = vpop.f32.mrb[0].mxu0
        %3326 = vmatprep.mubr.bf16.mxu0 %v1825
        %3327 = vmatmul.mubr.bf16.gmra.mrb[0].mxu0 %v1824
        %v3328 = vpop.f32.mrb[0].mxu0
        %v3329 = vadd.f32 %v3040, %v3328
        %v3330 = vpop.f32.mrb[0].mxu0
        %v3331 = vpop.f32.mrb[0].mxu0
        %v3332 = vadd.f32 %v3043, %v3331
        %v3333 = vpop.f32.mrb[0].mxu0
        %3334 = vmatprep.mubr.bf16.mxu0 %v1833
        %3335 = vmatmul.mubr.bf16.gmra.mrb[0].mxu0 %v1832
        %v3336 = vpop.f32.mrb[0].mxu0
        %v3337 = vadd.f32 %v3048, %v3336
        %v3338 = vpop.f32.mrb[0].mxu0
        %v3339 = vpop.f32.mrb[0].mxu0
        %v3340 = vadd.f32 %v3051, %v3339
        %v3341 = vpop.f32.mrb[0].mxu0
        %3342 = vmatprep.mubr.bf16.mxu0 %v1841
        %3343 = vmatmul.mubr.bf16.gmra.mrb[0].mxu0 %v1840
        %v3344 = vpop.f32.mrb[0].mxu0
        %v3345 = vadd.f32 %v3056, %v3344
        %v3346 = vpop.f32.mrb[0].mxu0
        %v3347 = vpop.f32.mrb[0].mxu0
        %v3348 = vadd.f32 %v3059, %v3347
        %v3349 = vpop.f32.mrb[0].mxu0
        %3350 = vmatprep.mubr.bf16.mxu0 %v1849
        %3351 = vmatmul.mubr.bf16.gmra.mrb[0].mxu0 %v1848
        %v3352 = vpop.f32.mrb[0].mxu0
        %v3353 = vadd.f32 %v3064, %v3352
        %v3354 = vpop.f32.mrb[0].mxu0
        %v3355 = vpop.f32.mrb[0].mxu0
        %v3356 = vadd.f32 %v3067, %v3355
        %v3357 = vpop.f32.mrb[0].mxu0
        %3358 = vmatprep.mubr.bf16.mxu0 %v1857
        %3359 = vmatmul.mubr.bf16.gmra.mrb[0].mxu0 %v1856
        %v3360 = vpop.f32.mrb[0].mxu0
        %v3361 = vadd.f32 %v3072, %v3360
        %v3362 = vpop.f32.mrb[0].mxu0
        %v3363 = vpop.f32.mrb[0].mxu0
        %v3364 = vadd.f32 %v3075, %v3363
        %v3365 = vpop.f32.mrb[0].mxu0
        %3366 = vmatprep.mubr.bf16.mxu0 %v1865
        %3367 = vmatmul.mubr.bf16.gmra.mrb[0].mxu0 %v1864
        %v3368 = vpop.f32.mrb[0].mxu0
        %v3369 = vadd.f32 %v3080, %v3368
        %v3370 = vpop.f32.mrb[0].mxu0
        %v3371 = vpop.f32.mrb[0].mxu0
        %v3372 = vadd.f32 %v3083, %v3371
        %v3373 = vpop.f32.mrb[0].mxu0
        %3374 = vmatprep.mubr.bf16.mxu0 %v1873
        %3375 = vmatmul.mubr.bf16.gmra.mrb[0].mxu0 %v1872
        %v3376 = vpop.f32.mrb[0].mxu0
        %v3377 = vadd.f32 %v3088, %v3376
        %v3378 = vpop.f32.mrb[0].mxu0
        %v3379 = vpop.f32.mrb[0].mxu0
        %v3380 = vadd.f32 %v3091, %v3379
        %v3381 = vpop.f32.mrb[0].mxu0
        %3382 = vdwg.mxu0
        %3383 = vmatprep.subr.bf16.mxu0 0
        %3384 = vmatpush1.bf16.msra.mxu0 %v2436
        %3385 = vmatprep.subr.bf16.mxu0 0
        %3386 = vmatpush1.bf16.msra.mxu0 %v2437
        %3387 = vmatprep.subr.bf16.mxu0 0
        %3388 = vmatpush1.bf16.msra.mxu0 %v2438
        %3389 = vmatprep.subr.bf16.mxu0 0
        %3390 = vmatpush1.bf16.msra.mxu0 %v2439
        %3391 = vmatprep.subr.bf16.mxu0 0
        %3392 = vmatpush1.bf16.msra.mxu0 %v2440
        %3393 = vmatprep.subr.bf16.mxu0 0
        %3394 = vmatpush1.bf16.msra.mxu0 %v2441
        %3395 = vmatprep.subr.bf16.mxu0 0
        %3396 = vmatpush1.bf16.msra.mxu0 %v2442
        %3397 = vmatprep.subr.bf16.mxu0 0
        %3398 = vmatpush1.bf16.msra.mxu0 %v2443
        %3399 = vmatprep.subr.bf16.mxu0 0
        %3400 = vmatpush1.bf16.msra.mxu0 %v2444
        %3401 = vmatprep.subr.bf16.mxu0 0
        %3402 = vmatpush1.bf16.msra.mxu0 %v2445
        %3403 = vmatprep.subr.bf16.mxu0 0
        %3404 = vmatpush1.bf16.msra.mxu0 %v2446
        %3405 = vmatprep.subr.bf16.mxu0 0
        %3406 = vmatpush1.bf16.msra.mxu0 %v2447
        %3407 = vmatprep.subr.bf16.mxu0 0
        %3408 = vmatpush1.bf16.msra.mxu0 %v2448
        %3409 = vmatprep.subr.bf16.mxu0 0
        %3410 = vmatpush1.bf16.msra.mxu0 %v2449
        %3411 = vmatprep.subr.bf16.mxu0 0
        %3412 = vmatpush1.bf16.msra.mxu0 %v2450
        %3413 = vmatprep.subr.bf16.mxu0 0
        %3414 = vmatpush1.bf16.msra.mxu0 %v2451
        %3415 = vmatprep.mubr.bf16.mxu0 %v1627
        %3416 = vmatmul.mubr.bf16.gmra.mrb[0].mxu0 %v1626
        %v3417 = vpop.f32.mrb[0].mxu0
        %v3418 = vadd.f32 %v3129, %v3417
        %v3419 = vpop.f32.mrb[0].mxu0
        %v3420 = vpop.f32.mrb[0].mxu0
        %v3421 = vadd.f32 %v3132, %v3420
        %v3422 = vpop.f32.mrb[0].mxu0
        %3423 = vmatprep.mubr.bf16.mxu0 %v1635
        %3424 = vmatmul.mubr.bf16.gmra.mrb[0].mxu0 %v1634
        %v3425 = vpop.f32.mrb[0].mxu0
        %v3426 = vadd.f32 %v3137, %v3425
        %v3427 = vpop.f32.mrb[0].mxu0
        %v3428 = vpop.f32.mrb[0].mxu0
        %v3429 = vadd.f32 %v3140, %v3428
        %v3430 = vpop.f32.mrb[0].mxu0
        %3431 = vmatprep.mubr.bf16.mxu0 %v1643
        %3432 = vmatmul.mubr.bf16.gmra.mrb[0].mxu0 %v1642
        %v3433 = vpop.f32.mrb[0].mxu0
        %v3434 = vadd.f32 %v3145, %v3433
        %v3435 = vpop.f32.mrb[0].mxu0
        %v3436 = vpop.f32.mrb[0].mxu0
        %v3437 = vadd.f32 %v3148, %v3436
        %v3438 = vpop.f32.mrb[0].mxu0
        %3439 = vmatprep.mubr.bf16.mxu0 %v1651
        %3440 = vmatmul.mubr.bf16.gmra.mrb[0].mxu0 %v1650
        %v3441 = vpop.f32.mrb[0].mxu0
        %v3442 = vadd.f32 %v3153, %v3441
        %v3443 = vpop.f32.mrb[0].mxu0
        %v3444 = vpop.f32.mrb[0].mxu0
        %v3445 = vadd.f32 %v3156, %v3444
        %v3446 = vpop.f32.mrb[0].mxu0
        %3447 = vmatprep.mubr.bf16.mxu0 %v1659
        %3448 = vmatmul.mubr.bf16.gmra.mrb[0].mxu0 %v1658
        %v3449 = vpop.f32.mrb[0].mxu0
        %v3450 = vadd.f32 %v3161, %v3449
        %v3451 = vpop.f32.mrb[0].mxu0
        %v3452 = vpop.f32.mrb[0].mxu0
        %v3453 = vadd.f32 %v3164, %v3452
        %v3454 = vpop.f32.mrb[0].mxu0
        %3455 = vmatprep.mubr.bf16.mxu0 %v1667
        %3456 = vmatmul.mubr.bf16.gmra.mrb[0].mxu0 %v1666
        %v3457 = vpop.f32.mrb[0].mxu0
        %v3458 = vadd.f32 %v3169, %v3457
        %v3459 = vpop.f32.mrb[0].mxu0
        %v3460 = vpop.f32.mrb[0].mxu0
        %v3461 = vadd.f32 %v3172, %v3460
        %v3462 = vpop.f32.mrb[0].mxu0
        %3463 = vmatprep.mubr.bf16.mxu0 %v1675
        %3464 = vmatmul.mubr.bf16.gmra.mrb[0].mxu0 %v1674
        %v3465 = vpop.f32.mrb[0].mxu0
        %v3466 = vadd.f32 %v3177, %v3465
        %v3467 = vpop.f32.mrb[0].mxu0
        %v3468 = vpop.f32.mrb[0].mxu0
        %v3469 = vadd.f32 %v3180, %v3468
        %v3470 = vpop.f32.mrb[0].mxu0
        %3471 = vmatprep.mubr.bf16.mxu0 %v1683
        %3472 = vmatmul.mubr.bf16.gmra.mrb[0].mxu0 %v1682
        %v3473 = vpop.f32.mrb[0].mxu0
        %v3474 = vadd.f32 %v3185, %v3473
        %v3475 = vpop.f32.mrb[0].mxu0
        %v3476 = vpop.f32.mrb[0].mxu0
        %v3477 = vadd.f32 %v3188, %v3476
        %v3478 = vpop.f32.mrb[0].mxu0
        %3479 = vmatprep.mubr.bf16.mxu0 %v1691
        %3480 = vmatmul.mubr.bf16.gmra.mrb[0].mxu0 %v1690
        %v3481 = vpop.f32.mrb[0].mxu0
        %v3482 = vadd.f32 %v3193, %v3481
        %v3483 = vpop.f32.mrb[0].mxu0
        %v3484 = vpop.f32.mrb[0].mxu0
        %v3485 = vadd.f32 %v3196, %v3484
        %v3486 = vpop.f32.mrb[0].mxu0
        %3487 = vmatprep.mubr.bf16.mxu0 %v1699
        %3488 = vmatmul.mubr.bf16.gmra.mrb[0].mxu0 %v1698
        %v3489 = vpop.f32.mrb[0].mxu0
        %v3490 = vadd.f32 %v3201, %v3489
        %v3491 = vpop.f32.mrb[0].mxu0
        %v3492 = vpop.f32.mrb[0].mxu0
        %v3493 = vadd.f32 %v3204, %v3492
        %v3494 = vpop.f32.mrb[0].mxu0
        %3495 = vmatprep.mubr.bf16.mxu0 %v1707
        %3496 = vmatmul.mubr.bf16.gmra.mrb[0].mxu0 %v1706
        %v3497 = vpop.f32.mrb[0].mxu0
        %v3498 = vadd.f32 %v3209, %v3497
        %v3499 = vpop.f32.mrb[0].mxu0
        %v3500 = vpop.f32.mrb[0].mxu0
        %v3501 = vadd.f32 %v3212, %v3500
        %v3502 = vpop.f32.mrb[0].mxu0
        %3503 = vmatprep.mubr.bf16.mxu0 %v1715
        %3504 = vmatmul.mubr.bf16.gmra.mrb[0].mxu0 %v1714
        %v3505 = vpop.f32.mrb[0].mxu0
        %v3506 = vadd.f32 %v3217, %v3505
        %v3507 = vpop.f32.mrb[0].mxu0
        %v3508 = vpop.f32.mrb[0].mxu0
        %v3509 = vadd.f32 %v3220, %v3508
        %v3510 = vpop.f32.mrb[0].mxu0
        %3511 = vmatprep.mubr.bf16.mxu0 %v1723
        %3512 = vmatmul.mubr.bf16.gmra.mrb[0].mxu0 %v1722
        %v3513 = vpop.f32.mrb[0].mxu0
        %v3514 = vadd.f32 %v3225, %v3513
        %v3515 = vpop.f32.mrb[0].mxu0
        %v3516 = vpop.f32.mrb[0].mxu0
        %v3517 = vadd.f32 %v3228, %v3516
        %v3518 = vpop.f32.mrb[0].mxu0
        %3519 = vmatprep.mubr.bf16.mxu0 %v1731
        %3520 = vmatmul.mubr.bf16.gmra.mrb[0].mxu0 %v1730
        %v3521 = vpop.f32.mrb[0].mxu0
        %v3522 = vadd.f32 %v3233, %v3521
        %v3523 = vpop.f32.mrb[0].mxu0
        %v3524 = vpop.f32.mrb[0].mxu0
        %v3525 = vadd.f32 %v3236, %v3524
        %v3526 = vpop.f32.mrb[0].mxu0
        %3527 = vmatprep.mubr.bf16.mxu0 %v1739
        %3528 = vmatmul.mubr.bf16.gmra.mrb[0].mxu0 %v1738
        %v3529 = vpop.f32.mrb[0].mxu0
        %v3530 = vadd.f32 %v3241, %v3529
        %v3531 = vpop.f32.mrb[0].mxu0
        %v3532 = vpop.f32.mrb[0].mxu0
        %v3533 = vadd.f32 %v3244, %v3532
        %v3534 = vpop.f32.mrb[0].mxu0
        %3535 = vmatprep.mubr.bf16.mxu0 %v1747
        %3536 = vmatmul.mubr.bf16.gmra.mrb[0].mxu0 %v1746
        %v3537 = vpop.f32.mrb[0].mxu0
        %v3538 = vadd.f32 %v3249, %v3537
        %v3539 = vpop.f32.mrb[0].mxu0
        %v3540 = vpop.f32.mrb[0].mxu0
        %v3541 = vadd.f32 %v3252, %v3540
        %v3542 = vpop.f32.mrb[0].mxu0
        %3543 = vmatprep.mubr.bf16.mxu0 %v1755
        %3544 = vmatmul.mubr.bf16.gmra.mrb[0].mxu0 %v1754
        %v3545 = vpop.f32.mrb[0].mxu0
        %v3546 = vadd.f32 %v3257, %v3545
        %v3547 = vpop.f32.mrb[0].mxu0
        %v3548 = vpop.f32.mrb[0].mxu0
        %v3549 = vadd.f32 %v3260, %v3548
        %v3550 = vpop.f32.mrb[0].mxu0
        %3551 = vmatprep.mubr.bf16.mxu0 %v1763
        %3552 = vmatmul.mubr.bf16.gmra.mrb[0].mxu0 %v1762
        %v3553 = vpop.f32.mrb[0].mxu0
        %v3554 = vadd.f32 %v3265, %v3553
        %v3555 = vpop.f32.mrb[0].mxu0
        %v3556 = vpop.f32.mrb[0].mxu0
        %v3557 = vadd.f32 %v3268, %v3556
        %v3558 = vpop.f32.mrb[0].mxu0
        %3559 = vmatprep.mubr.bf16.mxu0 %v1771
        %3560 = vmatmul.mubr.bf16.gmra.mrb[0].mxu0 %v1770
        %v3561 = vpop.f32.mrb[0].mxu0
        %v3562 = vadd.f32 %v3273, %v3561
        %v3563 = vpop.f32.mrb[0].mxu0
        %v3564 = vpop.f32.mrb[0].mxu0
        %v3565 = vadd.f32 %v3276, %v3564
        %v3566 = vpop.f32.mrb[0].mxu0
        %3567 = vmatprep.mubr.bf16.mxu0 %v1779
        %3568 = vmatmul.mubr.bf16.gmra.mrb[0].mxu0 %v1778
        %v3569 = vpop.f32.mrb[0].mxu0
        %v3570 = vadd.f32 %v3281, %v3569
        %v3571 = vpop.f32.mrb[0].mxu0
        %v3572 = vpop.f32.mrb[0].mxu0
        %v3573 = vadd.f32 %v3284, %v3572
        %v3574 = vpop.f32.mrb[0].mxu0
        %3575 = vmatprep.mubr.bf16.mxu0 %v1787
        %3576 = vmatmul.mubr.bf16.gmra.mrb[0].mxu0 %v1786
        %v3577 = vpop.f32.mrb[0].mxu0
        %v3578 = vadd.f32 %v3289, %v3577
        %v3579 = vpop.f32.mrb[0].mxu0
        %v3580 = vpop.f32.mrb[0].mxu0
        %v3581 = vadd.f32 %v3292, %v3580
        %v3582 = vpop.f32.mrb[0].mxu0
        %3583 = vmatprep.mubr.bf16.mxu0 %v1795
        %3584 = vmatmul.mubr.bf16.gmra.mrb[0].mxu0 %v1794
        %v3585 = vpop.f32.mrb[0].mxu0
        %v3586 = vadd.f32 %v3297, %v3585
        %v3587 = vpop.f32.mrb[0].mxu0
        %v3588 = vpop.f32.mrb[0].mxu0
        %v3589 = vadd.f32 %v3300, %v3588
        %v3590 = vpop.f32.mrb[0].mxu0
        %3591 = vmatprep.mubr.bf16.mxu0 %v1803
        %3592 = vmatmul.mubr.bf16.gmra.mrb[0].mxu0 %v1802
        %v3593 = vpop.f32.mrb[0].mxu0
        %v3594 = vadd.f32 %v3305, %v3593
        %v3595 = vpop.f32.mrb[0].mxu0
        %v3596 = vpop.f32.mrb[0].mxu0
        %v3597 = vadd.f32 %v3308, %v3596
        %v3598 = vpop.f32.mrb[0].mxu0
        %3599 = vmatprep.mubr.bf16.mxu0 %v1811
        %3600 = vmatmul.mubr.bf16.gmra.mrb[0].mxu0 %v1810
        %v3601 = vpop.f32.mrb[0].mxu0
        %v3602 = vadd.f32 %v3313, %v3601
        %v3603 = vpop.f32.mrb[0].mxu0
        %v3604 = vpop.f32.mrb[0].mxu0
        %v3605 = vadd.f32 %v3316, %v3604
        %v3606 = vpop.f32.mrb[0].mxu0
        %3607 = vmatprep.mubr.bf16.mxu0 %v1819
        %3608 = vmatmul.mubr.bf16.gmra.mrb[0].mxu0 %v1818
        %v3609 = vpop.f32.mrb[0].mxu0
        %v3610 = vadd.f32 %v3321, %v3609
        %v3611 = vpop.f32.mrb[0].mxu0
        %v3612 = vpop.f32.mrb[0].mxu0
        %v3613 = vadd.f32 %v3324, %v3612
        %v3614 = vpop.f32.mrb[0].mxu0
        %3615 = vmatprep.mubr.bf16.mxu0 %v1827
        %3616 = vmatmul.mubr.bf16.gmra.mrb[0].mxu0 %v1826
        %v3617 = vpop.f32.mrb[0].mxu0
        %v3618 = vadd.f32 %v3329, %v3617
        %v3619 = vpop.f32.mrb[0].mxu0
        %v3620 = vpop.f32.mrb[0].mxu0
        %v3621 = vadd.f32 %v3332, %v3620
        %v3622 = vpop.f32.mrb[0].mxu0
        %3623 = vmatprep.mubr.bf16.mxu0 %v1835
        %3624 = vmatmul.mubr.bf16.gmra.mrb[0].mxu0 %v1834
        %v3625 = vpop.f32.mrb[0].mxu0
        %v3626 = vadd.f32 %v3337, %v3625
        %v3627 = vpop.f32.mrb[0].mxu0
        %v3628 = vpop.f32.mrb[0].mxu0
        %v3629 = vadd.f32 %v3340, %v3628
        %v3630 = vpop.f32.mrb[0].mxu0
        %3631 = vmatprep.mubr.bf16.mxu0 %v1843
        %3632 = vmatmul.mubr.bf16.gmra.mrb[0].mxu0 %v1842
        %v3633 = vpop.f32.mrb[0].mxu0
        %v3634 = vadd.f32 %v3345, %v3633
        %v3635 = vpop.f32.mrb[0].mxu0
        %v3636 = vpop.f32.mrb[0].mxu0
        %v3637 = vadd.f32 %v3348, %v3636
        %v3638 = vpop.f32.mrb[0].mxu0
        %3639 = vmatprep.mubr.bf16.mxu0 %v1851
        %3640 = vmatmul.mubr.bf16.gmra.mrb[0].mxu0 %v1850
        %v3641 = vpop.f32.mrb[0].mxu0
        %v3642 = vadd.f32 %v3353, %v3641
        %v3643 = vpop.f32.mrb[0].mxu0
        %v3644 = vpop.f32.mrb[0].mxu0
        %v3645 = vadd.f32 %v3356, %v3644
        %v3646 = vpop.f32.mrb[0].mxu0
        %3647 = vmatprep.mubr.bf16.mxu0 %v1859
        %3648 = vmatmul.mubr.bf16.gmra.mrb[0].mxu0 %v1858
        %v3649 = vpop.f32.mrb[0].mxu0
        %v3650 = vadd.f32 %v3361, %v3649
        %v3651 = vpop.f32.mrb[0].mxu0
        %v3652 = vpop.f32.mrb[0].mxu0
        %v3653 = vadd.f32 %v3364, %v3652
        %v3654 = vpop.f32.mrb[0].mxu0
        %3655 = vmatprep.mubr.bf16.mxu0 %v1867
        %3656 = vmatmul.mubr.bf16.gmra.mrb[0].mxu0 %v1866
        %v3657 = vpop.f32.mrb[0].mxu0
        %v3658 = vadd.f32 %v3369, %v3657
        %v3659 = vpop.f32.mrb[0].mxu0
        %v3660 = vpop.f32.mrb[0].mxu0
        %v3661 = vadd.f32 %v3372, %v3660
        %v3662 = vpop.f32.mrb[0].mxu0
        %3663 = vmatprep.mubr.bf16.mxu0 %v1875
        %3664 = vmatmul.mubr.bf16.gmra.mrb[0].mxu0 %v1874
        %v3665 = vpop.f32.mrb[0].mxu0
        %v3666 = vadd.f32 %v3377, %v3665
        %v3667 = vpop.f32.mrb[0].mxu0
        %v3668 = vpop.f32.mrb[0].mxu0
        %v3669 = vadd.f32 %v3380, %v3668
        %v3670 = vpop.f32.mrb[0].mxu0
        %3671 = vdwg.mxu0
        %v3672 = vadd.f32 %v404, %v3418
        %v3673 = vadd.f32 %v405, %v3421
        %v3674 = vadd.f32 %v406, %v3426
        %v3675 = vadd.f32 %v407, %v3429
        %v3676 = vadd.f32 %v408, %v3434
        %v3677 = vadd.f32 %v409, %v3437
        %v3678 = vadd.f32 %v410, %v3442
        %v3679 = vadd.f32 %v411, %v3445
        %v3680 = vadd.f32 %v412, %v3450
        %v3681 = vadd.f32 %v413, %v3453
        %v3682 = vadd.f32 %v414, %v3458
        %v3683 = vadd.f32 %v415, %v3461
        %v3684 = vadd.f32 %v416, %v3466
        %v3685 = vadd.f32 %v417, %v3469
        %v3686 = vadd.f32 %v418, %v3474
        %v3687 = vadd.f32 %v419, %v3477
        %v3688 = vadd.f32 %v420, %v3482
        %v3689 = vadd.f32 %v421, %v3485
        %v3690 = vadd.f32 %v422, %v3490
        %v3691 = vadd.f32 %v423, %v3493
        %v3692 = vadd.f32 %v424, %v3498
        %v3693 = vadd.f32 %v425, %v3501
        %v3694 = vadd.f32 %v426, %v3506
        %v3695 = vadd.f32 %v427, %v3509
        %v3696 = vadd.f32 %v428, %v3514
        %v3697 = vadd.f32 %v429, %v3517
        %v3698 = vadd.f32 %v430, %v3522
        %v3699 = vadd.f32 %v431, %v3525
        %v3700 = vadd.f32 %v432, %v3530
        %v3701 = vadd.f32 %v433, %v3533
        %v3702 = vadd.f32 %v434, %v3538
        %v3703 = vadd.f32 %v435, %v3541
        %v3704 = vadd.f32 %v436, %v3546
        %v3705 = vadd.f32 %v437, %v3549
        %v3706 = vadd.f32 %v438, %v3554
        %v3707 = vadd.f32 %v439, %v3557
        %v3708 = vadd.f32 %v440, %v3562
        %v3709 = vadd.f32 %v441, %v3565
        %v3710 = vadd.f32 %v442, %v3570
        %v3711 = vadd.f32 %v443, %v3573
        %v3712 = vadd.f32 %v444, %v3578
        %v3713 = vadd.f32 %v445, %v3581
        %v3714 = vadd.f32 %v446, %v3586
        %v3715 = vadd.f32 %v447, %v3589
        %v3716 = vadd.f32 %v448, %v3594
        %v3717 = vadd.f32 %v449, %v3597
        %v3718 = vadd.f32 %v450, %v3602
        %v3719 = vadd.f32 %v451, %v3605
        %v3720 = vadd.f32 %v452, %v3610
        %v3721 = vadd.f32 %v453, %v3613
        %v3722 = vadd.f32 %v454, %v3618
        %v3723 = vadd.f32 %v455, %v3621
        %v3724 = vadd.f32 %v456, %v3626
        %v3725 = vadd.f32 %v457, %v3629
        %v3726 = vadd.f32 %v458, %v3634
        %v3727 = vadd.f32 %v459, %v3637
        %v3728 = vadd.f32 %v460, %v3642
        %v3729 = vadd.f32 %v461, %v3645
        %v3730 = vadd.f32 %v462, %v3650
        %v3731 = vadd.f32 %v463, %v3653
        %v3732 = vadd.f32 %v464, %v3658
        %v3733 = vadd.f32 %v465, %v3661
        %v3734 = vadd.f32 %v466, %v3666
        %v3735 = vadd.f32 %v467, %v3669
        %3736 = vst [vmem:[%s265] sm:$0xff] %v3672
        %3737 = vst [vmem:[%s265 + $0x8] sm:$0xff] %v3673
        %3738 = vst [vmem:[%s265 + $0x10] sm:$0xff] %v3674
        %3739 = vst [vmem:[%s265 + $0x18] sm:$0xff] %v3675
        %3740 = vst [vmem:[%s265 + $0x20] sm:$0xff] %v3676
        %3741 = vst [vmem:[%s265 + $0x28] sm:$0xff] %v3677
        %3742 = vst [vmem:[%s265 + $0x30] sm:$0xff] %v3678
        %3743 = vst [vmem:[%s265 + $0x38] sm:$0xff] %v3679
        %3744 = vst [vmem:[%s265 + $0x40] sm:$0xff] %v3680
        %3745 = vst [vmem:[%s265 + $0x48] sm:$0xff] %v3681
        %3746 = vst [vmem:[%s265 + $0x50] sm:$0xff] %v3682
        %3747 = vst [vmem:[%s265 + $0x58] sm:$0xff] %v3683
        %3748 = vst [vmem:[%s265 + $0x60] sm:$0xff] %v3684
        %3749 = vst [vmem:[%s265 + $0x68] sm:$0xff] %v3685
        %3750 = vst [vmem:[%s265 + $0x70] sm:$0xff] %v3686
        %3751 = vst [vmem:[%s265 + $0x78] sm:$0xff] %v3687
        %3752 = vst [vmem:[%s265 + $0x80] sm:$0xff] %v3688
        %3753 = vst [vmem:[%s265 + $0x88] sm:$0xff] %v3689
        %3754 = vst [vmem:[%s265 + $0x90] sm:$0xff] %v3690
        %3755 = vst [vmem:[%s265 + $0x98] sm:$0xff] %v3691
        %3756 = vst [vmem:[%s265 + $0xa0] sm:$0xff] %v3692
        %3757 = vst [vmem:[%s265 + $0xa8] sm:$0xff] %v3693
        %3758 = vst [vmem:[%s265 + $0xb0] sm:$0xff] %v3694
        %3759 = vst [vmem:[%s265 + $0xb8] sm:$0xff] %v3695
        %3760 = vst [vmem:[%s265 + $0xc0] sm:$0xff] %v3696
        %3761 = vst [vmem:[%s265 + $0xc8] sm:$0xff] %v3697
        %3762 = vst [vmem:[%s265 + $0xd0] sm:$0xff] %v3698
        %3763 = vst [vmem:[%s265 + $0xd8] sm:$0xff] %v3699
        %3764 = vst [vmem:[%s265 + $0xe0] sm:$0xff] %v3700
        %3765 = vst [vmem:[%s265 + $0xe8] sm:$0xff] %v3701
        %3766 = vst [vmem:[%s265 + $0xf0] sm:$0xff] %v3702
        %3767 = vst [vmem:[%s265 + $0xf8] sm:$0xff] %v3703
        %3768 = vst [vmem:[%s265 + $0x100] sm:$0xff] %v3704
        %3769 = vst [vmem:[%s265 + $0x108] sm:$0xff] %v3705
        %3770 = vst [vmem:[%s265 + $0x110] sm:$0xff] %v3706
        %3771 = vst [vmem:[%s265 + $0x118] sm:$0xff] %v3707
        %3772 = vst [vmem:[%s265 + $0x120] sm:$0xff] %v3708
        %3773 = vst [vmem:[%s265 + $0x128] sm:$0xff] %v3709
        %3774 = vst [vmem:[%s265 + $0x130] sm:$0xff] %v3710
        %3775 = vst [vmem:[%s265 + $0x138] sm:$0xff] %v3711
        %3776 = vst [vmem:[%s265 + $0x140] sm:$0xff] %v3712
        %3777 = vst [vmem:[%s265 + $0x148] sm:$0xff] %v3713
        %3778 = vst [vmem:[%s265 + $0x150] sm:$0xff] %v3714
        %3779 = vst [vmem:[%s265 + $0x158] sm:$0xff] %v3715
        %3780 = vst [vmem:[%s265 + $0x160] sm:$0xff] %v3716
        %3781 = vst [vmem:[%s265 + $0x168] sm:$0xff] %v3717
        %3782 = vst [vmem:[%s265 + $0x170] sm:$0xff] %v3718
        %3783 = vst [vmem:[%s265 + $0x178] sm:$0xff] %v3719
        %3784 = vst [vmem:[%s265 + $0x180] sm:$0xff] %v3720
        %3785 = vst [vmem:[%s265 + $0x188] sm:$0xff] %v3721
        %3786 = vst [vmem:[%s265 + $0x190] sm:$0xff] %v3722
        %3787 = vst [vmem:[%s265 + $0x198] sm:$0xff] %v3723
        %3788 = vst [vmem:[%s265 + $0x1a0] sm:$0xff] %v3724
        %3789 = vst [vmem:[%s265 + $0x1a8] sm:$0xff] %v3725
        %3790 = vst [vmem:[%s265 + $0x1b0] sm:$0xff] %v3726
        %3791 = vst [vmem:[%s265 + $0x1b8] sm:$0xff] %v3727
        %3792 = vst [vmem:[%s265 + $0x1c0] sm:$0xff] %v3728
        %3793 = vst [vmem:[%s265 + $0x1c8] sm:$0xff] %v3729
        %3794 = vst [vmem:[%s265 + $0x1d0] sm:$0xff] %v3730
        %3795 = vst [vmem:[%s265 + $0x1d8] sm:$0xff] %v3731
        %3796 = vst [vmem:[%s265 + $0x1e0] sm:$0xff] %v3732
        %3797 = vst [vmem:[%s265 + $0x1e8] sm:$0xff] %v3733
        %3798 = vst [vmem:[%s265 + $0x1f0] sm:$0xff] %v3734
        %3799 = vst [vmem:[%s265 + $0x1f8] sm:$0xff] %v3735
        %s3800 = sand.u32 %s121, 1
        %s3801 = scalar_lea.sflag [#allocation4], %s3800
        %s3802 = sand.u32 %s121, 1
        %s3803 = smul.addr %s3802, 512
        %s3804 = scalar_lea.vmem [#allocation8], %s3803
        // Predicated region
        $region49: #{tpu_custom_call.1} parent=31 // pred_check
          %p3805 = pneg %p131
        $region50: #{tpu_custom_call.1} parent=31 // pred_check_branch
          %3807 = sbr.rel (%p3805) target = $region52
        $region51: #{tpu_custom_call.1} parent=31 // pred_region
          %s3808 = smul.u32 64, %s25
          %s3810 = ssub.s32 8192, 8192
          %3811 = vsyncadd %s3801, %s3810
          %s3812 = smul.addr %s3808, 128
          %s3813 = scalar_lea.hbm %s3, %s3812
          %s3814 = sshll.u32 %s3804, 4
          %s3815 = int_to_ptr.vmem [resolvable:$true] %s3814
          %3820 = dma.vmem_to_hbm [thread:$0]  %s3815, 8192, %s3813, %s3801, 128, 128, 8
        $region52: #{tpu_custom_call.1} parent=31 // pred_fallthru
          _
      $region32: #{tpu_custom_call.1} parent=5 // pred_fallthru
        _
      %p3821 = scmp.le.s32.totalorder 2, %s16
      // Predicated region
      $region53: #{tpu_custom_call.1} parent=5 // pred_check
        %p3822 = pneg %p3821
      $region54: #{tpu_custom_call.1} parent=5 // pred_check_branch
        %3824 = sbr.rel (%p3822) target = $region56
      $region55: #{tpu_custom_call.1} parent=5 // pred_region
        %s3825 = ssub.s32 %s16, 2
        // Predicated region
        $region57: #{tpu_custom_call.1} parent=55 // pred_check
          %p3826 = pneg %p137
        $region58: #{tpu_custom_call.1} parent=55 // pred_check_branch
          %3828 = sbr.rel (%p3826) target = $region60
        $region59: #{tpu_custom_call.1} parent=55 // pred_region
          %s3829 = sand.u32 %s122, 1
          %s3830 = scalar_lea.sflag [#allocation4], %s3829
          %s3831 = sand.u32 %s122, 1
          %s3832 = smul.addr %s3831, 512
          %s3833 = scalar_lea.vmem [#allocation8], %s3832
          %3834 = dma.done %s3830, 8192
        $region60: #{tpu_custom_call.1} parent=55 // pred_fallthru
          _
      $region56: #{tpu_custom_call.1} parent=5 // pred_fallthru
        _
    $region6: #{tpu_custom_call.1} parent=1 // loop_footer
      %s20 = sadd.s32 1, %s16
    $region7: #{tpu_custom_call.1} parent=1 // loop_footer_branch
      %15 = sbr.rel target = $region3
    $region8: #{tpu_custom_call.1} parent=1 // loop_exit
      _
    %3835 = vsyncpa [#allocation3], 1
    %s3836 = scalar_lea.sflag [#allocation3], 1
    %3837 = vsyncpa %s3836, 1
    %3838 = vsyncpa [#allocation6], 1
    %3839 = vsyncpa [#allocation4], 1
    %s3840 = scalar_lea.sflag [#allocation4], 1
    %3841 = vsyncpa %s3840, 1

</llo_original>
